<compile_context>
chip_gen: v5e
topology: v5e:2x2
jax: 0.10.0
libtpu: 0.0.40
codegen_flags: <defaults>
</compile_context>

<pallas_src>
import functools

import jax
import jax.numpy as jnp
from jax import lax
from jax.experimental import pallas as pl
from jax.experimental.pallas import tpu as pltpu


def _round_up(x: int, m: int) -> int:
    return (x + m - 1) // m * m


def _choose_tn(n_rows: int, tn_max: int = 512) -> int:
    """Row tile: as large as possible, but keep >=2 grid steps when we can so
    v7x's two TensorCores both get work (single 'parallel' grid axis)."""
    if n_rows <= 8:
        return 8
    if n_rows <= 2 * tn_max:
        return max(8, _round_up((n_rows + 1) // 2, 8))
    return tn_max


def _npi_kernel(row_in_ref, idx_ref, key_proj_ref, row_w_ref, row_b_ref,
                out_ref, *, agg: str, n_neighbors: int):
    tn = row_in_ref.shape[0]
    m_pad = key_proj_ref.shape[0]
    out_dim = out_ref.shape[1]
    f32 = jnp.float32
    hi = lax.Precision.HIGHEST

    # Fused per-row additive term (ONE small MXU matmul per tile):
    #   row_add = Linear_xi(xi_in) - query_pos @ Wxn[:n_coord] + (b_xi + b_xn)
    row_add = jnp.dot(row_in_ref[...], row_w_ref[...],
                      preferred_element_type=f32, precision=hi) + row_b_ref[...]

    key_proj = key_proj_ref[...]                     # [M_pad, out_dim] (VMEM-resident)
    idx = idx_ref[...]                               # [tn, K] int32
    lane_ids = lax.broadcasted_iota(jnp.int32, (tn, m_pad), 1)   # hoisted out of the K loop

    if agg == 'max':
        acc = jnp.full((tn, out_dim), -jnp.inf, dtype=f32)
    else:
        acc = jnp.zeros((tn, out_dim), dtype=f32)
    cnt = jnp.zeros((tn, 1), dtype=f32)

    # K is small and static: unrolled loop, one lane-dense [tn, M_pad] one-hot
    # MXU gather per neighbor slot.  idx == -1 -> all-zero one-hot row.
    for k in range(n_neighbors):
        idx_k = idx[:, k:k + 1]                                   # [tn, 1]
        onehot = (lane_ids == idx_k).astype(f32)                  # [tn, M_pad]
        gathered = jnp.dot(onehot, key_proj,
                           preferred_element_type=f32, precision=hi)  # exact row gather
        mask_k = (idx_k >= 0).astype(f32)                         # [tn, 1]
        val = (gathered + row_add) * mask_k                       # masked entries exactly 0
        if agg == 'max':
            acc = jnp.maximum(acc, val)
        else:
            acc = acc + val
            cnt = cnt + mask_k

    if agg == 'avg':
        acc = acc / cnt
    out_ref[...] = acc.astype(out_ref.dtype)


def neighbor_point_interact_x(query_pos, key_pos, idx_neighbors, query_x, key_x,
                              params, *, neighbor_pos: str = 'absolute',
                              agg: str = 'max', tn_max: int = 512):
    """Pallas implementation of NeighborPointInteractX.forward."""
    assert agg in ('max', 'sum', 'avg')
    N, n_coord = query_pos.shape
    M = key_pos.shape[0]
    K = idx_neighbors.shape[1]
    wxi, bxi, wxn, bxn = params
    out_dim = wxi.shape[1]
    hi = lax.Precision.HIGHEST

    if neighbor_pos == 'relative':
        xi_in = query_x
    else:
        xi_in = jnp.concatenate([query_pos, query_x], axis=1)
    assert wxi.shape[0] == xi_in.shape[1]
    assert wxn.shape[0] == n_coord + key_x.shape[1]

    # --- O(M) / O(d) setup (plain JAX, tiny) -------------------------------
    # key_proj[m] = [key_pos[m] | key_x[m]] @ Wxn      -> gathered inside kernel
    key_proj = jnp.dot(jnp.concatenate([key_pos, key_x], axis=1),
                       wxn, precision=hi).astype(jnp.float32)          # [M, out_dim]
    # Fused per-row projection: row_add = xi - query_pos @ Wxn_pos + b_xi + b_xn
    row_in = jnp.concatenate([xi_in, query_pos], axis=1)               # [N, d_xi+n_coord]
    row_w = jnp.concatenate([wxi, -wxn[:n_coord]], axis=0).astype(jnp.float32)
    row_b = (bxi + bxn).reshape(1, out_dim).astype(jnp.float32)

    # Pad the gather table to a lane-friendly multiple of 128 rows.
    m_pad = _round_up(M, 128)
    if m_pad != M:
        key_proj = jnp.pad(key_proj, ((0, m_pad - M), (0, 0)))

    # Pad rows to a multiple of the row tile (padded rows: idx = -1).
    tn = _choose_tn(N, tn_max)
    n_pad = _round_up(N, tn)
    if n_pad != N:
        row_in = jnp.pad(row_in, ((0, n_pad - N), (0, 0)))
        idx_neighbors = jnp.pad(idx_neighbors, ((0, n_pad - N), (0, 0)),
                                constant_values=-1)
    row_in = row_in.astype(jnp.float32)
    idx_neighbors = idx_neighbors.astype(jnp.int32)
    d_row = row_in.shape[1]

    kernel = functools.partial(_npi_kernel, agg=agg, n_neighbors=K)
    grid = (n_pad // tn,)

    out = pl.pallas_call(
        kernel,
        out_shape=jax.ShapeDtypeStruct((n_pad, out_dim), jnp.float32),
        grid_spec=pltpu.PrefetchScalarGridSpec(
            num_scalar_prefetch=0,
            grid=grid,
            in_specs=[
                pl.BlockSpec((tn, d_row), lambda i: (i, 0)),        # fused row features
                pl.BlockSpec((tn, K), lambda i: (i, 0)),            # neighbor indices (int32)
                pl.BlockSpec((m_pad, out_dim), lambda i: (0, 0)),   # key_proj (VMEM-resident)
                pl.BlockSpec((d_row, out_dim), lambda i: (0, 0)),   # fused row weight
                pl.BlockSpec((1, out_dim), lambda i: (0, 0)),       # fused row bias
            ],
            out_specs=pl.BlockSpec((tn, out_dim), lambda i: (i, 0)),
        ),
        compiler_params=pltpu.CompilerParams(
            dimension_semantics=("parallel",),
            vmem_limit_bytes=48 * 1024 * 1024,
        ),
    )(row_in, idx_neighbors, key_proj, row_w, row_b)
    return out[:N]


def _reference(query_pos, key_pos, idx_neighbors, query_x, key_x, params,
               neighbor_pos='absolute', agg='max'):
    hi = lax.Precision.HIGHEST
    wxi, bxi, wxn, bxn = params
    idx_safe = jnp.maximum(idx_neighbors, 0)
    g_pos = jnp.take(key_pos, idx_safe, axis=0)
    g_x = jnp.take(key_x, idx_safe, axis=0)
    neigh_in = jnp.concatenate([g_pos - query_pos[:, None, :], g_x], axis=2)
    if neighbor_pos == 'relative':
        xi_in = query_x
    else:
        xi_in = jnp.concatenate([query_pos, query_x], axis=1)
    mask = (idx_neighbors != -1).astype(jnp.float32)
    xi = jnp.dot(xi_in, wxi, precision=hi) + bxi
    xn = jnp.einsum('nkd,do->nko', neigh_in, wxn, precision=hi) + bxn
    x = (xn + xi[:, None, :]) * mask[:, :, None]
    if agg == 'max':
        return jnp.max(x, axis=1)
    s = jnp.sum(x, axis=1)
    if agg == 'avg':
        s = s / jnp.sum(mask, axis=1, keepdims=True)
    return s


if __name__ == "__main__":
    # Small shapes consistent with the module's forward.
    N, M, K = 128, 96, 8          # query points, key points, neighbors per query
    n_coord, in_dim, out_dim = 3, 4, 32

    key = jax.random.PRNGKey(0)
    k1, k2, k3, k4, k5, k6, k7, k8, k9 = jax.random.split(key, 9)

    query_pos = jax.random.normal(k1, (N, n_coord), jnp.float32)
    key_pos = jax.random.normal(k2, (M, n_coord), jnp.float32)
    query_x = jax.random.normal(k3, (N, in_dim), jnp.float32)
    key_x = jax.random.normal(k4, (M, in_dim), jnp.float32)

    idx_neighbors = jax.random.randint(k5, (N, K), 0, M, jnp.int32)
    invalid = jax.random.bernoulli(k6, 0.25, (N, K))
    idx_neighbors = jnp.where(invalid, -1, idx_neighbors)
    # guarantee at least one valid neighbor per row (avoids NaN for 'avg')
    idx_neighbors = idx_neighbors.at[:, 0].set(jnp.abs(idx_neighbors[:, 0]) % M)

    for neighbor_pos in ('absolute', 'relative'):
        d_xi = in_dim + (0 if neighbor_pos == 'relative' else n_coord)
        d_xn = in_dim + n_coord
        wxi = jax.random.normal(k7, (d_xi, out_dim), jnp.float32) * (1.0 / jnp.sqrt(d_xi))
        bxi = jax.random.normal(k8, (out_dim,), jnp.float32) * 0.01
        wxn = jax.random.normal(k9, (d_xn, out_dim), jnp.float32) * (1.0 / jnp.sqrt(d_xn))
        bxn = jnp.linspace(-0.05, 0.05, out_dim, dtype=jnp.float32)
        params = (wxi, bxi, wxn, bxn)

        for agg in ('max', 'sum', 'avg'):
            out = neighbor_point_interact_x(query_pos, key_pos, idx_neighbors,
                                            query_x, key_x, params,
                                            neighbor_pos=neighbor_pos, agg=agg)
            out = jax.block_until_ready(out)
            ref = _reference(query_pos, key_pos, idx_neighbors, query_x, key_x,
                             params, neighbor_pos=neighbor_pos, agg=agg)
            assert out.shape == (N, out_dim)
            assert jnp.allclose(out, ref, atol=1e-3, rtol=1e-3), (neighbor_pos, agg)

    print("KERNEL_OK")
</pallas_src>

<mosaic_0001>
module attributes {stable_mosaic.version = 11 : i64} {
  func.func @_npi_kernel(%arg0: i32, %arg1: memref<64x10xf32, #tpu.memory_space<vmem>>, %arg2: memref<64x8xi32, #tpu.memory_space<vmem>>, %arg3: memref<128x32xf32, #tpu.memory_space<vmem>>, %arg4: memref<10x32xf32, #tpu.memory_space<vmem>>, %arg5: memref<1x32xf32, #tpu.memory_space<vmem>>, %arg6: memref<64x32xf32, #tpu.memory_space<vmem>>) attributes {dimension_semantics = [#tpu.dimension_semantics<parallel>], iteration_bounds = array<i64: 2>, scalar_prefetch = 0 : i64, scratch_operands = 0 : i64, tpu.core_type = #tpu.core_type<tc>, window_params = [{transform_indices = @transform_0, window_bounds = array<i64: 64, 10>}, {transform_indices = @transform_1, window_bounds = array<i64: 64, 8>}, {pipeline_mode = #tpu.pipeline_mode<synchronous>, transform_indices = @transform_2, window_bounds = array<i64: 128, 32>}, {pipeline_mode = #tpu.pipeline_mode<synchronous>, transform_indices = @transform_3, window_bounds = array<i64: 10, 32>}, {pipeline_mode = #tpu.pipeline_mode<synchronous>, transform_indices = @transform_4, window_bounds = array<i64: 1, 32>}, {transform_indices = @transform_5, window_bounds = array<i64: 64, 32>}]} {
    %c0 = arith.constant 0 : index
    %c0_0 = arith.constant 0 : index
    %0 = vector.load %arg1[%c0, %c0_0] : memref<64x10xf32, #tpu.memory_space<vmem>>, vector<64x10xf32>
    %c0_1 = arith.constant 0 : index
    %c0_2 = arith.constant 0 : index
    %1 = vector.load %arg4[%c0_1, %c0_2] : memref<10x32xf32, #tpu.memory_space<vmem>>, vector<10x32xf32>
    %cst = arith.constant dense<0.000000e+00> : vector<64x32xf32>
    %2 = tpu.matmul %0, %1, %cst {dimension_numbers = #tpu.dot_dimension_numbers<[1], [0], [0], [1], [0, 0, 1, 1], [], []>, precision = #tpu.contract_precision<fp32>} : vector<64x10xf32>, vector<10x32xf32>, vector<64x32xf32> -> vector<64x32xf32>
    %c0_3 = arith.constant 0 : index
    %c0_4 = arith.constant 0 : index
    %3 = vector.load %arg5[%c0_3, %c0_4] : memref<1x32xf32, #tpu.memory_space<vmem>>, vector<1x32xf32>
    %4 = vector.broadcast %3 : vector<1x32xf32> to vector<64x32xf32>
    %5 = arith.addf %2, %4 : vector<64x32xf32>
    %c0_5 = arith.constant 0 : index
    %c0_6 = arith.constant 0 : index
    %6 = vector.load %arg3[%c0_5, %c0_6] : memref<128x32xf32, #tpu.memory_space<vmem>>, vector<128x32xf32>
    %c0_7 = arith.constant 0 : index
    %c0_8 = arith.constant 0 : index
    %7 = vector.load %arg2[%c0_7, %c0_8] : memref<64x8xi32, #tpu.memory_space<vmem>>, vector<64x8xi32>
    %8 = tpu.iota {dimensions = array<i32: 1>} : vector<64x128xi32>
    %cst_9 = arith.constant 0xFF800000 : f32
    %9 = vector.broadcast %cst_9 : f32 to vector<64x32xf32>
    %10 = vector.extract_strided_slice %7 {offsets = [0, 0], sizes = [64, 1], strides = [1, 1]} : vector<64x8xi32> to vector<64x1xi32>
    %11 = vector.broadcast %10 : vector<64x1xi32> to vector<64x128xi32>
    %12 = arith.cmpi eq, %8, %11 : vector<64x128xi32>
    %13 = arith.extui %12 : vector<64x128xi1> to vector<64x128xi32>
    %14 = arith.sitofp %13 : vector<64x128xi32> to vector<64x128xf32>
    %cst_10 = arith.constant dense<0.000000e+00> : vector<64x32xf32>
    %15 = tpu.matmul %14, %6, %cst_10 {dimension_numbers = #tpu.dot_dimension_numbers<[1], [0], [0], [1], [0, 0, 1, 1], [], []>, precision = #tpu.contract_precision<fp32>} : vector<64x128xf32>, vector<128x32xf32>, vector<64x32xf32> -> vector<64x32xf32>
    %c0_i32 = arith.constant 0 : i32
    %16 = vector.broadcast %c0_i32 : i32 to vector<64x1xi32>
    %17 = arith.cmpi sge, %10, %16 : vector<64x1xi32>
    %18 = arith.extui %17 : vector<64x1xi1> to vector<64x1xi32>
    %19 = arith.sitofp %18 : vector<64x1xi32> to vector<64x1xf32>
    %20 = arith.addf %15, %5 : vector<64x32xf32>
    %21 = vector.broadcast %19 : vector<64x1xf32> to vector<64x32xf32>
    %22 = arith.mulf %20, %21 : vector<64x32xf32>
    %23 = arith.maximumf %9, %22 : vector<64x32xf32>
    %24 = vector.extract_strided_slice %7 {offsets = [0, 1], sizes = [64, 1], strides = [1, 1]} : vector<64x8xi32> to vector<64x1xi32>
    %25 = vector.broadcast %24 : vector<64x1xi32> to vector<64x128xi32>
    %26 = arith.cmpi eq, %8, %25 : vector<64x128xi32>
    %27 = arith.extui %26 : vector<64x128xi1> to vector<64x128xi32>
    %28 = arith.sitofp %27 : vector<64x128xi32> to vector<64x128xf32>
    %cst_11 = arith.constant dense<0.000000e+00> : vector<64x32xf32>
    %29 = tpu.matmul %28, %6, %cst_11 {dimension_numbers = #tpu.dot_dimension_numbers<[1], [0], [0], [1], [0, 0, 1, 1], [], []>, precision = #tpu.contract_precision<fp32>} : vector<64x128xf32>, vector<128x32xf32>, vector<64x32xf32> -> vector<64x32xf32>
    %c0_i32_12 = arith.constant 0 : i32
    %30 = vector.broadcast %c0_i32_12 : i32 to vector<64x1xi32>
    %31 = arith.cmpi sge, %24, %30 : vector<64x1xi32>
    %32 = arith.extui %31 : vector<64x1xi1> to vector<64x1xi32>
    %33 = arith.sitofp %32 : vector<64x1xi32> to vector<64x1xf32>
    %34 = arith.addf %29, %5 : vector<64x32xf32>
    %35 = vector.broadcast %33 : vector<64x1xf32> to vector<64x32xf32>
    %36 = arith.mulf %34, %35 : vector<64x32xf32>
    %37 = arith.maximumf %23, %36 : vector<64x32xf32>
    %38 = vector.extract_strided_slice %7 {offsets = [0, 2], sizes = [64, 1], strides = [1, 1]} : vector<64x8xi32> to vector<64x1xi32>
    %39 = vector.broadcast %38 : vector<64x1xi32> to vector<64x128xi32>
    %40 = arith.cmpi eq, %8, %39 : vector<64x128xi32>
    %41 = arith.extui %40 : vector<64x128xi1> to vector<64x128xi32>
    %42 = arith.sitofp %41 : vector<64x128xi32> to vector<64x128xf32>
    %cst_13 = arith.constant dense<0.000000e+00> : vector<64x32xf32>
    %43 = tpu.matmul %42, %6, %cst_13 {dimension_numbers = #tpu.dot_dimension_numbers<[1], [0], [0], [1], [0, 0, 1, 1], [], []>, precision = #tpu.contract_precision<fp32>} : vector<64x128xf32>, vector<128x32xf32>, vector<64x32xf32> -> vector<64x32xf32>
    %c0_i32_14 = arith.constant 0 : i32
    %44 = vector.broadcast %c0_i32_14 : i32 to vector<64x1xi32>
    %45 = arith.cmpi sge, %38, %44 : vector<64x1xi32>
    %46 = arith.extui %45 : vector<64x1xi1> to vector<64x1xi32>
    %47 = arith.sitofp %46 : vector<64x1xi32> to vector<64x1xf32>
    %48 = arith.addf %43, %5 : vector<64x32xf32>
    %49 = vector.broadcast %47 : vector<64x1xf32> to vector<64x32xf32>
    %50 = arith.mulf %48, %49 : vector<64x32xf32>
    %51 = arith.maximumf %37, %50 : vector<64x32xf32>
    %52 = vector.extract_strided_slice %7 {offsets = [0, 3], sizes = [64, 1], strides = [1, 1]} : vector<64x8xi32> to vector<64x1xi32>
    %53 = vector.broadcast %52 : vector<64x1xi32> to vector<64x128xi32>
    %54 = arith.cmpi eq, %8, %53 : vector<64x128xi32>
    %55 = arith.extui %54 : vector<64x128xi1> to vector<64x128xi32>
    %56 = arith.sitofp %55 : vector<64x128xi32> to vector<64x128xf32>
    %cst_15 = arith.constant dense<0.000000e+00> : vector<64x32xf32>
    %57 = tpu.matmul %56, %6, %cst_15 {dimension_numbers = #tpu.dot_dimension_numbers<[1], [0], [0], [1], [0, 0, 1, 1], [], []>, precision = #tpu.contract_precision<fp32>} : vector<64x128xf32>, vector<128x32xf32>, vector<64x32xf32> -> vector<64x32xf32>
    %c0_i32_16 = arith.constant 0 : i32
    %58 = vector.broadcast %c0_i32_16 : i32 to vector<64x1xi32>
    %59 = arith.cmpi sge, %52, %58 : vector<64x1xi32>
    %60 = arith.extui %59 : vector<64x1xi1> to vector<64x1xi32>
    %61 = arith.sitofp %60 : vector<64x1xi32> to vector<64x1xf32>
    %62 = arith.addf %57, %5 : vector<64x32xf32>
    %63 = vector.broadcast %61 : vector<64x1xf32> to vector<64x32xf32>
    %64 = arith.mulf %62, %63 : vector<64x32xf32>
    %65 = arith.maximumf %51, %64 : vector<64x32xf32>
    %66 = vector.extract_strided_slice %7 {offsets = [0, 4], sizes = [64, 1], strides = [1, 1]} : vector<64x8xi32> to vector<64x1xi32>
    %67 = vector.broadcast %66 : vector<64x1xi32> to vector<64x128xi32>
    %68 = arith.cmpi eq, %8, %67 : vector<64x128xi32>
    %69 = arith.extui %68 : vector<64x128xi1> to vector<64x128xi32>
    %70 = arith.sitofp %69 : vector<64x128xi32> to vector<64x128xf32>
    %cst_17 = arith.constant dense<0.000000e+00> : vector<64x32xf32>
    %71 = tpu.matmul %70, %6, %cst_17 {dimension_numbers = #tpu.dot_dimension_numbers<[1], [0], [0], [1], [0, 0, 1, 1], [], []>, precision = #tpu.contract_precision<fp32>} : vector<64x128xf32>, vector<128x32xf32>, vector<64x32xf32> -> vector<64x32xf32>
    %c0_i32_18 = arith.constant 0 : i32
    %72 = vector.broadcast %c0_i32_18 : i32 to vector<64x1xi32>
    %73 = arith.cmpi sge, %66, %72 : vector<64x1xi32>
    %74 = arith.extui %73 : vector<64x1xi1> to vector<64x1xi32>
    %75 = arith.sitofp %74 : vector<64x1xi32> to vector<64x1xf32>
    %76 = arith.addf %71, %5 : vector<64x32xf32>
    %77 = vector.broadcast %75 : vector<64x1xf32> to vector<64x32xf32>
    %78 = arith.mulf %76, %77 : vector<64x32xf32>
    %79 = arith.maximumf %65, %78 : vector<64x32xf32>
    %80 = vector.extract_strided_slice %7 {offsets = [0, 5], sizes = [64, 1], strides = [1, 1]} : vector<64x8xi32> to vector<64x1xi32>
    %81 = vector.broadcast %80 : vector<64x1xi32> to vector<64x128xi32>
    %82 = arith.cmpi eq, %8, %81 : vector<64x128xi32>
    %83 = arith.extui %82 : vector<64x128xi1> to vector<64x128xi32>
    %84 = arith.sitofp %83 : vector<64x128xi32> to vector<64x128xf32>
    %cst_19 = arith.constant dense<0.000000e+00> : vector<64x32xf32>
    %85 = tpu.matmul %84, %6, %cst_19 {dimension_numbers = #tpu.dot_dimension_numbers<[1], [0], [0], [1], [0, 0, 1, 1], [], []>, precision = #tpu.contract_precision<fp32>} : vector<64x128xf32>, vector<128x32xf32>, vector<64x32xf32> -> vector<64x32xf32>
    %c0_i32_20 = arith.constant 0 : i32
    %86 = vector.broadcast %c0_i32_20 : i32 to vector<64x1xi32>
    %87 = arith.cmpi sge, %80, %86 : vector<64x1xi32>
    %88 = arith.extui %87 : vector<64x1xi1> to vector<64x1xi32>
    %89 = arith.sitofp %88 : vector<64x1xi32> to vector<64x1xf32>
    %90 = arith.addf %85, %5 : vector<64x32xf32>
    %91 = vector.broadcast %89 : vector<64x1xf32> to vector<64x32xf32>
    %92 = arith.mulf %90, %91 : vector<64x32xf32>
    %93 = arith.maximumf %79, %92 : vector<64x32xf32>
    %94 = vector.extract_strided_slice %7 {offsets = [0, 6], sizes = [64, 1], strides = [1, 1]} : vector<64x8xi32> to vector<64x1xi32>
    %95 = vector.broadcast %94 : vector<64x1xi32> to vector<64x128xi32>
    %96 = arith.cmpi eq, %8, %95 : vector<64x128xi32>
    %97 = arith.extui %96 : vector<64x128xi1> to vector<64x128xi32>
    %98 = arith.sitofp %97 : vector<64x128xi32> to vector<64x128xf32>
    %cst_21 = arith.constant dense<0.000000e+00> : vector<64x32xf32>
    %99 = tpu.matmul %98, %6, %cst_21 {dimension_numbers = #tpu.dot_dimension_numbers<[1], [0], [0], [1], [0, 0, 1, 1], [], []>, precision = #tpu.contract_precision<fp32>} : vector<64x128xf32>, vector<128x32xf32>, vector<64x32xf32> -> vector<64x32xf32>
    %c0_i32_22 = arith.constant 0 : i32
    %100 = vector.broadcast %c0_i32_22 : i32 to vector<64x1xi32>
    %101 = arith.cmpi sge, %94, %100 : vector<64x1xi32>
    %102 = arith.extui %101 : vector<64x1xi1> to vector<64x1xi32>
    %103 = arith.sitofp %102 : vector<64x1xi32> to vector<64x1xf32>
    %104 = arith.addf %99, %5 : vector<64x32xf32>
    %105 = vector.broadcast %103 : vector<64x1xf32> to vector<64x32xf32>
    %106 = arith.mulf %104, %105 : vector<64x32xf32>
    %107 = arith.maximumf %93, %106 : vector<64x32xf32>
    %108 = vector.extract_strided_slice %7 {offsets = [0, 7], sizes = [64, 1], strides = [1, 1]} : vector<64x8xi32> to vector<64x1xi32>
    %109 = vector.broadcast %108 : vector<64x1xi32> to vector<64x128xi32>
    %110 = arith.cmpi eq, %8, %109 : vector<64x128xi32>
    %111 = arith.extui %110 : vector<64x128xi1> to vector<64x128xi32>
    %112 = arith.sitofp %111 : vector<64x128xi32> to vector<64x128xf32>
    %cst_23 = arith.constant dense<0.000000e+00> : vector<64x32xf32>
    %113 = tpu.matmul %112, %6, %cst_23 {dimension_numbers = #tpu.dot_dimension_numbers<[1], [0], [0], [1], [0, 0, 1, 1], [], []>, precision = #tpu.contract_precision<fp32>} : vector<64x128xf32>, vector<128x32xf32>, vector<64x32xf32> -> vector<64x32xf32>
    %c0_i32_24 = arith.constant 0 : i32
    %114 = vector.broadcast %c0_i32_24 : i32 to vector<64x1xi32>
    %115 = arith.cmpi sge, %108, %114 : vector<64x1xi32>
    %116 = arith.extui %115 : vector<64x1xi1> to vector<64x1xi32>
    %117 = arith.sitofp %116 : vector<64x1xi32> to vector<64x1xf32>
    %118 = arith.addf %113, %5 : vector<64x32xf32>
    %119 = vector.broadcast %117 : vector<64x1xf32> to vector<64x32xf32>
    %120 = arith.mulf %118, %119 : vector<64x32xf32>
    %121 = arith.maximumf %107, %120 : vector<64x32xf32>
    %c0_25 = arith.constant 0 : index
    %c0_26 = arith.constant 0 : index
    %122 = vector.load %arg6[%c0_25, %c0_26] : memref<64x32xf32, #tpu.memory_space<vmem>>, vector<64x32xf32>
    tpu.vector_store %arg6[%c0_25, %c0_26], %121 {strides = array<i32>} : memref<64x32xf32, #tpu.memory_space<vmem>>, vector<64x32xf32>,
    return
  }
  func.func @transform_0(%arg0: i32) -> (i32, i32) {
    %c0_i32 = arith.constant 0 : i32
    %c0_i32_0 = arith.constant 0 : i32
    return %arg0, %c0_i32 : i32, i32
  }
  func.func @transform_1(%arg0: i32) -> (i32, i32) {
    %c0_i32 = arith.constant 0 : i32
    %c0_i32_0 = arith.constant 0 : i32
    return %arg0, %c0_i32 : i32, i32
  }
  func.func @transform_2(%arg0: i32) -> (i32, i32) {
    %c0_i32 = arith.constant 0 : i32
    %c0_i32_0 = arith.constant 0 : i32
    %c0_i32_1 = arith.constant 0 : i32
    return %c0_i32, %c0_i32_0 : i32, i32
  }
  func.func @transform_3(%arg0: i32) -> (i32, i32) {
    %c0_i32 = arith.constant 0 : i32
    %c0_i32_0 = arith.constant 0 : i32
    %c0_i32_1 = arith.constant 0 : i32
    return %c0_i32, %c0_i32_0 : i32, i32
  }
  func.func @transform_4(%arg0: i32) -> (i32, i32) {
    %c0_i32 = arith.constant 0 : i32
    %c0_i32_0 = arith.constant 0 : i32
    %c0_i32_1 = arith.constant 0 : i32
    return %c0_i32, %c0_i32_0 : i32, i32
  }
  func.func @transform_5(%arg0: i32) -> (i32, i32) {
    %c0_i32 = arith.constant 0 : i32
    %c0_i32_0 = arith.constant 0 : i32
    return %arg0, %c0_i32 : i32, i32
  }
}

</mosaic_0001>

<llo_original>
// kernel: tpu_custom_call.1
$region0: #{tpu_custom_call.1}
  #allocation0 [shape = 'u32[]', space=smem, size = 0x4, offset = 0x4, fixed_abs, tag = 'smem constant byte address 0x4 - core index']
  #allocation1 [shape = 'u32[72,128]{1,0:T(1,128)}', space=vmem, size = 0x9000, scoped, tag = 'internal scratch']
  %s0 = inlined_call_operand.vmem [shape: f32[128,10], index: 0, kind: input, shape index: {}]
  %s1 = inlined_call_operand.vmem [shape: s32[128,8], index: 1, kind: input, shape index: {}]
  %s2 = inlined_call_operand.vmem [shape: f32[128,32], index: 2, kind: input, shape index: {}]
  %s3 = inlined_call_operand.vmem [shape: f32[10,32], index: 3, kind: input, shape index: {}]
  %s4 = inlined_call_operand.vmem [shape: f32[1,32], index: 4, kind: input, shape index: {}]
  %s5 = inlined_call_operand.vmem [shape: f32[128,32], index: 5, kind: output, shape index: {}]
  %s6 = sld [smem:[#allocation0]]
  $region53: #{tpu_custom_call.1} parent=0
    _
  %s8 = ssub.s32 1, %s6
  %s9 = scalar_select 0, %s8, %s6
  loop: start=0, step=1, limit=4
  $region2: #{tpu_custom_call.1} parent=0 // loop_pre_header
    _
  $region3: #{tpu_custom_call.1} parent=0 // loop_header
    %s11 = sphi 0, %s15
    %p12 = scmp.ge.s32.totalorder %s11, 4
    %s21 = sphi 0, %s23
    %s24 = sphi 0, %s21
    %s25 = sphi 0, %s24
    %s41 = sphi 0, %s25
    %s47 = sphi 0, %s49
    %s50 = sphi 0, %s47
    %s51 = sphi 0, %s50
    %s67 = sphi 0, %s51
    %s71 = sphi 0, %s71
    %s73 = sphi 0, %s71
    %s74 = sphi 0, %s73
    %s88 = sphi 0, %s74
    %s92 = sphi 0, %s92
    %s94 = sphi 0, %s92
    %s95 = sphi 0, %s94
    %s109 = sphi 0, %s95
    %s113 = sphi 0, %s113
    %s115 = sphi 0, %s113
    %s116 = sphi 0, %s115
    %s130 = sphi 0, %s116
    %s136 = sphi 0, %s138
    %s139 = sphi 0, %s136
    %s140 = sphi 0, %s139
    %s156 = sphi 0, %s140
  $region4: #{tpu_custom_call.1} parent=0 // loop_header_branch
    %14 = sbr.rel (%p12) target = $region8
  $region5: #{tpu_custom_call.1} parent=0 // loop_body
    %s16 = ssub.s32 %s11, 1
    %s17 = ssub.s32 %s11, 2
    %s18 = sadd.s32 %s11, 1
    %s19 = ssub.s32 %s11, %s18
    %p20 = scmp.eq.s32.totalorder %s19, 0
    %s22 = sadd.s32 %s21, 1
    %s23 = scalar_select %p20, %s21, %s22
    %p26 = pneg %p20
    %p27 = scmp.eq.s32.totalorder %s11, 1
    %p28 = por %p26, %p27
    %p29 = scmp.ne.s32.totalorder %s21, %s24
    %p30 = scmp.eq.s32.totalorder %s11, 0
    %p31 = por %p29, %p30
    %p32 = scmp.ne.s32.totalorder %s21, %s24
    %p33 = scmp.eq.s32.totalorder %s16, 1
    %p34 = por %p32, %p33
    %p35 = scmp.ne.s32.totalorder %s24, %s25
    %p36 = scmp.eq.s32.totalorder %s16, 0
    %p37 = por %p35, %p36
    %p38 = scmp.ne.s32.totalorder %s24, %s25
    %p39 = scmp.eq.s32.totalorder %s17, 1
    %p40 = por %p38, %p39
    %p42 = scmp.ne.s32.totalorder %s25, %s41
    %p43 = scmp.eq.s32.totalorder %s17, 0
    %p44 = por %p42, %p43
    %s45 = ssub.s32 %s11, %s18
    %p46 = scmp.eq.s32.totalorder %s45, 0
    %s48 = sadd.s32 %s47, 1
    %s49 = scalar_select %p46, %s47, %s48
    %p52 = pneg %p46
    %p53 = scmp.eq.s32.totalorder %s11, 1
    %p54 = por %p52, %p53
    %p55 = scmp.ne.s32.totalorder %s47, %s50
    %p56 = scmp.eq.s32.totalorder %s11, 0
    %p57 = por %p55, %p56
    %p58 = scmp.ne.s32.totalorder %s47, %s50
    %p59 = scmp.eq.s32.totalorder %s16, 1
    %p60 = por %p58, %p59
    %p61 = scmp.ne.s32.totalorder %s50, %s51
    %p62 = scmp.eq.s32.totalorder %s16, 0
    %p63 = por %p61, %p62
    %p64 = scmp.ne.s32.totalorder %s50, %s51
    %p65 = scmp.eq.s32.totalorder %s17, 1
    %p66 = por %p64, %p65
    %p68 = scmp.ne.s32.totalorder %s51, %s67
    %p69 = scmp.eq.s32.totalorder %s17, 0
    %p70 = por %p68, %p69
    %s72 = sadd.s32 %s71, 1
    %p75 = scmp.eq.s32.totalorder %s11, 1
    %p76 = scmp.ne.s32.totalorder %s71, %s73
    %p77 = scmp.eq.s32.totalorder %s11, 0
    %p78 = por %p76, %p77
    %p79 = scmp.ne.s32.totalorder %s71, %s73
    %p80 = scmp.eq.s32.totalorder %s16, 1
    %p81 = por %p79, %p80
    %p82 = scmp.ne.s32.totalorder %s73, %s74
    %p83 = scmp.eq.s32.totalorder %s16, 0
    %p84 = por %p82, %p83
    %p85 = scmp.ne.s32.totalorder %s73, %s74
    %p86 = scmp.eq.s32.totalorder %s17, 1
    %p87 = por %p85, %p86
    %p89 = scmp.ne.s32.totalorder %s74, %s88
    %p90 = scmp.eq.s32.totalorder %s17, 0
    %p91 = por %p89, %p90
    %s93 = sadd.s32 %s92, 1
    %p96 = scmp.eq.s32.totalorder %s11, 1
    %p97 = scmp.ne.s32.totalorder %s92, %s94
    %p98 = scmp.eq.s32.totalorder %s11, 0
    %p99 = por %p97, %p98
    %p100 = scmp.ne.s32.totalorder %s92, %s94
    %p101 = scmp.eq.s32.totalorder %s16, 1
    %p102 = por %p100, %p101
    %p103 = scmp.ne.s32.totalorder %s94, %s95
    %p104 = scmp.eq.s32.totalorder %s16, 0
    %p105 = por %p103, %p104
    %p106 = scmp.ne.s32.totalorder %s94, %s95
    %p107 = scmp.eq.s32.totalorder %s17, 1
    %p108 = por %p106, %p107
    %p110 = scmp.ne.s32.totalorder %s95, %s109
    %p111 = scmp.eq.s32.totalorder %s17, 0
    %p112 = por %p110, %p111
    %s114 = sadd.s32 %s113, 1
    %p117 = scmp.eq.s32.totalorder %s11, 1
    %p118 = scmp.ne.s32.totalorder %s113, %s115
    %p119 = scmp.eq.s32.totalorder %s11, 0
    %p120 = por %p118, %p119
    %p121 = scmp.ne.s32.totalorder %s113, %s115
    %p122 = scmp.eq.s32.totalorder %s16, 1
    %p123 = por %p121, %p122
    %p124 = scmp.ne.s32.totalorder %s115, %s116
    %p125 = scmp.eq.s32.totalorder %s16, 0
    %p126 = por %p124, %p125
    %p127 = scmp.ne.s32.totalorder %s115, %s116
    %p128 = scmp.eq.s32.totalorder %s17, 1
    %p129 = por %p127, %p128
    %p131 = scmp.ne.s32.totalorder %s116, %s130
    %p132 = scmp.eq.s32.totalorder %s17, 0
    %p133 = por %p131, %p132
    %s134 = ssub.s32 %s11, %s18
    %p135 = scmp.eq.s32.totalorder %s134, 0
    %s137 = sadd.s32 %s136, 1
    %s138 = scalar_select %p135, %s136, %s137
    %p141 = pneg %p135
    %p142 = scmp.eq.s32.totalorder %s11, 1
    %p143 = por %p141, %p142
    %p144 = scmp.ne.s32.totalorder %s136, %s139
    %p145 = scmp.eq.s32.totalorder %s11, 0
    %p146 = por %p144, %p145
    %p147 = scmp.ne.s32.totalorder %s136, %s139
    %p148 = scmp.eq.s32.totalorder %s16, 1
    %p149 = por %p147, %p148
    %p150 = scmp.ne.s32.totalorder %s139, %s140
    %p151 = scmp.eq.s32.totalorder %s16, 0
    %p152 = por %p150, %p151
    %p153 = scmp.ne.s32.totalorder %s139, %s140
    %p154 = scmp.eq.s32.totalorder %s17, 1
    %p155 = por %p153, %p154
    %p157 = scmp.ne.s32.totalorder %s140, %s156
    %p158 = scmp.eq.s32.totalorder %s17, 0
    %p159 = por %p157, %p158
    %p160 = scmp.le.s32.totalorder 1, %s11
    %p161 = scmp.lt.s32.totalorder %s11, 3
    %p162 = pnand %p160, %p161
    %p163 = pneg %p162
    // Predicated region
    $region9: #{tpu_custom_call.1} parent=5 // pred_check
      _
    $region10: #{tpu_custom_call.1} parent=5 // pred_check_branch
      %165 = sbr.rel (%p162) target = $region12
    $region11: #{tpu_custom_call.1} parent=5 // pred_region
      %s166 = ssub.s32 %s11, 1
      // Predicated region
      $region13: #{tpu_custom_call.1} parent=11 // pred_check
        %p167 = pneg %p84
      $region14: #{tpu_custom_call.1} parent=11 // pred_check_branch
        %169 = sbr.rel (%p167) target = $region16
      $region15: #{tpu_custom_call.1} parent=11 // pred_region
        _
      $region16: #{tpu_custom_call.1} parent=11 // pred_fallthru
        _
      // Predicated region
      $region17: #{tpu_custom_call.1} parent=11 // pred_check
        %p170 = pneg %p105
      $region18: #{tpu_custom_call.1} parent=11 // pred_check_branch
        %172 = sbr.rel (%p170) target = $region20
      $region19: #{tpu_custom_call.1} parent=11 // pred_region
        _
      $region20: #{tpu_custom_call.1} parent=11 // pred_fallthru
        _
      // Predicated region
      $region21: #{tpu_custom_call.1} parent=11 // pred_check
        %p173 = pneg %p126
      $region22: #{tpu_custom_call.1} parent=11 // pred_check_branch
        %175 = sbr.rel (%p173) target = $region24
      $region23: #{tpu_custom_call.1} parent=11 // pred_region
        _
      $region24: #{tpu_custom_call.1} parent=11 // pred_fallthru
        _
    $region12: #{tpu_custom_call.1} parent=5 // pred_fallthru
      _
    %p176 = scmp.lt.s32.totalorder %s11, 2
    // Predicated region
    $region25: #{tpu_custom_call.1} parent=5 // pred_check
      %p177 = pneg %p176
    $region26: #{tpu_custom_call.1} parent=5 // pred_check_branch
      %179 = sbr.rel (%p177) target = $region28
    $region27: #{tpu_custom_call.1} parent=5 // pred_region
      // Predicated region
      $region29: #{tpu_custom_call.1} parent=27 // pred_check
        %p180 = pneg %p31
      $region30: #{tpu_custom_call.1} parent=27 // pred_check_branch
        %182 = sbr.rel (%p180) target = $region32
      $region31: #{tpu_custom_call.1} parent=27 // pred_region
        %s183 = smul.u32 8, %s11
        %p184 = scmp.lt.s32.totalorder %s183, 15
        %s185 = scalar_select %p184, %s183, 15
        %s186 = smul.addr %s185, 8
        %s187 = scalar_lea.vmem %s0, %s186
        %s188 = smul.u32 8, %s11
      $region32: #{tpu_custom_call.1} parent=27 // pred_fallthru
        _
      // Predicated region
      $region33: #{tpu_custom_call.1} parent=27 // pred_check
        %p189 = pneg %p57
      $region34: #{tpu_custom_call.1} parent=27 // pred_check_branch
        %191 = sbr.rel (%p189) target = $region36
      $region35: #{tpu_custom_call.1} parent=27 // pred_region
        %s192 = smul.u32 8, %s11
        %p193 = scmp.lt.s32.totalorder %s192, 15
        %s194 = scalar_select %p193, %s192, 15
        %s195 = smul.addr %s194, 8
        %s196 = scalar_lea.vmem %s1, %s195
        %s197 = smul.u32 8, %s11
      $region36: #{tpu_custom_call.1} parent=27 // pred_fallthru
        _
    $region28: #{tpu_custom_call.1} parent=5 // pred_fallthru
      _
    %p198 = scmp.le.s32.totalorder 1, %s11
    %p199 = scmp.lt.s32.totalorder %s11, 3
    %p200 = pnand %p198, %p199
    %p201 = pneg %p200
    // Predicated region
    $region37: #{tpu_custom_call.1} parent=5 // pred_check
      _
    $region38: #{tpu_custom_call.1} parent=5 // pred_check_branch
      %203 = sbr.rel (%p200) target = $region40
    $region39: #{tpu_custom_call.1} parent=5 // pred_region
      %s204 = ssub.s32 %s11, 1
      %s205 = smul.u32 8, %s16
      %p206 = scmp.lt.s32.totalorder %s205, 15
      %s207 = scalar_select %p206, %s205, 15
      %s208 = smul.addr %s207, 8
      %s209 = scalar_lea.vmem %s0, %s208
      %p210 = pneg %p37
      %p211 = pneg %p34
      %s212 = smul.u32 8, %s16
      %p213 = scmp.lt.s32.totalorder %s212, 15
      %s214 = scalar_select %p213, %s212, 15
      %s215 = smul.addr %s214, 8
      %s216 = scalar_lea.vmem %s1, %s215
      %p217 = pneg %p63
      %p218 = pneg %p60
      %p219 = pneg %p84
      %p220 = pneg %p81
      %p221 = pneg %p105
      %p222 = pneg %p102
      %p223 = pneg %p126
      %p224 = pneg %p123
      %p225 = pneg %p152
      %p226 = pneg %p149
      %s227 = smul.u32 8, %s16
      %p228 = scmp.lt.s32.totalorder %s227, 15
      %s229 = scalar_select %p228, %s227, 15
      %s230 = smul.addr %s229, 8
      %s231 = scalar_lea.vmem %s5, %s230
      %s232 = smul.u32 8, %s16
      %p233 = scmp.lt.s32.totalorder %s232, 15
      %s234 = scalar_select %p233, %s232, 15
      %s235 = smul.addr %s234, 8
      %s236 = scalar_lea.vmem %s0, %s235
      %s237 = smul.u32 8, %s16
      %s238 = smul.u32 8, %s16
      %p239 = scmp.lt.s32.totalorder %s238, 15
      %s240 = scalar_select %p239, %s238, 15
      %s241 = smul.addr %s240, 8
      %s242 = scalar_lea.vmem %s1, %s241
      %s243 = smul.u32 8, %s16
      %s244 = smul.u32 8, %s16
      %p245 = scmp.lt.s32.totalorder %s244, 15
      %s246 = scalar_select %p245, %s244, 15
      %s247 = smul.addr %s246, 8
      %s248 = scalar_lea.vmem %s5, %s247
      %s249 = smul.u32 8, %s16
      %v250 = vld [vmem:[%s236] sm:$0xff]
      %v251 = vld [vmem:[%s236 + $0x8] sm:$0xff]
      %v252 = vld [vmem:[%s236 + $0x10] sm:$0xff]
      %v253 = vld [vmem:[%s236 + $0x18] sm:$0xff]
      %v254 = vld [vmem:[%s236 + $0x20] sm:$0xff]
      %v255 = vld [vmem:[%s236 + $0x28] sm:$0xff]
      %v256 = vld [vmem:[%s236 + $0x30] sm:$0xff]
      %v257 = vld [vmem:[%s236 + $0x38] sm:$0xff]
      %v258 = vld [vmem:[%s3] sm:$0xff]
      %v259 = vld [vmem:[%s3 + $0x8] sm:$0x3]
      %v260 = vld [vmem:[%s4] sm:$0x1]
      %v262 = vperm.slane %v260, 0
      %vm264 = vcmask 80896
      %v266 = vsel %vm264, %v250, 0
      %v269 = vsel %vm264, %v251, 0
      %v272 = vsel %vm264, %v252, 0
      %v275 = vsel %vm264, %v253, 0
      %v278 = vsel %vm264, %v254, 0
      %v281 = vsel %vm264, %v255, 0
      %v284 = vsel %vm264, %v256, 0
      %v287 = vsel %vm264, %v257, 0
      %vm289 = vcmask 1041408
      %v291 = vsel %vm289, %v259, 0
      %293 = vmatpush.msra.mxu0 0.0
      %294 = vmatpush.msra.mxu0 0.0
      %295 = vmatpush.msra.mxu0 0.0
      %296 = vmatpush.msra.mxu0 0.0
      %297 = vmatpush.msra.mxu0 0.0
      %298 = vmatpush.msra.mxu0 0.0
      %299 = vmatpush.msra.mxu0 0.0
      %300 = vmatpush.msra.mxu0 0.0
      %301 = vmatpush.msra.mxu0 0.0
      %302 = vmatpush.msra.mxu0 0.0
      %303 = vmatpush.msra.mxu0 0.0
      %304 = vmatpush.msra.mxu0 0.0
      %305 = vmatpush.msra.mxu0 0.0
      %306 = vmatpush.msra.mxu0 0.0
      %v307 = vand.u32 %v291, 4294901760
      %308 = vmatpush.msra.mxu0 %v307
      %v309 = vand.u32 %v258, 4294901760
      %310 = vmatpush.msra.mxu0 %v309
      %v311 = vand.u32 %v266, 4294901760
      %v312 = vsub.f32 %v266, %v311
      %v313 = vand.u32 %v312, 4294901760
      %v314 = vsub.f32 %v312, %v313
      %v315 = vand.u32 %v314, 4294901760
      %316 = vmatmul.f32.gmra.mxu0 %v315
      %v317 = vpop.f32.mrf.mxu0
      %v318 = vadd.f32 %v262, %v317
      %v319 = vand.u32 %v269, 4294901760
      %v320 = vsub.f32 %v269, %v319
      %v321 = vand.u32 %v320, 4294901760
      %v322 = vsub.f32 %v320, %v321
      %v323 = vand.u32 %v322, 4294901760
      %324 = vmatmul.f32.gmra.mxu0 %v323
      %v325 = vpop.f32.mrf.mxu0
      %v326 = vadd.f32 %v262, %v325
      %v327 = vand.u32 %v272, 4294901760
      %v328 = vsub.f32 %v272, %v327
      %v329 = vand.u32 %v328, 4294901760
      %v330 = vsub.f32 %v328, %v329
      %v331 = vand.u32 %v330, 4294901760
      %332 = vmatmul.f32.gmra.mxu0 %v331
      %v333 = vpop.f32.mrf.mxu0
      %v334 = vadd.f32 %v262, %v333
      %v335 = vand.u32 %v275, 4294901760
      %v336 = vsub.f32 %v275, %v335
      %v337 = vand.u32 %v336, 4294901760
      %v338 = vsub.f32 %v336, %v337
      %v339 = vand.u32 %v338, 4294901760
      %340 = vmatmul.f32.gmra.mxu0 %v339
      %v341 = vpop.f32.mrf.mxu0
      %v342 = vadd.f32 %v262, %v341
      %v343 = vand.u32 %v278, 4294901760
      %v344 = vsub.f32 %v278, %v343
      %v345 = vand.u32 %v344, 4294901760
      %v346 = vsub.f32 %v344, %v345
      %v347 = vand.u32 %v346, 4294901760
      %348 = vmatmul.f32.gmra.mxu0 %v347
      %v349 = vpop.f32.mrf.mxu0
      %v350 = vadd.f32 %v262, %v349
      %v351 = vand.u32 %v281, 4294901760
      %v352 = vsub.f32 %v281, %v351
      %v353 = vand.u32 %v352, 4294901760
      %v354 = vsub.f32 %v352, %v353
      %v355 = vand.u32 %v354, 4294901760
      %356 = vmatmul.f32.gmra.mxu0 %v355
      %v357 = vpop.f32.mrf.mxu0
      %v358 = vadd.f32 %v262, %v357
      %v359 = vand.u32 %v284, 4294901760
      %v360 = vsub.f32 %v284, %v359
      %v361 = vand.u32 %v360, 4294901760
      %v362 = vsub.f32 %v360, %v361
      %v363 = vand.u32 %v362, 4294901760
      %364 = vmatmul.f32.gmra.mxu0 %v363
      %v365 = vpop.f32.mrf.mxu0
      %v366 = vadd.f32 %v262, %v365
      %v367 = vand.u32 %v287, 4294901760
      %v368 = vsub.f32 %v287, %v367
      %v369 = vand.u32 %v368, 4294901760
      %v370 = vsub.f32 %v368, %v369
      %v371 = vand.u32 %v370, 4294901760
      %372 = vmatmul.f32.gmra.mxu0 %v371
      %v373 = vpop.f32.mrf.mxu0
      %v374 = vadd.f32 %v262, %v373
      %375 = vdwg.mxu0
      %376 = vmatpush.msra.mxu0 0.0
      %377 = vmatpush.msra.mxu0 0.0
      %378 = vmatpush.msra.mxu0 0.0
      %379 = vmatpush.msra.mxu0 0.0
      %380 = vmatpush.msra.mxu0 0.0
      %381 = vmatpush.msra.mxu0 0.0
      %382 = vmatpush.msra.mxu0 0.0
      %383 = vmatpush.msra.mxu0 0.0
      %384 = vmatpush.msra.mxu0 0.0
      %385 = vmatpush.msra.mxu0 0.0
      %386 = vmatpush.msra.mxu0 0.0
      %387 = vmatpush.msra.mxu0 0.0
      %388 = vmatpush.msra.mxu0 0.0
      %389 = vmatpush.msra.mxu0 0.0
      %v390 = vand.u32 %v291, 4294901760
      %v391 = vsub.f32 %v291, %v390
      %v392 = vand.u32 %v391, 4294901760
      %v393 = vsub.f32 %v391, %v392
      %v394 = vand.u32 %v393, 4294901760
      %395 = vmatpush.msra.mxu0 %v394
      %v396 = vand.u32 %v258, 4294901760
      %v397 = vsub.f32 %v258, %v396
      %v398 = vand.u32 %v397, 4294901760
      %v399 = vsub.f32 %v397, %v398
      %v400 = vand.u32 %v399, 4294901760
      %401 = vmatpush.msra.mxu0 %v400
      %v402 = vand.u32 %v266, 4294901760
      %403 = vmatmul.f32.gmra.mxu0 %v402
      %v404 = vpop.f32.mrf.mxu0
      %v405 = vadd.f32 %v318, %v404
      %v406 = vand.u32 %v269, 4294901760
      %407 = vmatmul.f32.gmra.mxu0 %v406
      %v408 = vpop.f32.mrf.mxu0
      %v409 = vadd.f32 %v326, %v408
      %v410 = vand.u32 %v272, 4294901760
      %411 = vmatmul.f32.gmra.mxu0 %v410
      %v412 = vpop.f32.mrf.mxu0
      %v413 = vadd.f32 %v334, %v412
      %v414 = vand.u32 %v275, 4294901760
      %415 = vmatmul.f32.gmra.mxu0 %v414
      %v416 = vpop.f32.mrf.mxu0
      %v417 = vadd.f32 %v342, %v416
      %v418 = vand.u32 %v278, 4294901760
      %419 = vmatmul.f32.gmra.mxu0 %v418
      %v420 = vpop.f32.mrf.mxu0
      %v421 = vadd.f32 %v350, %v420
      %v422 = vand.u32 %v281, 4294901760
      %423 = vmatmul.f32.gmra.mxu0 %v422
      %v424 = vpop.f32.mrf.mxu0
      %v425 = vadd.f32 %v358, %v424
      %v426 = vand.u32 %v284, 4294901760
      %427 = vmatmul.f32.gmra.mxu0 %v426
      %v428 = vpop.f32.mrf.mxu0
      %v429 = vadd.f32 %v366, %v428
      %v430 = vand.u32 %v287, 4294901760
      %431 = vmatmul.f32.gmra.mxu0 %v430
      %v432 = vpop.f32.mrf.mxu0
      %v433 = vadd.f32 %v374, %v432
      %434 = vdwg.mxu0
      %435 = vmatpush.msra.mxu0 0.0
      %436 = vmatpush.msra.mxu0 0.0
      %437 = vmatpush.msra.mxu0 0.0
      %438 = vmatpush.msra.mxu0 0.0
      %439 = vmatpush.msra.mxu0 0.0
      %440 = vmatpush.msra.mxu0 0.0
      %441 = vmatpush.msra.mxu0 0.0
      %442 = vmatpush.msra.mxu0 0.0
      %443 = vmatpush.msra.mxu0 0.0
      %444 = vmatpush.msra.mxu0 0.0
      %445 = vmatpush.msra.mxu0 0.0
      %446 = vmatpush.msra.mxu0 0.0
      %447 = vmatpush.msra.mxu0 0.0
      %448 = vmatpush.msra.mxu0 0.0
      %v449 = vand.u32 %v291, 4294901760
      %v450 = vsub.f32 %v291, %v449
      %451 = vmatpush.msra.mxu0 %v450
      %v452 = vand.u32 %v258, 4294901760
      %v453 = vsub.f32 %v258, %v452
      %454 = vmatpush.msra.mxu0 %v453
      %v455 = vand.u32 %v266, 4294901760
      %v456 = vsub.f32 %v266, %v455
      %457 = vmatmul.f32.gmra.mxu0 %v456
      %v458 = vpop.f32.mrf.mxu0
      %v459 = vadd.f32 %v405, %v458
      %v460 = vand.u32 %v269, 4294901760
      %v461 = vsub.f32 %v269, %v460
      %462 = vmatmul.f32.gmra.mxu0 %v461
      %v463 = vpop.f32.mrf.mxu0
      %v464 = vadd.f32 %v409, %v463
      %v465 = vand.u32 %v272, 4294901760
      %v466 = vsub.f32 %v272, %v465
      %467 = vmatmul.f32.gmra.mxu0 %v466
      %v468 = vpop.f32.mrf.mxu0
      %v469 = vadd.f32 %v413, %v468
      %v470 = vand.u32 %v275, 4294901760
      %v471 = vsub.f32 %v275, %v470
      %472 = vmatmul.f32.gmra.mxu0 %v471
      %v473 = vpop.f32.mrf.mxu0
      %v474 = vadd.f32 %v417, %v473
      %v475 = vand.u32 %v278, 4294901760
      %v476 = vsub.f32 %v278, %v475
      %477 = vmatmul.f32.gmra.mxu0 %v476
      %v478 = vpop.f32.mrf.mxu0
      %v479 = vadd.f32 %v421, %v478
      %v480 = vand.u32 %v281, 4294901760
      %v481 = vsub.f32 %v281, %v480
      %482 = vmatmul.f32.gmra.mxu0 %v481
      %v483 = vpop.f32.mrf.mxu0
      %v484 = vadd.f32 %v425, %v483
      %v485 = vand.u32 %v284, 4294901760
      %v486 = vsub.f32 %v284, %v485
      %487 = vmatmul.f32.gmra.mxu0 %v486
      %v488 = vpop.f32.mrf.mxu0
      %v489 = vadd.f32 %v429, %v488
      %v490 = vand.u32 %v287, 4294901760
      %v491 = vsub.f32 %v287, %v490
      %492 = vmatmul.f32.gmra.mxu0 %v491
      %v493 = vpop.f32.mrf.mxu0
      %v494 = vadd.f32 %v433, %v493
      %495 = vdwg.mxu0
      %496 = vmatpush.msra.mxu0 0.0
      %497 = vmatpush.msra.mxu0 0.0
      %498 = vmatpush.msra.mxu0 0.0
      %499 = vmatpush.msra.mxu0 0.0
      %500 = vmatpush.msra.mxu0 0.0
      %501 = vmatpush.msra.mxu0 0.0
      %502 = vmatpush.msra.mxu0 0.0
      %503 = vmatpush.msra.mxu0 0.0
      %504 = vmatpush.msra.mxu0 0.0
      %505 = vmatpush.msra.mxu0 0.0
      %506 = vmatpush.msra.mxu0 0.0
      %507 = vmatpush.msra.mxu0 0.0
      %508 = vmatpush.msra.mxu0 0.0
      %509 = vmatpush.msra.mxu0 0.0
      %v510 = vand.u32 %v291, 4294901760
      %511 = vmatpush.msra.mxu0 %v510
      %v512 = vand.u32 %v258, 4294901760
      %513 = vmatpush.msra.mxu0 %v512
      %v514 = vand.u32 %v266, 4294901760
      %v515 = vsub.f32 %v266, %v514
      %v516 = vand.u32 %v515, 4294901760
      %517 = vmatmul.f32.gmra.mxu0 %v516
      %v518 = vpop.f32.mrf.mxu0
      %v519 = vadd.f32 %v459, %v518
      %v520 = vand.u32 %v269, 4294901760
      %v521 = vsub.f32 %v269, %v520
      %v522 = vand.u32 %v521, 4294901760
      %523 = vmatmul.f32.gmra.mxu0 %v522
      %v524 = vpop.f32.mrf.mxu0
      %v525 = vadd.f32 %v464, %v524
      %v526 = vand.u32 %v272, 4294901760
      %v527 = vsub.f32 %v272, %v526
      %v528 = vand.u32 %v527, 4294901760
      %529 = vmatmul.f32.gmra.mxu0 %v528
      %v530 = vpop.f32.mrf.mxu0
      %v531 = vadd.f32 %v469, %v530
      %v532 = vand.u32 %v275, 4294901760
      %v533 = vsub.f32 %v275, %v532
      %v534 = vand.u32 %v533, 4294901760
      %535 = vmatmul.f32.gmra.mxu0 %v534
      %v536 = vpop.f32.mrf.mxu0
      %v537 = vadd.f32 %v474, %v536
      %v538 = vand.u32 %v278, 4294901760
      %v539 = vsub.f32 %v278, %v538
      %v540 = vand.u32 %v539, 4294901760
      %541 = vmatmul.f32.gmra.mxu0 %v540
      %v542 = vpop.f32.mrf.mxu0
      %v543 = vadd.f32 %v479, %v542
      %v544 = vand.u32 %v281, 4294901760
      %v545 = vsub.f32 %v281, %v544
      %v546 = vand.u32 %v545, 4294901760
      %547 = vmatmul.f32.gmra.mxu0 %v546
      %v548 = vpop.f32.mrf.mxu0
      %v549 = vadd.f32 %v484, %v548
      %v550 = vand.u32 %v284, 4294901760
      %v551 = vsub.f32 %v284, %v550
      %v552 = vand.u32 %v551, 4294901760
      %553 = vmatmul.f32.gmra.mxu0 %v552
      %v554 = vpop.f32.mrf.mxu0
      %v555 = vadd.f32 %v489, %v554
      %v556 = vand.u32 %v287, 4294901760
      %v557 = vsub.f32 %v287, %v556
      %v558 = vand.u32 %v557, 4294901760
      %559 = vmatmul.f32.gmra.mxu0 %v558
      %v560 = vpop.f32.mrf.mxu0
      %v561 = vadd.f32 %v494, %v560
      %562 = vdwg.mxu0
      %563 = vmatpush.msra.mxu0 0.0
      %564 = vmatpush.msra.mxu0 0.0
      %565 = vmatpush.msra.mxu0 0.0
      %566 = vmatpush.msra.mxu0 0.0
      %567 = vmatpush.msra.mxu0 0.0
      %568 = vmatpush.msra.mxu0 0.0
      %569 = vmatpush.msra.mxu0 0.0
      %570 = vmatpush.msra.mxu0 0.0
      %571 = vmatpush.msra.mxu0 0.0
      %572 = vmatpush.msra.mxu0 0.0
      %573 = vmatpush.msra.mxu0 0.0
      %574 = vmatpush.msra.mxu0 0.0
      %575 = vmatpush.msra.mxu0 0.0
      %576 = vmatpush.msra.mxu0 0.0
      %v577 = vand.u32 %v291, 4294901760
      %v578 = vsub.f32 %v291, %v577
      %v579 = vand.u32 %v578, 4294901760
      %580 = vmatpush.msra.mxu0 %v579
      %v581 = vand.u32 %v258, 4294901760
      %v582 = vsub.f32 %v258, %v581
      %v583 = vand.u32 %v582, 4294901760
      %584 = vmatpush.msra.mxu0 %v583
      %v585 = vand.u32 %v266, 4294901760
      %586 = vmatmul.f32.gmra.mxu0 %v585
      %v587 = vpop.f32.mrf.mxu0
      %v588 = vadd.f32 %v519, %v587
      %v589 = vand.u32 %v269, 4294901760
      %590 = vmatmul.f32.gmra.mxu0 %v589
      %v591 = vpop.f32.mrf.mxu0
      %v592 = vadd.f32 %v525, %v591
      %v593 = vand.u32 %v272, 4294901760
      %594 = vmatmul.f32.gmra.mxu0 %v593
      %v595 = vpop.f32.mrf.mxu0
      %v596 = vadd.f32 %v531, %v595
      %v597 = vand.u32 %v275, 4294901760
      %598 = vmatmul.f32.gmra.mxu0 %v597
      %v599 = vpop.f32.mrf.mxu0
      %v600 = vadd.f32 %v537, %v599
      %v601 = vand.u32 %v278, 4294901760
      %602 = vmatmul.f32.gmra.mxu0 %v601
      %v603 = vpop.f32.mrf.mxu0
      %v604 = vadd.f32 %v543, %v603
      %v605 = vand.u32 %v281, 4294901760
      %606 = vmatmul.f32.gmra.mxu0 %v605
      %v607 = vpop.f32.mrf.mxu0
      %v608 = vadd.f32 %v549, %v607
      %v609 = vand.u32 %v284, 4294901760
      %610 = vmatmul.f32.gmra.mxu0 %v609
      %v611 = vpop.f32.mrf.mxu0
      %v612 = vadd.f32 %v555, %v611
      %v613 = vand.u32 %v287, 4294901760
      %614 = vmatmul.f32.gmra.mxu0 %v613
      %v615 = vpop.f32.mrf.mxu0
      %v616 = vadd.f32 %v561, %v615
      %617 = vdwg.mxu0
      %618 = vmatpush.msra.mxu0 0.0
      %619 = vmatpush.msra.mxu0 0.0
      %620 = vmatpush.msra.mxu0 0.0
      %621 = vmatpush.msra.mxu0 0.0
      %622 = vmatpush.msra.mxu0 0.0
      %623 = vmatpush.msra.mxu0 0.0
      %624 = vmatpush.msra.mxu0 0.0
      %625 = vmatpush.msra.mxu0 0.0
      %626 = vmatpush.msra.mxu0 0.0
      %627 = vmatpush.msra.mxu0 0.0
      %628 = vmatpush.msra.mxu0 0.0
      %629 = vmatpush.msra.mxu0 0.0
      %630 = vmatpush.msra.mxu0 0.0
      %631 = vmatpush.msra.mxu0 0.0
      %v632 = vand.u32 %v291, 4294901760
      %633 = vmatpush.msra.mxu0 %v632
      %v634 = vand.u32 %v258, 4294901760
      %635 = vmatpush.msra.mxu0 %v634
      %v636 = vand.u32 %v266, 4294901760
      %637 = vmatmul.f32.gmra.mxu0 %v636
      %v638 = vpop.f32.mrf.mxu0
      %v639 = vadd.f32 %v588, %v638
      %v640 = vand.u32 %v269, 4294901760
      %641 = vmatmul.f32.gmra.mxu0 %v640
      %v642 = vpop.f32.mrf.mxu0
      %v643 = vadd.f32 %v592, %v642
      %v644 = vand.u32 %v272, 4294901760
      %645 = vmatmul.f32.gmra.mxu0 %v644
      %v646 = vpop.f32.mrf.mxu0
      %v647 = vadd.f32 %v596, %v646
      %v648 = vand.u32 %v275, 4294901760
      %649 = vmatmul.f32.gmra.mxu0 %v648
      %v650 = vpop.f32.mrf.mxu0
      %v651 = vadd.f32 %v600, %v650
      %v652 = vand.u32 %v278, 4294901760
      %653 = vmatmul.f32.gmra.mxu0 %v652
      %v654 = vpop.f32.mrf.mxu0
      %v655 = vadd.f32 %v604, %v654
      %v656 = vand.u32 %v281, 4294901760
      %657 = vmatmul.f32.gmra.mxu0 %v656
      %v658 = vpop.f32.mrf.mxu0
      %v659 = vadd.f32 %v608, %v658
      %v660 = vand.u32 %v284, 4294901760
      %661 = vmatmul.f32.gmra.mxu0 %v660
      %v662 = vpop.f32.mrf.mxu0
      %v663 = vadd.f32 %v612, %v662
      %v664 = vand.u32 %v287, 4294901760
      %665 = vmatmul.f32.gmra.mxu0 %v664
      %v666 = vpop.f32.mrf.mxu0
      %v667 = vadd.f32 %v616, %v666
      %668 = vdwg.mxu0
      %v669 = vld [vmem:[%s2] sm:$0xff]
      %v670 = vld [vmem:[%s2 + $0x8] sm:$0xff]
      %v671 = vld [vmem:[%s2 + $0x10] sm:$0xff]
      %v672 = vld [vmem:[%s2 + $0x18] sm:$0xff]
      %v673 = vld [vmem:[%s2 + $0x20] sm:$0xff]
      %v674 = vld [vmem:[%s2 + $0x28] sm:$0xff]
      %v675 = vld [vmem:[%s2 + $0x30] sm:$0xff]
      %v676 = vld [vmem:[%s2 + $0x38] sm:$0xff]
      %v677 = vld [vmem:[%s2 + $0x40] sm:$0xff]
      %v678 = vld [vmem:[%s2 + $0x48] sm:$0xff]
      %v679 = vld [vmem:[%s2 + $0x50] sm:$0xff]
      %v680 = vld [vmem:[%s2 + $0x58] sm:$0xff]
      %v681 = vld [vmem:[%s2 + $0x60] sm:$0xff]
      %v682 = vld [vmem:[%s2 + $0x68] sm:$0xff]
      %v683 = vld [vmem:[%s2 + $0x70] sm:$0xff]
      %v684 = vld [vmem:[%s2 + $0x78] sm:$0xff]
      %v685 = vld [vmem:[%s242] sm:$0xff]
      %v686 = vld [vmem:[%s242 + $0x8] sm:$0xff]
      %v687 = vld [vmem:[%s242 + $0x10] sm:$0xff]
      %v688 = vld [vmem:[%s242 + $0x18] sm:$0xff]
      %v689 = vld [vmem:[%s242 + $0x20] sm:$0xff]
      %v690 = vld [vmem:[%s242 + $0x28] sm:$0xff]
      %v691 = vld [vmem:[%s242 + $0x30] sm:$0xff]
      %v692 = vld [vmem:[%s242 + $0x38] sm:$0xff]
      %v693 = vlaneseq
      %v694 = vand.u32 %v693, 127
      %695 = vset.pattern.permute.xlu0 0
      %696 = vperm.xlu0 %695, %v685
      %v697 = vpop.permute.xlu0 %696
      %698 = vset.pattern.permute.xlu0 0
      %699 = vperm.xlu0 %698, %v686
      %v700 = vpop.permute.xlu0 %699
      %701 = vset.pattern.permute.xlu0 0
      %702 = vperm.xlu0 %701, %v687
      %v703 = vpop.permute.xlu0 %702
      %704 = vset.pattern.permute.xlu0 0
      %705 = vperm.xlu0 %704, %v688
      %v706 = vpop.permute.xlu0 %705
      %707 = vset.pattern.permute.xlu0 0
      %708 = vperm.xlu0 %707, %v689
      %v709 = vpop.permute.xlu0 %708
      %710 = vset.pattern.permute.xlu0 0
      %711 = vperm.xlu0 %710, %v690
      %v712 = vpop.permute.xlu0 %711
      %713 = vset.pattern.permute.xlu0 0
      %714 = vperm.xlu0 %713, %v691
      %v715 = vpop.permute.xlu0 %714
      %716 = vset.pattern.permute.xlu0 0
      %717 = vperm.xlu0 %716, %v692
      %v718 = vpop.permute.xlu0 %717
      %vm719 = vcmp.eq.s32.totalorder %v694, %v697
      %vm720 = vcmp.eq.s32.totalorder %v694, %v700
      %vm721 = vcmp.eq.s32.totalorder %v694, %v703
      %vm722 = vcmp.eq.s32.totalorder %v694, %v706
      %vm723 = vcmp.eq.s32.totalorder %v694, %v709
      %vm724 = vcmp.eq.s32.totalorder %v694, %v712
      %vm725 = vcmp.eq.s32.totalorder %v694, %v715
      %vm726 = vcmp.eq.s32.totalorder %v694, %v718
      %v727 = vsel %vm719, 1, 0
      %v728 = vsel %vm720, 1, 0
      %v729 = vsel %vm721, 1, 0
      %v730 = vsel %vm722, 1, 0
      %v731 = vsel %vm723, 1, 0
      %v732 = vsel %vm724, 1, 0
      %v733 = vsel %vm725, 1, 0
      %v734 = vsel %vm726, 1, 0
      %v735 = vcvt.s32.f32 %v727
      %v736 = vcvt.s32.f32 %v728
      %v737 = vcvt.s32.f32 %v729
      %v738 = vcvt.s32.f32 %v730
      %v739 = vcvt.s32.f32 %v731
      %v740 = vcvt.s32.f32 %v732
      %v741 = vcvt.s32.f32 %v733
      %v742 = vcvt.s32.f32 %v734
      %vm743 = vcmp.ge.s32.totalorder %v685, 0
      %vm744 = vcmp.ge.s32.totalorder %v686, 0
      %vm745 = vcmp.ge.s32.totalorder %v687, 0
      %vm746 = vcmp.ge.s32.totalorder %v688, 0
      %vm747 = vcmp.ge.s32.totalorder %v689, 0
      %vm748 = vcmp.ge.s32.totalorder %v690, 0
      %vm749 = vcmp.ge.s32.totalorder %v691, 0
      %vm750 = vcmp.ge.s32.totalorder %v692, 0
      %v751 = vsel %vm743, 1, 0
      %v752 = vsel %vm744, 1, 0
      %v753 = vsel %vm745, 1, 0
      %v754 = vsel %vm746, 1, 0
      %v755 = vsel %vm747, 1, 0
      %v756 = vsel %vm748, 1, 0
      %v757 = vsel %vm749, 1, 0
      %v758 = vsel %vm750, 1, 0
      %v759 = vcvt.s32.f32 %v751
      %v760 = vcvt.s32.f32 %v752
      %v761 = vcvt.s32.f32 %v753
      %v762 = vcvt.s32.f32 %v754
      %v763 = vcvt.s32.f32 %v755
      %v764 = vcvt.s32.f32 %v756
      %v765 = vcvt.s32.f32 %v757
      %v766 = vcvt.s32.f32 %v758
      %v767 = vand.u32 %v684, 4294901760
      %768 = vmatpush.msra.mxu0 %v767
      %v769 = vand.u32 %v683, 4294901760
      %770 = vmatpush.msra.mxu0 %v769
      %v771 = vand.u32 %v682, 4294901760
      %772 = vmatpush.msra.mxu0 %v771
      %v773 = vand.u32 %v681, 4294901760
      %774 = vmatpush.msra.mxu0 %v773
      %v775 = vand.u32 %v680, 4294901760
      %776 = vmatpush.msra.mxu0 %v775
      %v777 = vand.u32 %v679, 4294901760
      %778 = vmatpush.msra.mxu0 %v777
      %v779 = vand.u32 %v678, 4294901760
      %780 = vmatpush.msra.mxu0 %v779
      %v781 = vand.u32 %v677, 4294901760
      %782 = vmatpush.msra.mxu0 %v781
      %v783 = vand.u32 %v676, 4294901760
      %784 = vmatpush.msra.mxu0 %v783
      %v785 = vand.u32 %v675, 4294901760
      %786 = vmatpush.msra.mxu0 %v785
      %v787 = vand.u32 %v674, 4294901760
      %788 = vmatpush.msra.mxu0 %v787
      %v789 = vand.u32 %v673, 4294901760
      %790 = vmatpush.msra.mxu0 %v789
      %v791 = vand.u32 %v672, 4294901760
      %792 = vmatpush.msra.mxu0 %v791
      %v793 = vand.u32 %v671, 4294901760
      %794 = vmatpush.msra.mxu0 %v793
      %v795 = vand.u32 %v670, 4294901760
      %796 = vmatpush.msra.mxu0 %v795
      %v797 = vand.u32 %v669, 4294901760
      %798 = vmatpush.msra.mxu0 %v797
      %v799 = vand.u32 %v735, 4294901760
      %v800 = vsub.f32 %v735, %v799
      %v801 = vand.u32 %v800, 4294901760
      %v802 = vsub.f32 %v800, %v801
      %v803 = vand.u32 %v802, 4294901760
      %804 = vmatmul.f32.gmra.mxu0 %v803
      %v805 = vpop.f32.mrf.mxu0
      %v806 = vadd.f32 %v639, %v805
      %v807 = vand.u32 %v736, 4294901760
      %v808 = vsub.f32 %v736, %v807
      %v809 = vand.u32 %v808, 4294901760
      %v810 = vsub.f32 %v808, %v809
      %v811 = vand.u32 %v810, 4294901760
      %812 = vmatmul.f32.gmra.mxu0 %v811
      %v813 = vpop.f32.mrf.mxu0
      %v814 = vadd.f32 %v643, %v813
      %v815 = vand.u32 %v737, 4294901760
      %v816 = vsub.f32 %v737, %v815
      %v817 = vand.u32 %v816, 4294901760
      %v818 = vsub.f32 %v816, %v817
      %v819 = vand.u32 %v818, 4294901760
      %820 = vmatmul.f32.gmra.mxu0 %v819
      %v821 = vpop.f32.mrf.mxu0
      %v822 = vadd.f32 %v647, %v821
      %v823 = vand.u32 %v738, 4294901760
      %v824 = vsub.f32 %v738, %v823
      %v825 = vand.u32 %v824, 4294901760
      %v826 = vsub.f32 %v824, %v825
      %v827 = vand.u32 %v826, 4294901760
      %828 = vmatmul.f32.gmra.mxu0 %v827
      %v829 = vpop.f32.mrf.mxu0
      %v830 = vadd.f32 %v651, %v829
      %v831 = vand.u32 %v739, 4294901760
      %v832 = vsub.f32 %v739, %v831
      %v833 = vand.u32 %v832, 4294901760
      %v834 = vsub.f32 %v832, %v833
      %v835 = vand.u32 %v834, 4294901760
      %836 = vmatmul.f32.gmra.mxu0 %v835
      %v837 = vpop.f32.mrf.mxu0
      %v838 = vadd.f32 %v655, %v837
      %v839 = vand.u32 %v740, 4294901760
      %v840 = vsub.f32 %v740, %v839
      %v841 = vand.u32 %v840, 4294901760
      %v842 = vsub.f32 %v840, %v841
      %v843 = vand.u32 %v842, 4294901760
      %844 = vmatmul.f32.gmra.mxu0 %v843
      %v845 = vpop.f32.mrf.mxu0
      %v846 = vadd.f32 %v659, %v845
      %v847 = vand.u32 %v741, 4294901760
      %v848 = vsub.f32 %v741, %v847
      %v849 = vand.u32 %v848, 4294901760
      %v850 = vsub.f32 %v848, %v849
      %v851 = vand.u32 %v850, 4294901760
      %852 = vmatmul.f32.gmra.mxu0 %v851
      %v853 = vpop.f32.mrf.mxu0
      %v854 = vadd.f32 %v663, %v853
      %v855 = vand.u32 %v742, 4294901760
      %v856 = vsub.f32 %v742, %v855
      %v857 = vand.u32 %v856, 4294901760
      %v858 = vsub.f32 %v856, %v857
      %v859 = vand.u32 %v858, 4294901760
      %860 = vmatmul.f32.gmra.mxu0 %v859
      %v861 = vpop.f32.mrf.mxu0
      %v862 = vadd.f32 %v667, %v861
      %863 = vdwg.mxu0
      %v864 = vand.u32 %v684, 4294901760
      %v865 = vsub.f32 %v684, %v864
      %v866 = vand.u32 %v865, 4294901760
      %v867 = vsub.f32 %v865, %v866
      %v868 = vand.u32 %v867, 4294901760
      %869 = vmatpush.msra.mxu0 %v868
      %v870 = vand.u32 %v683, 4294901760
      %v871 = vsub.f32 %v683, %v870
      %v872 = vand.u32 %v871, 4294901760
      %v873 = vsub.f32 %v871, %v872
      %v874 = vand.u32 %v873, 4294901760
      %875 = vmatpush.msra.mxu0 %v874
      %v876 = vand.u32 %v682, 4294901760
      %v877 = vsub.f32 %v682, %v876
      %v878 = vand.u32 %v877, 4294901760
      %v879 = vsub.f32 %v877, %v878
      %v880 = vand.u32 %v879, 4294901760
      %881 = vmatpush.msra.mxu0 %v880
      %v882 = vand.u32 %v681, 4294901760
      %v883 = vsub.f32 %v681, %v882
      %v884 = vand.u32 %v883, 4294901760
      %v885 = vsub.f32 %v883, %v884
      %v886 = vand.u32 %v885, 4294901760
      %887 = vmatpush.msra.mxu0 %v886
      %v888 = vand.u32 %v680, 4294901760
      %v889 = vsub.f32 %v680, %v888
      %v890 = vand.u32 %v889, 4294901760
      %v891 = vsub.f32 %v889, %v890
      %v892 = vand.u32 %v891, 4294901760
      %893 = vmatpush.msra.mxu0 %v892
      %v894 = vand.u32 %v679, 4294901760
      %v895 = vsub.f32 %v679, %v894
      %v896 = vand.u32 %v895, 4294901760
      %v897 = vsub.f32 %v895, %v896
      %v898 = vand.u32 %v897, 4294901760
      %899 = vmatpush.msra.mxu0 %v898
      %v900 = vand.u32 %v678, 4294901760
      %v901 = vsub.f32 %v678, %v900
      %v902 = vand.u32 %v901, 4294901760
      %v903 = vsub.f32 %v901, %v902
      %v904 = vand.u32 %v903, 4294901760
      %905 = vmatpush.msra.mxu0 %v904
      %v906 = vand.u32 %v677, 4294901760
      %v907 = vsub.f32 %v677, %v906
      %v908 = vand.u32 %v907, 4294901760
      %v909 = vsub.f32 %v907, %v908
      %v910 = vand.u32 %v909, 4294901760
      %911 = vmatpush.msra.mxu0 %v910
      %v912 = vand.u32 %v676, 4294901760
      %v913 = vsub.f32 %v676, %v912
      %v914 = vand.u32 %v913, 4294901760
      %v915 = vsub.f32 %v913, %v914
      %v916 = vand.u32 %v915, 4294901760
      %917 = vmatpush.msra.mxu0 %v916
      %v918 = vand.u32 %v675, 4294901760
      %v919 = vsub.f32 %v675, %v918
      %v920 = vand.u32 %v919, 4294901760
      %v921 = vsub.f32 %v919, %v920
      %v922 = vand.u32 %v921, 4294901760
      %923 = vmatpush.msra.mxu0 %v922
      %v924 = vand.u32 %v674, 4294901760
      %v925 = vsub.f32 %v674, %v924
      %v926 = vand.u32 %v925, 4294901760
      %v927 = vsub.f32 %v925, %v926
      %v928 = vand.u32 %v927, 4294901760
      %929 = vmatpush.msra.mxu0 %v928
      %v930 = vand.u32 %v673, 4294901760
      %v931 = vsub.f32 %v673, %v930
      %v932 = vand.u32 %v931, 4294901760
      %v933 = vsub.f32 %v931, %v932
      %v934 = vand.u32 %v933, 4294901760
      %935 = vmatpush.msra.mxu0 %v934
      %v936 = vand.u32 %v672, 4294901760
      %v937 = vsub.f32 %v672, %v936
      %v938 = vand.u32 %v937, 4294901760
      %v939 = vsub.f32 %v937, %v938
      %v940 = vand.u32 %v939, 4294901760
      %941 = vmatpush.msra.mxu0 %v940
      %v942 = vand.u32 %v671, 4294901760
      %v943 = vsub.f32 %v671, %v942
      %v944 = vand.u32 %v943, 4294901760
      %v945 = vsub.f32 %v943, %v944
      %v946 = vand.u32 %v945, 4294901760
      %947 = vmatpush.msra.mxu0 %v946
      %v948 = vand.u32 %v670, 4294901760
      %v949 = vsub.f32 %v670, %v948
      %v950 = vand.u32 %v949, 4294901760
      %v951 = vsub.f32 %v949, %v950
      %v952 = vand.u32 %v951, 4294901760
      %953 = vmatpush.msra.mxu0 %v952
      %v954 = vand.u32 %v669, 4294901760
      %v955 = vsub.f32 %v669, %v954
      %v956 = vand.u32 %v955, 4294901760
      %v957 = vsub.f32 %v955, %v956
      %v958 = vand.u32 %v957, 4294901760
      %959 = vmatpush.msra.mxu0 %v958
      %v960 = vand.u32 %v735, 4294901760
      %961 = vmatmul.f32.gmra.mxu0 %v960
      %v962 = vpop.f32.mrf.mxu0
      %v963 = vadd.f32 %v806, %v962
      %v964 = vand.u32 %v736, 4294901760
      %965 = vmatmul.f32.gmra.mxu0 %v964
      %v966 = vpop.f32.mrf.mxu0
      %v967 = vadd.f32 %v814, %v966
      %v968 = vand.u32 %v737, 4294901760
      %969 = vmatmul.f32.gmra.mxu0 %v968
      %v970 = vpop.f32.mrf.mxu0
      %v971 = vadd.f32 %v822, %v970
      %v972 = vand.u32 %v738, 4294901760
      %973 = vmatmul.f32.gmra.mxu0 %v972
      %v974 = vpop.f32.mrf.mxu0
      %v975 = vadd.f32 %v830, %v974
      %v976 = vand.u32 %v739, 4294901760
      %977 = vmatmul.f32.gmra.mxu0 %v976
      %v978 = vpop.f32.mrf.mxu0
      %v979 = vadd.f32 %v838, %v978
      %v980 = vand.u32 %v740, 4294901760
      %981 = vmatmul.f32.gmra.mxu0 %v980
      %v982 = vpop.f32.mrf.mxu0
      %v983 = vadd.f32 %v846, %v982
      %v984 = vand.u32 %v741, 4294901760
      %985 = vmatmul.f32.gmra.mxu0 %v984
      %v986 = vpop.f32.mrf.mxu0
      %v987 = vadd.f32 %v854, %v986
      %v988 = vand.u32 %v742, 4294901760
      %989 = vmatmul.f32.gmra.mxu0 %v988
      %v990 = vpop.f32.mrf.mxu0
      %v991 = vadd.f32 %v862, %v990
      %992 = vdwg.mxu0
      %v993 = vand.u32 %v684, 4294901760
      %v994 = vsub.f32 %v684, %v993
      %995 = vmatpush.msra.mxu0 %v994
      %v996 = vand.u32 %v683, 4294901760
      %v997 = vsub.f32 %v683, %v996
      %998 = vmatpush.msra.mxu0 %v997
      %v999 = vand.u32 %v682, 4294901760
      %v1000 = vsub.f32 %v682, %v999
      %1001 = vmatpush.msra.mxu0 %v1000
      %v1002 = vand.u32 %v681, 4294901760
      %v1003 = vsub.f32 %v681, %v1002
      %1004 = vmatpush.msra.mxu0 %v1003
      %v1005 = vand.u32 %v680, 4294901760
      %v1006 = vsub.f32 %v680, %v1005
      %1007 = vmatpush.msra.mxu0 %v1006
      %v1008 = vand.u32 %v679, 4294901760
      %v1009 = vsub.f32 %v679, %v1008
      %1010 = vmatpush.msra.mxu0 %v1009
      %v1011 = vand.u32 %v678, 4294901760
      %v1012 = vsub.f32 %v678, %v1011
      %1013 = vmatpush.msra.mxu0 %v1012
      %v1014 = vand.u32 %v677, 4294901760
      %v1015 = vsub.f32 %v677, %v1014
      %1016 = vmatpush.msra.mxu0 %v1015
      %v1017 = vand.u32 %v676, 4294901760
      %v1018 = vsub.f32 %v676, %v1017
      %1019 = vmatpush.msra.mxu0 %v1018
      %v1020 = vand.u32 %v675, 4294901760
      %v1021 = vsub.f32 %v675, %v1020
      %1022 = vmatpush.msra.mxu0 %v1021
      %v1023 = vand.u32 %v674, 4294901760
      %v1024 = vsub.f32 %v674, %v1023
      %1025 = vmatpush.msra.mxu0 %v1024
      %v1026 = vand.u32 %v673, 4294901760
      %v1027 = vsub.f32 %v673, %v1026
      %1028 = vmatpush.msra.mxu0 %v1027
      %v1029 = vand.u32 %v672, 4294901760
      %v1030 = vsub.f32 %v672, %v1029
      %1031 = vmatpush.msra.mxu0 %v1030
      %v1032 = vand.u32 %v671, 4294901760
      %v1033 = vsub.f32 %v671, %v1032
      %1034 = vmatpush.msra.mxu0 %v1033
      %v1035 = vand.u32 %v670, 4294901760
      %v1036 = vsub.f32 %v670, %v1035
      %1037 = vmatpush.msra.mxu0 %v1036
      %v1038 = vand.u32 %v669, 4294901760
      %v1039 = vsub.f32 %v669, %v1038
      %1040 = vmatpush.msra.mxu0 %v1039
      %v1041 = vand.u32 %v735, 4294901760
      %v1042 = vsub.f32 %v735, %v1041
      %1043 = vmatmul.f32.gmra.mxu0 %v1042
      %v1044 = vpop.f32.mrf.mxu0
      %v1045 = vadd.f32 %v963, %v1044
      %v1046 = vand.u32 %v736, 4294901760
      %v1047 = vsub.f32 %v736, %v1046
      %1048 = vmatmul.f32.gmra.mxu0 %v1047
      %v1049 = vpop.f32.mrf.mxu0
      %v1050 = vadd.f32 %v967, %v1049
      %v1051 = vand.u32 %v737, 4294901760
      %v1052 = vsub.f32 %v737, %v1051
      %1053 = vmatmul.f32.gmra.mxu0 %v1052
      %v1054 = vpop.f32.mrf.mxu0
      %v1055 = vadd.f32 %v971, %v1054
      %v1056 = vand.u32 %v738, 4294901760
      %v1057 = vsub.f32 %v738, %v1056
      %1058 = vmatmul.f32.gmra.mxu0 %v1057
      %v1059 = vpop.f32.mrf.mxu0
      %v1060 = vadd.f32 %v975, %v1059
      %v1061 = vand.u32 %v739, 4294901760
      %v1062 = vsub.f32 %v739, %v1061
      %1063 = vmatmul.f32.gmra.mxu0 %v1062
      %v1064 = vpop.f32.mrf.mxu0
      %v1065 = vadd.f32 %v979, %v1064
      %v1066 = vand.u32 %v740, 4294901760
      %v1067 = vsub.f32 %v740, %v1066
      %1068 = vmatmul.f32.gmra.mxu0 %v1067
      %v1069 = vpop.f32.mrf.mxu0
      %v1070 = vadd.f32 %v983, %v1069
      %v1071 = vand.u32 %v741, 4294901760
      %v1072 = vsub.f32 %v741, %v1071
      %1073 = vmatmul.f32.gmra.mxu0 %v1072
      %v1074 = vpop.f32.mrf.mxu0
      %v1075 = vadd.f32 %v987, %v1074
      %v1076 = vand.u32 %v742, 4294901760
      %v1077 = vsub.f32 %v742, %v1076
      %1078 = vmatmul.f32.gmra.mxu0 %v1077
      %v1079 = vpop.f32.mrf.mxu0
      %v1080 = vadd.f32 %v991, %v1079
      %1081 = vdwg.mxu0
      %v1082 = vand.u32 %v684, 4294901760
      %1083 = vmatpush.msra.mxu0 %v1082
      %v1084 = vand.u32 %v683, 4294901760
      %1085 = vmatpush.msra.mxu0 %v1084
      %v1086 = vand.u32 %v682, 4294901760
      %1087 = vmatpush.msra.mxu0 %v1086
      %v1088 = vand.u32 %v681, 4294901760
      %1089 = vmatpush.msra.mxu0 %v1088
      %v1090 = vand.u32 %v680, 4294901760
      %1091 = vmatpush.msra.mxu0 %v1090
      %v1092 = vand.u32 %v679, 4294901760
      %1093 = vmatpush.msra.mxu0 %v1092
      %v1094 = vand.u32 %v678, 4294901760
      %1095 = vmatpush.msra.mxu0 %v1094
      %v1096 = vand.u32 %v677, 4294901760
      %1097 = vmatpush.msra.mxu0 %v1096
      %v1098 = vand.u32 %v676, 4294901760
      %1099 = vmatpush.msra.mxu0 %v1098
      %v1100 = vand.u32 %v675, 4294901760
      %1101 = vmatpush.msra.mxu0 %v1100
      %v1102 = vand.u32 %v674, 4294901760
      %1103 = vmatpush.msra.mxu0 %v1102
      %v1104 = vand.u32 %v673, 4294901760
      %1105 = vmatpush.msra.mxu0 %v1104
      %v1106 = vand.u32 %v672, 4294901760
      %1107 = vmatpush.msra.mxu0 %v1106
      %v1108 = vand.u32 %v671, 4294901760
      %1109 = vmatpush.msra.mxu0 %v1108
      %v1110 = vand.u32 %v670, 4294901760
      %1111 = vmatpush.msra.mxu0 %v1110
      %v1112 = vand.u32 %v669, 4294901760
      %1113 = vmatpush.msra.mxu0 %v1112
      %v1114 = vand.u32 %v735, 4294901760
      %v1115 = vsub.f32 %v735, %v1114
      %v1116 = vand.u32 %v1115, 4294901760
      %1117 = vmatmul.f32.gmra.mxu0 %v1116
      %v1118 = vpop.f32.mrf.mxu0
      %v1119 = vadd.f32 %v1045, %v1118
      %v1120 = vand.u32 %v736, 4294901760
      %v1121 = vsub.f32 %v736, %v1120
      %v1122 = vand.u32 %v1121, 4294901760
      %1123 = vmatmul.f32.gmra.mxu0 %v1122
      %v1124 = vpop.f32.mrf.mxu0
      %v1125 = vadd.f32 %v1050, %v1124
      %v1126 = vand.u32 %v737, 4294901760
      %v1127 = vsub.f32 %v737, %v1126
      %v1128 = vand.u32 %v1127, 4294901760
      %1129 = vmatmul.f32.gmra.mxu0 %v1128
      %v1130 = vpop.f32.mrf.mxu0
      %v1131 = vadd.f32 %v1055, %v1130
      %v1132 = vand.u32 %v738, 4294901760
      %v1133 = vsub.f32 %v738, %v1132
      %v1134 = vand.u32 %v1133, 4294901760
      %1135 = vmatmul.f32.gmra.mxu0 %v1134
      %v1136 = vpop.f32.mrf.mxu0
      %v1137 = vadd.f32 %v1060, %v1136
      %v1138 = vand.u32 %v739, 4294901760
      %v1139 = vsub.f32 %v739, %v1138
      %v1140 = vand.u32 %v1139, 4294901760
      %1141 = vmatmul.f32.gmra.mxu0 %v1140
      %v1142 = vpop.f32.mrf.mxu0
      %v1143 = vadd.f32 %v1065, %v1142
      %v1144 = vand.u32 %v740, 4294901760
      %v1145 = vsub.f32 %v740, %v1144
      %v1146 = vand.u32 %v1145, 4294901760
      %1147 = vmatmul.f32.gmra.mxu0 %v1146
      %v1148 = vpop.f32.mrf.mxu0
      %v1149 = vadd.f32 %v1070, %v1148
      %v1150 = vand.u32 %v741, 4294901760
      %v1151 = vsub.f32 %v741, %v1150
      %v1152 = vand.u32 %v1151, 4294901760
      %1153 = vmatmul.f32.gmra.mxu0 %v1152
      %v1154 = vpop.f32.mrf.mxu0
      %v1155 = vadd.f32 %v1075, %v1154
      %v1156 = vand.u32 %v742, 4294901760
      %v1157 = vsub.f32 %v742, %v1156
      %v1158 = vand.u32 %v1157, 4294901760
      %1159 = vmatmul.f32.gmra.mxu0 %v1158
      %v1160 = vpop.f32.mrf.mxu0
      %v1161 = vadd.f32 %v1080, %v1160
      %1162 = vdwg.mxu0
      %v1163 = vand.u32 %v684, 4294901760
      %v1164 = vsub.f32 %v684, %v1163
      %v1165 = vand.u32 %v1164, 4294901760
      %1166 = vmatpush.msra.mxu0 %v1165
      %v1167 = vand.u32 %v683, 4294901760
      %v1168 = vsub.f32 %v683, %v1167
      %v1169 = vand.u32 %v1168, 4294901760
      %1170 = vmatpush.msra.mxu0 %v1169
      %v1171 = vand.u32 %v682, 4294901760
      %v1172 = vsub.f32 %v682, %v1171
      %v1173 = vand.u32 %v1172, 4294901760
      %1174 = vmatpush.msra.mxu0 %v1173
      %v1175 = vand.u32 %v681, 4294901760
      %v1176 = vsub.f32 %v681, %v1175
      %v1177 = vand.u32 %v1176, 4294901760
      %1178 = vmatpush.msra.mxu0 %v1177
      %v1179 = vand.u32 %v680, 4294901760
      %v1180 = vsub.f32 %v680, %v1179
      %v1181 = vand.u32 %v1180, 4294901760
      %1182 = vmatpush.msra.mxu0 %v1181
      %v1183 = vand.u32 %v679, 4294901760
      %v1184 = vsub.f32 %v679, %v1183
      %v1185 = vand.u32 %v1184, 4294901760
      %1186 = vmatpush.msra.mxu0 %v1185
      %v1187 = vand.u32 %v678, 4294901760
      %v1188 = vsub.f32 %v678, %v1187
      %v1189 = vand.u32 %v1188, 4294901760
      %1190 = vmatpush.msra.mxu0 %v1189
      %v1191 = vand.u32 %v677, 4294901760
      %v1192 = vsub.f32 %v677, %v1191
      %v1193 = vand.u32 %v1192, 4294901760
      %1194 = vmatpush.msra.mxu0 %v1193
      %v1195 = vand.u32 %v676, 4294901760
      %v1196 = vsub.f32 %v676, %v1195
      %v1197 = vand.u32 %v1196, 4294901760
      %1198 = vmatpush.msra.mxu0 %v1197
      %v1199 = vand.u32 %v675, 4294901760
      %v1200 = vsub.f32 %v675, %v1199
      %v1201 = vand.u32 %v1200, 4294901760
      %1202 = vmatpush.msra.mxu0 %v1201
      %v1203 = vand.u32 %v674, 4294901760
      %v1204 = vsub.f32 %v674, %v1203
      %v1205 = vand.u32 %v1204, 4294901760
      %1206 = vmatpush.msra.mxu0 %v1205
      %v1207 = vand.u32 %v673, 4294901760
      %v1208 = vsub.f32 %v673, %v1207
      %v1209 = vand.u32 %v1208, 4294901760
      %1210 = vmatpush.msra.mxu0 %v1209
      %v1211 = vand.u32 %v672, 4294901760
      %v1212 = vsub.f32 %v672, %v1211
      %v1213 = vand.u32 %v1212, 4294901760
      %1214 = vmatpush.msra.mxu0 %v1213
      %v1215 = vand.u32 %v671, 4294901760
      %v1216 = vsub.f32 %v671, %v1215
      %v1217 = vand.u32 %v1216, 4294901760
      %1218 = vmatpush.msra.mxu0 %v1217
      %v1219 = vand.u32 %v670, 4294901760
      %v1220 = vsub.f32 %v670, %v1219
      %v1221 = vand.u32 %v1220, 4294901760
      %1222 = vmatpush.msra.mxu0 %v1221
      %v1223 = vand.u32 %v669, 4294901760
      %v1224 = vsub.f32 %v669, %v1223
      %v1225 = vand.u32 %v1224, 4294901760
      %1226 = vmatpush.msra.mxu0 %v1225
      %v1227 = vand.u32 %v735, 4294901760
      %1228 = vmatmul.f32.gmra.mxu0 %v1227
      %v1229 = vpop.f32.mrf.mxu0
      %v1230 = vadd.f32 %v1119, %v1229
      %v1231 = vand.u32 %v736, 4294901760
      %1232 = vmatmul.f32.gmra.mxu0 %v1231
      %v1233 = vpop.f32.mrf.mxu0
      %v1234 = vadd.f32 %v1125, %v1233
      %v1235 = vand.u32 %v737, 4294901760
      %1236 = vmatmul.f32.gmra.mxu0 %v1235
      %v1237 = vpop.f32.mrf.mxu0
      %v1238 = vadd.f32 %v1131, %v1237
      %v1239 = vand.u32 %v738, 4294901760
      %1240 = vmatmul.f32.gmra.mxu0 %v1239
      %v1241 = vpop.f32.mrf.mxu0
      %v1242 = vadd.f32 %v1137, %v1241
      %v1243 = vand.u32 %v739, 4294901760
      %1244 = vmatmul.f32.gmra.mxu0 %v1243
      %v1245 = vpop.f32.mrf.mxu0
      %v1246 = vadd.f32 %v1143, %v1245
      %v1247 = vand.u32 %v740, 4294901760
      %1248 = vmatmul.f32.gmra.mxu0 %v1247
      %v1249 = vpop.f32.mrf.mxu0
      %v1250 = vadd.f32 %v1149, %v1249
      %v1251 = vand.u32 %v741, 4294901760
      %1252 = vmatmul.f32.gmra.mxu0 %v1251
      %v1253 = vpop.f32.mrf.mxu0
      %v1254 = vadd.f32 %v1155, %v1253
      %v1255 = vand.u32 %v742, 4294901760
      %1256 = vmatmul.f32.gmra.mxu0 %v1255
      %v1257 = vpop.f32.mrf.mxu0
      %v1258 = vadd.f32 %v1161, %v1257
      %1259 = vdwg.mxu0
      %v1260 = vand.u32 %v684, 4294901760
      %1261 = vmatpush.msra.mxu0 %v1260
      %v1262 = vand.u32 %v683, 4294901760
      %1263 = vmatpush.msra.mxu0 %v1262
      %v1264 = vand.u32 %v682, 4294901760
      %1265 = vmatpush.msra.mxu0 %v1264
      %v1266 = vand.u32 %v681, 4294901760
      %1267 = vmatpush.msra.mxu0 %v1266
      %v1268 = vand.u32 %v680, 4294901760
      %1269 = vmatpush.msra.mxu0 %v1268
      %v1270 = vand.u32 %v679, 4294901760
      %1271 = vmatpush.msra.mxu0 %v1270
      %v1272 = vand.u32 %v678, 4294901760
      %1273 = vmatpush.msra.mxu0 %v1272
      %v1274 = vand.u32 %v677, 4294901760
      %1275 = vmatpush.msra.mxu0 %v1274
      %v1276 = vand.u32 %v676, 4294901760
      %1277 = vmatpush.msra.mxu0 %v1276
      %v1278 = vand.u32 %v675, 4294901760
      %1279 = vmatpush.msra.mxu0 %v1278
      %v1280 = vand.u32 %v674, 4294901760
      %1281 = vmatpush.msra.mxu0 %v1280
      %v1282 = vand.u32 %v673, 4294901760
      %1283 = vmatpush.msra.mxu0 %v1282
      %v1284 = vand.u32 %v672, 4294901760
      %1285 = vmatpush.msra.mxu0 %v1284
      %v1286 = vand.u32 %v671, 4294901760
      %1287 = vmatpush.msra.mxu0 %v1286
      %v1288 = vand.u32 %v670, 4294901760
      %1289 = vmatpush.msra.mxu0 %v1288
      %v1290 = vand.u32 %v669, 4294901760
      %1291 = vmatpush.msra.mxu0 %v1290
      %v1292 = vand.u32 %v735, 4294901760
      %1293 = vmatmul.f32.gmra.mxu0 %v1292
      %v1294 = vpop.f32.mrf.mxu0
      %v1295 = vadd.f32 %v1230, %v1294
      %v1296 = vand.u32 %v736, 4294901760
      %1297 = vmatmul.f32.gmra.mxu0 %v1296
      %v1298 = vpop.f32.mrf.mxu0
      %v1299 = vadd.f32 %v1234, %v1298
      %v1300 = vand.u32 %v737, 4294901760
      %1301 = vmatmul.f32.gmra.mxu0 %v1300
      %v1302 = vpop.f32.mrf.mxu0
      %v1303 = vadd.f32 %v1238, %v1302
      %v1304 = vand.u32 %v738, 4294901760
      %1305 = vmatmul.f32.gmra.mxu0 %v1304
      %v1306 = vpop.f32.mrf.mxu0
      %v1307 = vadd.f32 %v1242, %v1306
      %v1308 = vand.u32 %v739, 4294901760
      %1309 = vmatmul.f32.gmra.mxu0 %v1308
      %v1310 = vpop.f32.mrf.mxu0
      %v1311 = vadd.f32 %v1246, %v1310
      %v1312 = vand.u32 %v740, 4294901760
      %1313 = vmatmul.f32.gmra.mxu0 %v1312
      %v1314 = vpop.f32.mrf.mxu0
      %v1315 = vadd.f32 %v1250, %v1314
      %v1316 = vand.u32 %v741, 4294901760
      %1317 = vmatmul.f32.gmra.mxu0 %v1316
      %v1318 = vpop.f32.mrf.mxu0
      %v1319 = vadd.f32 %v1254, %v1318
      %v1320 = vand.u32 %v742, 4294901760
      %1321 = vmatmul.f32.gmra.mxu0 %v1320
      %v1322 = vpop.f32.mrf.mxu0
      %v1323 = vadd.f32 %v1258, %v1322
      %1324 = vdwg.mxu0
      %1326 = vset.pattern.permute.xlu0 0
      %1327 = vperm.xlu0 %1326, %v759
      %v1328 = vpop.permute.xlu0 %1327
      %1331 = vset.pattern.permute.xlu0 0
      %1332 = vperm.xlu0 %1331, %v760
      %v1333 = vpop.permute.xlu0 %1332
      %1336 = vset.pattern.permute.xlu0 0
      %1337 = vperm.xlu0 %1336, %v761
      %v1338 = vpop.permute.xlu0 %1337
      %1341 = vset.pattern.permute.xlu0 0
      %1342 = vperm.xlu0 %1341, %v762
      %v1343 = vpop.permute.xlu0 %1342
      %1346 = vset.pattern.permute.xlu0 0
      %1347 = vperm.xlu0 %1346, %v763
      %v1348 = vpop.permute.xlu0 %1347
      %1351 = vset.pattern.permute.xlu0 0
      %1352 = vperm.xlu0 %1351, %v764
      %v1353 = vpop.permute.xlu0 %1352
      %1356 = vset.pattern.permute.xlu0 0
      %1357 = vperm.xlu0 %1356, %v765
      %v1358 = vpop.permute.xlu0 %1357
      %1361 = vset.pattern.permute.xlu0 0
      %1362 = vperm.xlu0 %1361, %v766
      %v1363 = vpop.permute.xlu0 %1362
      %v1365 = vmul.f32 %v1295, %v1328
      %v1366 = vmul.f32 %v1299, %v1333
      %v1367 = vmul.f32 %v1303, %v1338
      %v1368 = vmul.f32 %v1307, %v1343
      %v1369 = vmul.f32 %v1311, %v1348
      %v1370 = vmul.f32 %v1315, %v1353
      %v1371 = vmul.f32 %v1319, %v1358
      %v1372 = vmul.f32 %v1323, %v1363
      %1373 = vset.pattern.permute.xlu0 1
      %1374 = vperm.xlu0 %1373, %v685
      %v1375 = vpop.permute.xlu0 %1374
      %1376 = vset.pattern.permute.xlu0 1
      %1377 = vperm.xlu0 %1376, %v686
      %v1378 = vpop.permute.xlu0 %1377
      %1379 = vset.pattern.permute.xlu0 1
      %1380 = vperm.xlu0 %1379, %v687
      %v1381 = vpop.permute.xlu0 %1380
      %1382 = vset.pattern.permute.xlu0 1
      %1383 = vperm.xlu0 %1382, %v688
      %v1384 = vpop.permute.xlu0 %1383
      %1385 = vset.pattern.permute.xlu0 1
      %1386 = vperm.xlu0 %1385, %v689
      %v1387 = vpop.permute.xlu0 %1386
      %1388 = vset.pattern.permute.xlu0 1
      %1389 = vperm.xlu0 %1388, %v690
      %v1390 = vpop.permute.xlu0 %1389
      %1391 = vset.pattern.permute.xlu0 1
      %1392 = vperm.xlu0 %1391, %v691
      %v1393 = vpop.permute.xlu0 %1392
      %1394 = vset.pattern.permute.xlu0 1
      %1395 = vperm.xlu0 %1394, %v692
      %v1396 = vpop.permute.xlu0 %1395
      %vm1397 = vcmp.eq.s32.totalorder %v694, %v1375
      %vm1398 = vcmp.eq.s32.totalorder %v694, %v1378
      %vm1399 = vcmp.eq.s32.totalorder %v694, %v1381
      %vm1400 = vcmp.eq.s32.totalorder %v694, %v1384
      %vm1401 = vcmp.eq.s32.totalorder %v694, %v1387
      %vm1402 = vcmp.eq.s32.totalorder %v694, %v1390
      %vm1403 = vcmp.eq.s32.totalorder %v694, %v1393
      %vm1404 = vcmp.eq.s32.totalorder %v694, %v1396
      %v1405 = vsel %vm1397, 1, 0
      %v1406 = vsel %vm1398, 1, 0
      %v1407 = vsel %vm1399, 1, 0
      %v1408 = vsel %vm1400, 1, 0
      %v1409 = vsel %vm1401, 1, 0
      %v1410 = vsel %vm1402, 1, 0
      %v1411 = vsel %vm1403, 1, 0
      %v1412 = vsel %vm1404, 1, 0
      %v1413 = vcvt.s32.f32 %v1405
      %v1414 = vcvt.s32.f32 %v1406
      %v1415 = vcvt.s32.f32 %v1407
      %v1416 = vcvt.s32.f32 %v1408
      %v1417 = vcvt.s32.f32 %v1409
      %v1418 = vcvt.s32.f32 %v1410
      %v1419 = vcvt.s32.f32 %v1411
      %v1420 = vcvt.s32.f32 %v1412
      %v1421 = vand.u32 %v684, 4294901760
      %1422 = vmatpush.msra.mxu0 %v1421
      %v1423 = vand.u32 %v683, 4294901760
      %1424 = vmatpush.msra.mxu0 %v1423
      %v1425 = vand.u32 %v682, 4294901760
      %1426 = vmatpush.msra.mxu0 %v1425
      %v1427 = vand.u32 %v681, 4294901760
      %1428 = vmatpush.msra.mxu0 %v1427
      %v1429 = vand.u32 %v680, 4294901760
      %1430 = vmatpush.msra.mxu0 %v1429
      %v1431 = vand.u32 %v679, 4294901760
      %1432 = vmatpush.msra.mxu0 %v1431
      %v1433 = vand.u32 %v678, 4294901760
      %1434 = vmatpush.msra.mxu0 %v1433
      %v1435 = vand.u32 %v677, 4294901760
      %1436 = vmatpush.msra.mxu0 %v1435
      %v1437 = vand.u32 %v676, 4294901760
      %1438 = vmatpush.msra.mxu0 %v1437
      %v1439 = vand.u32 %v675, 4294901760
      %1440 = vmatpush.msra.mxu0 %v1439
      %v1441 = vand.u32 %v674, 4294901760
      %1442 = vmatpush.msra.mxu0 %v1441
      %v1443 = vand.u32 %v673, 4294901760
      %1444 = vmatpush.msra.mxu0 %v1443
      %v1445 = vand.u32 %v672, 4294901760
      %1446 = vmatpush.msra.mxu0 %v1445
      %v1447 = vand.u32 %v671, 4294901760
      %1448 = vmatpush.msra.mxu0 %v1447
      %v1449 = vand.u32 %v670, 4294901760
      %1450 = vmatpush.msra.mxu0 %v1449
      %v1451 = vand.u32 %v669, 4294901760
      %1452 = vmatpush.msra.mxu0 %v1451
      %v1453 = vand.u32 %v1413, 4294901760
      %v1454 = vsub.f32 %v1413, %v1453
      %v1455 = vand.u32 %v1454, 4294901760
      %v1456 = vsub.f32 %v1454, %v1455
      %v1457 = vand.u32 %v1456, 4294901760
      %1458 = vmatmul.f32.gmra.mxu0 %v1457
      %v1459 = vpop.f32.mrf.mxu0
      %v1460 = vadd.f32 %v639, %v1459
      %v1461 = vand.u32 %v1414, 4294901760
      %v1462 = vsub.f32 %v1414, %v1461
      %v1463 = vand.u32 %v1462, 4294901760
      %v1464 = vsub.f32 %v1462, %v1463
      %v1465 = vand.u32 %v1464, 4294901760
      %1466 = vmatmul.f32.gmra.mxu0 %v1465
      %v1467 = vpop.f32.mrf.mxu0
      %v1468 = vadd.f32 %v643, %v1467
      %v1469 = vand.u32 %v1415, 4294901760
      %v1470 = vsub.f32 %v1415, %v1469
      %v1471 = vand.u32 %v1470, 4294901760
      %v1472 = vsub.f32 %v1470, %v1471
      %v1473 = vand.u32 %v1472, 4294901760
      %1474 = vmatmul.f32.gmra.mxu0 %v1473
      %v1475 = vpop.f32.mrf.mxu0
      %v1476 = vadd.f32 %v647, %v1475
      %v1477 = vand.u32 %v1416, 4294901760
      %v1478 = vsub.f32 %v1416, %v1477
      %v1479 = vand.u32 %v1478, 4294901760
      %v1480 = vsub.f32 %v1478, %v1479
      %v1481 = vand.u32 %v1480, 4294901760
      %1482 = vmatmul.f32.gmra.mxu0 %v1481
      %v1483 = vpop.f32.mrf.mxu0
      %v1484 = vadd.f32 %v651, %v1483
      %v1485 = vand.u32 %v1417, 4294901760
      %v1486 = vsub.f32 %v1417, %v1485
      %v1487 = vand.u32 %v1486, 4294901760
      %v1488 = vsub.f32 %v1486, %v1487
      %v1489 = vand.u32 %v1488, 4294901760
      %1490 = vmatmul.f32.gmra.mxu0 %v1489
      %v1491 = vpop.f32.mrf.mxu0
      %v1492 = vadd.f32 %v655, %v1491
      %v1493 = vand.u32 %v1418, 4294901760
      %v1494 = vsub.f32 %v1418, %v1493
      %v1495 = vand.u32 %v1494, 4294901760
      %v1496 = vsub.f32 %v1494, %v1495
      %v1497 = vand.u32 %v1496, 4294901760
      %1498 = vmatmul.f32.gmra.mxu0 %v1497
      %v1499 = vpop.f32.mrf.mxu0
      %v1500 = vadd.f32 %v659, %v1499
      %v1501 = vand.u32 %v1419, 4294901760
      %v1502 = vsub.f32 %v1419, %v1501
      %v1503 = vand.u32 %v1502, 4294901760
      %v1504 = vsub.f32 %v1502, %v1503
      %v1505 = vand.u32 %v1504, 4294901760
      %1506 = vmatmul.f32.gmra.mxu0 %v1505
      %v1507 = vpop.f32.mrf.mxu0
      %v1508 = vadd.f32 %v663, %v1507
      %v1509 = vand.u32 %v1420, 4294901760
      %v1510 = vsub.f32 %v1420, %v1509
      %v1511 = vand.u32 %v1510, 4294901760
      %v1512 = vsub.f32 %v1510, %v1511
      %v1513 = vand.u32 %v1512, 4294901760
      %1514 = vmatmul.f32.gmra.mxu0 %v1513
      %v1515 = vpop.f32.mrf.mxu0
      %v1516 = vadd.f32 %v667, %v1515
      %1517 = vdwg.mxu0
      %v1518 = vand.u32 %v684, 4294901760
      %v1519 = vsub.f32 %v684, %v1518
      %v1520 = vand.u32 %v1519, 4294901760
      %v1521 = vsub.f32 %v1519, %v1520
      %v1522 = vand.u32 %v1521, 4294901760
      %1523 = vmatpush.msra.mxu0 %v1522
      %v1524 = vand.u32 %v683, 4294901760
      %v1525 = vsub.f32 %v683, %v1524
      %v1526 = vand.u32 %v1525, 4294901760
      %v1527 = vsub.f32 %v1525, %v1526
      %v1528 = vand.u32 %v1527, 4294901760
      %1529 = vmatpush.msra.mxu0 %v1528
      %v1530 = vand.u32 %v682, 4294901760
      %v1531 = vsub.f32 %v682, %v1530
      %v1532 = vand.u32 %v1531, 4294901760
      %v1533 = vsub.f32 %v1531, %v1532
      %v1534 = vand.u32 %v1533, 4294901760
      %1535 = vmatpush.msra.mxu0 %v1534
      %v1536 = vand.u32 %v681, 4294901760
      %v1537 = vsub.f32 %v681, %v1536
      %v1538 = vand.u32 %v1537, 4294901760
      %v1539 = vsub.f32 %v1537, %v1538
      %v1540 = vand.u32 %v1539, 4294901760
      %1541 = vmatpush.msra.mxu0 %v1540
      %v1542 = vand.u32 %v680, 4294901760
      %v1543 = vsub.f32 %v680, %v1542
      %v1544 = vand.u32 %v1543, 4294901760
      %v1545 = vsub.f32 %v1543, %v1544
      %v1546 = vand.u32 %v1545, 4294901760
      %1547 = vmatpush.msra.mxu0 %v1546
      %v1548 = vand.u32 %v679, 4294901760
      %v1549 = vsub.f32 %v679, %v1548
      %v1550 = vand.u32 %v1549, 4294901760
      %v1551 = vsub.f32 %v1549, %v1550
      %v1552 = vand.u32 %v1551, 4294901760
      %1553 = vmatpush.msra.mxu0 %v1552
      %v1554 = vand.u32 %v678, 4294901760
      %v1555 = vsub.f32 %v678, %v1554
      %v1556 = vand.u32 %v1555, 4294901760
      %v1557 = vsub.f32 %v1555, %v1556
      %v1558 = vand.u32 %v1557, 4294901760
      %1559 = vmatpush.msra.mxu0 %v1558
      %v1560 = vand.u32 %v677, 4294901760
      %v1561 = vsub.f32 %v677, %v1560
      %v1562 = vand.u32 %v1561, 4294901760
      %v1563 = vsub.f32 %v1561, %v1562
      %v1564 = vand.u32 %v1563, 4294901760
      %1565 = vmatpush.msra.mxu0 %v1564
      %v1566 = vand.u32 %v676, 4294901760
      %v1567 = vsub.f32 %v676, %v1566
      %v1568 = vand.u32 %v1567, 4294901760
      %v1569 = vsub.f32 %v1567, %v1568
      %v1570 = vand.u32 %v1569, 4294901760
      %1571 = vmatpush.msra.mxu0 %v1570
      %v1572 = vand.u32 %v675, 4294901760
      %v1573 = vsub.f32 %v675, %v1572
      %v1574 = vand.u32 %v1573, 4294901760
      %v1575 = vsub.f32 %v1573, %v1574
      %v1576 = vand.u32 %v1575, 4294901760
      %1577 = vmatpush.msra.mxu0 %v1576
      %v1578 = vand.u32 %v674, 4294901760
      %v1579 = vsub.f32 %v674, %v1578
      %v1580 = vand.u32 %v1579, 4294901760
      %v1581 = vsub.f32 %v1579, %v1580
      %v1582 = vand.u32 %v1581, 4294901760
      %1583 = vmatpush.msra.mxu0 %v1582
      %v1584 = vand.u32 %v673, 4294901760
      %v1585 = vsub.f32 %v673, %v1584
      %v1586 = vand.u32 %v1585, 4294901760
      %v1587 = vsub.f32 %v1585, %v1586
      %v1588 = vand.u32 %v1587, 4294901760
      %1589 = vmatpush.msra.mxu0 %v1588
      %v1590 = vand.u32 %v672, 4294901760
      %v1591 = vsub.f32 %v672, %v1590
      %v1592 = vand.u32 %v1591, 4294901760
      %v1593 = vsub.f32 %v1591, %v1592
      %v1594 = vand.u32 %v1593, 4294901760
      %1595 = vmatpush.msra.mxu0 %v1594
      %v1596 = vand.u32 %v671, 4294901760
      %v1597 = vsub.f32 %v671, %v1596
      %v1598 = vand.u32 %v1597, 4294901760
      %v1599 = vsub.f32 %v1597, %v1598
      %v1600 = vand.u32 %v1599, 4294901760
      %1601 = vmatpush.msra.mxu0 %v1600
      %v1602 = vand.u32 %v670, 4294901760
      %v1603 = vsub.f32 %v670, %v1602
      %v1604 = vand.u32 %v1603, 4294901760
      %v1605 = vsub.f32 %v1603, %v1604
      %v1606 = vand.u32 %v1605, 4294901760
      %1607 = vmatpush.msra.mxu0 %v1606
      %v1608 = vand.u32 %v669, 4294901760
      %v1609 = vsub.f32 %v669, %v1608
      %v1610 = vand.u32 %v1609, 4294901760
      %v1611 = vsub.f32 %v1609, %v1610
      %v1612 = vand.u32 %v1611, 4294901760
      %1613 = vmatpush.msra.mxu0 %v1612
      %v1614 = vand.u32 %v1413, 4294901760
      %1615 = vmatmul.f32.gmra.mxu0 %v1614
      %v1616 = vpop.f32.mrf.mxu0
      %v1617 = vadd.f32 %v1460, %v1616
      %v1618 = vand.u32 %v1414, 4294901760
      %1619 = vmatmul.f32.gmra.mxu0 %v1618
      %v1620 = vpop.f32.mrf.mxu0
      %v1621 = vadd.f32 %v1468, %v1620
      %v1622 = vand.u32 %v1415, 4294901760
      %1623 = vmatmul.f32.gmra.mxu0 %v1622
      %v1624 = vpop.f32.mrf.mxu0
      %v1625 = vadd.f32 %v1476, %v1624
      %v1626 = vand.u32 %v1416, 4294901760
      %1627 = vmatmul.f32.gmra.mxu0 %v1626
      %v1628 = vpop.f32.mrf.mxu0
      %v1629 = vadd.f32 %v1484, %v1628
      %v1630 = vand.u32 %v1417, 4294901760
      %1631 = vmatmul.f32.gmra.mxu0 %v1630
      %v1632 = vpop.f32.mrf.mxu0
      %v1633 = vadd.f32 %v1492, %v1632
      %v1634 = vand.u32 %v1418, 4294901760
      %1635 = vmatmul.f32.gmra.mxu0 %v1634
      %v1636 = vpop.f32.mrf.mxu0
      %v1637 = vadd.f32 %v1500, %v1636
      %v1638 = vand.u32 %v1419, 4294901760
      %1639 = vmatmul.f32.gmra.mxu0 %v1638
      %v1640 = vpop.f32.mrf.mxu0
      %v1641 = vadd.f32 %v1508, %v1640
      %v1642 = vand.u32 %v1420, 4294901760
      %1643 = vmatmul.f32.gmra.mxu0 %v1642
      %v1644 = vpop.f32.mrf.mxu0
      %v1645 = vadd.f32 %v1516, %v1644
      %1646 = vdwg.mxu0
      %v1647 = vand.u32 %v684, 4294901760
      %v1648 = vsub.f32 %v684, %v1647
      %1649 = vmatpush.msra.mxu0 %v1648
      %v1650 = vand.u32 %v683, 4294901760
      %v1651 = vsub.f32 %v683, %v1650
      %1652 = vmatpush.msra.mxu0 %v1651
      %v1653 = vand.u32 %v682, 4294901760
      %v1654 = vsub.f32 %v682, %v1653
      %1655 = vmatpush.msra.mxu0 %v1654
      %v1656 = vand.u32 %v681, 4294901760
      %v1657 = vsub.f32 %v681, %v1656
      %1658 = vmatpush.msra.mxu0 %v1657
      %v1659 = vand.u32 %v680, 4294901760
      %v1660 = vsub.f32 %v680, %v1659
      %1661 = vmatpush.msra.mxu0 %v1660
      %v1662 = vand.u32 %v679, 4294901760
      %v1663 = vsub.f32 %v679, %v1662
      %1664 = vmatpush.msra.mxu0 %v1663
      %v1665 = vand.u32 %v678, 4294901760
      %v1666 = vsub.f32 %v678, %v1665
      %1667 = vmatpush.msra.mxu0 %v1666
      %v1668 = vand.u32 %v677, 4294901760
      %v1669 = vsub.f32 %v677, %v1668
      %1670 = vmatpush.msra.mxu0 %v1669
      %v1671 = vand.u32 %v676, 4294901760
      %v1672 = vsub.f32 %v676, %v1671
      %1673 = vmatpush.msra.mxu0 %v1672
      %v1674 = vand.u32 %v675, 4294901760
      %v1675 = vsub.f32 %v675, %v1674
      %1676 = vmatpush.msra.mxu0 %v1675
      %v1677 = vand.u32 %v674, 4294901760
      %v1678 = vsub.f32 %v674, %v1677
      %1679 = vmatpush.msra.mxu0 %v1678
      %v1680 = vand.u32 %v673, 4294901760
      %v1681 = vsub.f32 %v673, %v1680
      %1682 = vmatpush.msra.mxu0 %v1681
      %v1683 = vand.u32 %v672, 4294901760
      %v1684 = vsub.f32 %v672, %v1683
      %1685 = vmatpush.msra.mxu0 %v1684
      %v1686 = vand.u32 %v671, 4294901760
      %v1687 = vsub.f32 %v671, %v1686
      %1688 = vmatpush.msra.mxu0 %v1687
      %v1689 = vand.u32 %v670, 4294901760
      %v1690 = vsub.f32 %v670, %v1689
      %1691 = vmatpush.msra.mxu0 %v1690
      %v1692 = vand.u32 %v669, 4294901760
      %v1693 = vsub.f32 %v669, %v1692
      %1694 = vmatpush.msra.mxu0 %v1693
      %v1695 = vand.u32 %v1413, 4294901760
      %v1696 = vsub.f32 %v1413, %v1695
      %1697 = vmatmul.f32.gmra.mxu0 %v1696
      %v1698 = vpop.f32.mrf.mxu0
      %v1699 = vadd.f32 %v1617, %v1698
      %v1700 = vand.u32 %v1414, 4294901760
      %v1701 = vsub.f32 %v1414, %v1700
      %1702 = vmatmul.f32.gmra.mxu0 %v1701
      %v1703 = vpop.f32.mrf.mxu0
      %v1704 = vadd.f32 %v1621, %v1703
      %v1705 = vand.u32 %v1415, 4294901760
      %v1706 = vsub.f32 %v1415, %v1705
      %1707 = vmatmul.f32.gmra.mxu0 %v1706
      %v1708 = vpop.f32.mrf.mxu0
      %v1709 = vadd.f32 %v1625, %v1708
      %v1710 = vand.u32 %v1416, 4294901760
      %v1711 = vsub.f32 %v1416, %v1710
      %1712 = vmatmul.f32.gmra.mxu0 %v1711
      %v1713 = vpop.f32.mrf.mxu0
      %v1714 = vadd.f32 %v1629, %v1713
      %v1715 = vand.u32 %v1417, 4294901760
      %v1716 = vsub.f32 %v1417, %v1715
      %1717 = vmatmul.f32.gmra.mxu0 %v1716
      %v1718 = vpop.f32.mrf.mxu0
      %v1719 = vadd.f32 %v1633, %v1718
      %v1720 = vand.u32 %v1418, 4294901760
      %v1721 = vsub.f32 %v1418, %v1720
      %1722 = vmatmul.f32.gmra.mxu0 %v1721
      %v1723 = vpop.f32.mrf.mxu0
      %v1724 = vadd.f32 %v1637, %v1723
      %v1725 = vand.u32 %v1419, 4294901760
      %v1726 = vsub.f32 %v1419, %v1725
      %1727 = vmatmul.f32.gmra.mxu0 %v1726
      %v1728 = vpop.f32.mrf.mxu0
      %v1729 = vadd.f32 %v1641, %v1728
      %v1730 = vand.u32 %v1420, 4294901760
      %v1731 = vsub.f32 %v1420, %v1730
      %1732 = vmatmul.f32.gmra.mxu0 %v1731
      %v1733 = vpop.f32.mrf.mxu0
      %v1734 = vadd.f32 %v1645, %v1733
      %1735 = vdwg.mxu0
      %v1736 = vand.u32 %v684, 4294901760
      %1737 = vmatpush.msra.mxu0 %v1736
      %v1738 = vand.u32 %v683, 4294901760
      %1739 = vmatpush.msra.mxu0 %v1738
      %v1740 = vand.u32 %v682, 4294901760
      %1741 = vmatpush.msra.mxu0 %v1740
      %v1742 = vand.u32 %v681, 4294901760
      %1743 = vmatpush.msra.mxu0 %v1742
      %v1744 = vand.u32 %v680, 4294901760
      %1745 = vmatpush.msra.mxu0 %v1744
      %v1746 = vand.u32 %v679, 4294901760
      %1747 = vmatpush.msra.mxu0 %v1746
      %v1748 = vand.u32 %v678, 4294901760
      %1749 = vmatpush.msra.mxu0 %v1748
      %v1750 = vand.u32 %v677, 4294901760
      %1751 = vmatpush.msra.mxu0 %v1750
      %v1752 = vand.u32 %v676, 4294901760
      %1753 = vmatpush.msra.mxu0 %v1752
      %v1754 = vand.u32 %v675, 4294901760
      %1755 = vmatpush.msra.mxu0 %v1754
      %v1756 = vand.u32 %v674, 4294901760
      %1757 = vmatpush.msra.mxu0 %v1756
      %v1758 = vand.u32 %v673, 4294901760
      %1759 = vmatpush.msra.mxu0 %v1758
      %v1760 = vand.u32 %v672, 4294901760
      %1761 = vmatpush.msra.mxu0 %v1760
      %v1762 = vand.u32 %v671, 4294901760
      %1763 = vmatpush.msra.mxu0 %v1762
      %v1764 = vand.u32 %v670, 4294901760
      %1765 = vmatpush.msra.mxu0 %v1764
      %v1766 = vand.u32 %v669, 4294901760
      %1767 = vmatpush.msra.mxu0 %v1766
      %v1768 = vand.u32 %v1413, 4294901760
      %v1769 = vsub.f32 %v1413, %v1768
      %v1770 = vand.u32 %v1769, 4294901760
      %1771 = vmatmul.f32.gmra.mxu0 %v1770
      %v1772 = vpop.f32.mrf.mxu0
      %v1773 = vadd.f32 %v1699, %v1772
      %v1774 = vand.u32 %v1414, 4294901760
      %v1775 = vsub.f32 %v1414, %v1774
      %v1776 = vand.u32 %v1775, 4294901760
      %1777 = vmatmul.f32.gmra.mxu0 %v1776
      %v1778 = vpop.f32.mrf.mxu0
      %v1779 = vadd.f32 %v1704, %v1778
      %v1780 = vand.u32 %v1415, 4294901760
      %v1781 = vsub.f32 %v1415, %v1780
      %v1782 = vand.u32 %v1781, 4294901760
      %1783 = vmatmul.f32.gmra.mxu0 %v1782
      %v1784 = vpop.f32.mrf.mxu0
      %v1785 = vadd.f32 %v1709, %v1784
      %v1786 = vand.u32 %v1416, 4294901760
      %v1787 = vsub.f32 %v1416, %v1786
      %v1788 = vand.u32 %v1787, 4294901760
      %1789 = vmatmul.f32.gmra.mxu0 %v1788
      %v1790 = vpop.f32.mrf.mxu0
      %v1791 = vadd.f32 %v1714, %v1790
      %v1792 = vand.u32 %v1417, 4294901760
      %v1793 = vsub.f32 %v1417, %v1792
      %v1794 = vand.u32 %v1793, 4294901760
      %1795 = vmatmul.f32.gmra.mxu0 %v1794
      %v1796 = vpop.f32.mrf.mxu0
      %v1797 = vadd.f32 %v1719, %v1796
      %v1798 = vand.u32 %v1418, 4294901760
      %v1799 = vsub.f32 %v1418, %v1798
      %v1800 = vand.u32 %v1799, 4294901760
      %1801 = vmatmul.f32.gmra.mxu0 %v1800
      %v1802 = vpop.f32.mrf.mxu0
      %v1803 = vadd.f32 %v1724, %v1802
      %v1804 = vand.u32 %v1419, 4294901760
      %v1805 = vsub.f32 %v1419, %v1804
      %v1806 = vand.u32 %v1805, 4294901760
      %1807 = vmatmul.f32.gmra.mxu0 %v1806
      %v1808 = vpop.f32.mrf.mxu0
      %v1809 = vadd.f32 %v1729, %v1808
      %v1810 = vand.u32 %v1420, 4294901760
      %v1811 = vsub.f32 %v1420, %v1810
      %v1812 = vand.u32 %v1811, 4294901760
      %1813 = vmatmul.f32.gmra.mxu0 %v1812
      %v1814 = vpop.f32.mrf.mxu0
      %v1815 = vadd.f32 %v1734, %v1814
      %1816 = vdwg.mxu0
      %v1817 = vand.u32 %v684, 4294901760
      %v1818 = vsub.f32 %v684, %v1817
      %v1819 = vand.u32 %v1818, 4294901760
      %1820 = vmatpush.msra.mxu0 %v1819
      %v1821 = vand.u32 %v683, 4294901760
      %v1822 = vsub.f32 %v683, %v1821
      %v1823 = vand.u32 %v1822, 4294901760
      %1824 = vmatpush.msra.mxu0 %v1823
      %v1825 = vand.u32 %v682, 4294901760
      %v1826 = vsub.f32 %v682, %v1825
      %v1827 = vand.u32 %v1826, 4294901760
      %1828 = vmatpush.msra.mxu0 %v1827
      %v1829 = vand.u32 %v681, 4294901760
      %v1830 = vsub.f32 %v681, %v1829
      %v1831 = vand.u32 %v1830, 4294901760
      %1832 = vmatpush.msra.mxu0 %v1831
      %v1833 = vand.u32 %v680, 4294901760
      %v1834 = vsub.f32 %v680, %v1833
      %v1835 = vand.u32 %v1834, 4294901760
      %1836 = vmatpush.msra.mxu0 %v1835
      %v1837 = vand.u32 %v679, 4294901760
      %v1838 = vsub.f32 %v679, %v1837
      %v1839 = vand.u32 %v1838, 4294901760
      %1840 = vmatpush.msra.mxu0 %v1839
      %v1841 = vand.u32 %v678, 4294901760
      %v1842 = vsub.f32 %v678, %v1841
      %v1843 = vand.u32 %v1842, 4294901760
      %1844 = vmatpush.msra.mxu0 %v1843
      %v1845 = vand.u32 %v677, 4294901760
      %v1846 = vsub.f32 %v677, %v1845
      %v1847 = vand.u32 %v1846, 4294901760
      %1848 = vmatpush.msra.mxu0 %v1847
      %v1849 = vand.u32 %v676, 4294901760
      %v1850 = vsub.f32 %v676, %v1849
      %v1851 = vand.u32 %v1850, 4294901760
      %1852 = vmatpush.msra.mxu0 %v1851
      %v1853 = vand.u32 %v675, 4294901760
      %v1854 = vsub.f32 %v675, %v1853
      %v1855 = vand.u32 %v1854, 4294901760
      %1856 = vmatpush.msra.mxu0 %v1855
      %v1857 = vand.u32 %v674, 4294901760
      %v1858 = vsub.f32 %v674, %v1857
      %v1859 = vand.u32 %v1858, 4294901760
      %1860 = vmatpush.msra.mxu0 %v1859
      %v1861 = vand.u32 %v673, 4294901760
      %v1862 = vsub.f32 %v673, %v1861
      %v1863 = vand.u32 %v1862, 4294901760
      %1864 = vmatpush.msra.mxu0 %v1863
      %v1865 = vand.u32 %v672, 4294901760
      %v1866 = vsub.f32 %v672, %v1865
      %v1867 = vand.u32 %v1866, 4294901760
      %1868 = vmatpush.msra.mxu0 %v1867
      %v1869 = vand.u32 %v671, 4294901760
      %v1870 = vsub.f32 %v671, %v1869
      %v1871 = vand.u32 %v1870, 4294901760
      %1872 = vmatpush.msra.mxu0 %v1871
      %v1873 = vand.u32 %v670, 4294901760
      %v1874 = vsub.f32 %v670, %v1873
      %v1875 = vand.u32 %v1874, 4294901760
      %1876 = vmatpush.msra.mxu0 %v1875
      %v1877 = vand.u32 %v669, 4294901760
      %v1878 = vsub.f32 %v669, %v1877
      %v1879 = vand.u32 %v1878, 4294901760
      %1880 = vmatpush.msra.mxu0 %v1879
      %v1881 = vand.u32 %v1413, 4294901760
      %1882 = vmatmul.f32.gmra.mxu0 %v1881
      %v1883 = vpop.f32.mrf.mxu0
      %v1884 = vadd.f32 %v1773, %v1883
      %v1885 = vand.u32 %v1414, 4294901760
      %1886 = vmatmul.f32.gmra.mxu0 %v1885
      %v1887 = vpop.f32.mrf.mxu0
      %v1888 = vadd.f32 %v1779, %v1887
      %v1889 = vand.u32 %v1415, 4294901760
      %1890 = vmatmul.f32.gmra.mxu0 %v1889
      %v1891 = vpop.f32.mrf.mxu0
      %v1892 = vadd.f32 %v1785, %v1891
      %v1893 = vand.u32 %v1416, 4294901760
      %1894 = vmatmul.f32.gmra.mxu0 %v1893
      %v1895 = vpop.f32.mrf.mxu0
      %v1896 = vadd.f32 %v1791, %v1895
      %v1897 = vand.u32 %v1417, 4294901760
      %1898 = vmatmul.f32.gmra.mxu0 %v1897
      %v1899 = vpop.f32.mrf.mxu0
      %v1900 = vadd.f32 %v1797, %v1899
      %v1901 = vand.u32 %v1418, 4294901760
      %1902 = vmatmul.f32.gmra.mxu0 %v1901
      %v1903 = vpop.f32.mrf.mxu0
      %v1904 = vadd.f32 %v1803, %v1903
      %v1905 = vand.u32 %v1419, 4294901760
      %1906 = vmatmul.f32.gmra.mxu0 %v1905
      %v1907 = vpop.f32.mrf.mxu0
      %v1908 = vadd.f32 %v1809, %v1907
      %v1909 = vand.u32 %v1420, 4294901760
      %1910 = vmatmul.f32.gmra.mxu0 %v1909
      %v1911 = vpop.f32.mrf.mxu0
      %v1912 = vadd.f32 %v1815, %v1911
      %1913 = vdwg.mxu0
      %v1914 = vand.u32 %v684, 4294901760
      %1915 = vmatpush.msra.mxu0 %v1914
      %v1916 = vand.u32 %v683, 4294901760
      %1917 = vmatpush.msra.mxu0 %v1916
      %v1918 = vand.u32 %v682, 4294901760
      %1919 = vmatpush.msra.mxu0 %v1918
      %v1920 = vand.u32 %v681, 4294901760
      %1921 = vmatpush.msra.mxu0 %v1920
      %v1922 = vand.u32 %v680, 4294901760
      %1923 = vmatpush.msra.mxu0 %v1922
      %v1924 = vand.u32 %v679, 4294901760
      %1925 = vmatpush.msra.mxu0 %v1924
      %v1926 = vand.u32 %v678, 4294901760
      %1927 = vmatpush.msra.mxu0 %v1926
      %v1928 = vand.u32 %v677, 4294901760
      %1929 = vmatpush.msra.mxu0 %v1928
      %v1930 = vand.u32 %v676, 4294901760
      %1931 = vmatpush.msra.mxu0 %v1930
      %v1932 = vand.u32 %v675, 4294901760
      %1933 = vmatpush.msra.mxu0 %v1932
      %v1934 = vand.u32 %v674, 4294901760
      %1935 = vmatpush.msra.mxu0 %v1934
      %v1936 = vand.u32 %v673, 4294901760
      %1937 = vmatpush.msra.mxu0 %v1936
      %v1938 = vand.u32 %v672, 4294901760
      %1939 = vmatpush.msra.mxu0 %v1938
      %v1940 = vand.u32 %v671, 4294901760
      %1941 = vmatpush.msra.mxu0 %v1940
      %v1942 = vand.u32 %v670, 4294901760
      %1943 = vmatpush.msra.mxu0 %v1942
      %v1944 = vand.u32 %v669, 4294901760
      %1945 = vmatpush.msra.mxu0 %v1944
      %v1946 = vand.u32 %v1413, 4294901760
      %1947 = vmatmul.f32.gmra.mxu0 %v1946
      %v1948 = vpop.f32.mrf.mxu0
      %v1949 = vadd.f32 %v1884, %v1948
      %v1950 = vand.u32 %v1414, 4294901760
      %1951 = vmatmul.f32.gmra.mxu0 %v1950
      %v1952 = vpop.f32.mrf.mxu0
      %v1953 = vadd.f32 %v1888, %v1952
      %v1954 = vand.u32 %v1415, 4294901760
      %1955 = vmatmul.f32.gmra.mxu0 %v1954
      %v1956 = vpop.f32.mrf.mxu0
      %v1957 = vadd.f32 %v1892, %v1956
      %v1958 = vand.u32 %v1416, 4294901760
      %1959 = vmatmul.f32.gmra.mxu0 %v1958
      %v1960 = vpop.f32.mrf.mxu0
      %v1961 = vadd.f32 %v1896, %v1960
      %v1962 = vand.u32 %v1417, 4294901760
      %1963 = vmatmul.f32.gmra.mxu0 %v1962
      %v1964 = vpop.f32.mrf.mxu0
      %v1965 = vadd.f32 %v1900, %v1964
      %v1966 = vand.u32 %v1418, 4294901760
      %1967 = vmatmul.f32.gmra.mxu0 %v1966
      %v1968 = vpop.f32.mrf.mxu0
      %v1969 = vadd.f32 %v1904, %v1968
      %v1970 = vand.u32 %v1419, 4294901760
      %1971 = vmatmul.f32.gmra.mxu0 %v1970
      %v1972 = vpop.f32.mrf.mxu0
      %v1973 = vadd.f32 %v1908, %v1972
      %v1974 = vand.u32 %v1420, 4294901760
      %1975 = vmatmul.f32.gmra.mxu0 %v1974
      %v1976 = vpop.f32.mrf.mxu0
      %v1977 = vadd.f32 %v1912, %v1976
      %1978 = vdwg.mxu0
      %1979 = vset.pattern.permute.xlu0 1
      %1980 = vperm.xlu0 %1979, %v759
      %v1981 = vpop.permute.xlu0 %1980
      %1983 = vset.pattern.permute.xlu0 1
      %1984 = vperm.xlu0 %1983, %v760
      %v1985 = vpop.permute.xlu0 %1984
      %1987 = vset.pattern.permute.xlu0 1
      %1988 = vperm.xlu0 %1987, %v761
      %v1989 = vpop.permute.xlu0 %1988
      %1991 = vset.pattern.permute.xlu0 1
      %1992 = vperm.xlu0 %1991, %v762
      %v1993 = vpop.permute.xlu0 %1992
      %1995 = vset.pattern.permute.xlu0 1
      %1996 = vperm.xlu0 %1995, %v763
      %v1997 = vpop.permute.xlu0 %1996
      %1999 = vset.pattern.permute.xlu0 1
      %2000 = vperm.xlu0 %1999, %v764
      %v2001 = vpop.permute.xlu0 %2000
      %2003 = vset.pattern.permute.xlu0 1
      %2004 = vperm.xlu0 %2003, %v765
      %v2005 = vpop.permute.xlu0 %2004
      %2007 = vset.pattern.permute.xlu0 1
      %2008 = vperm.xlu0 %2007, %v766
      %v2009 = vpop.permute.xlu0 %2008
      %v2011 = vmul.f32 %v1949, %v1981
      %v2012 = vmul.f32 %v1953, %v1985
      %v2013 = vmul.f32 %v1957, %v1989
      %v2014 = vmul.f32 %v1961, %v1993
      %v2015 = vmul.f32 %v1965, %v1997
      %v2016 = vmul.f32 %v1969, %v2001
      %v2017 = vmul.f32 %v1973, %v2005
      %v2018 = vmul.f32 %v1977, %v2009
      %v2019 = vmax.f32 %v1365, %v2011
      %v2020 = vmax.f32 %v1366, %v2012
      %v2021 = vmax.f32 %v1367, %v2013
      %v2022 = vmax.f32 %v1368, %v2014
      %v2023 = vmax.f32 %v1369, %v2015
      %v2024 = vmax.f32 %v1370, %v2016
      %v2025 = vmax.f32 %v1371, %v2017
      %v2026 = vmax.f32 %v1372, %v2018
      %2027 = vset.pattern.permute.xlu0 2
      %2028 = vperm.xlu0 %2027, %v685
      %v2029 = vpop.permute.xlu0 %2028
      %2030 = vset.pattern.permute.xlu0 2
      %2031 = vperm.xlu0 %2030, %v686
      %v2032 = vpop.permute.xlu0 %2031
      %2033 = vset.pattern.permute.xlu0 2
      %2034 = vperm.xlu0 %2033, %v687
      %v2035 = vpop.permute.xlu0 %2034
      %2036 = vset.pattern.permute.xlu0 2
      %2037 = vperm.xlu0 %2036, %v688
      %v2038 = vpop.permute.xlu0 %2037
      %2039 = vset.pattern.permute.xlu0 2
      %2040 = vperm.xlu0 %2039, %v689
      %v2041 = vpop.permute.xlu0 %2040
      %2042 = vset.pattern.permute.xlu0 2
      %2043 = vperm.xlu0 %2042, %v690
      %v2044 = vpop.permute.xlu0 %2043
      %2045 = vset.pattern.permute.xlu0 2
      %2046 = vperm.xlu0 %2045, %v691
      %v2047 = vpop.permute.xlu0 %2046
      %2048 = vset.pattern.permute.xlu0 2
      %2049 = vperm.xlu0 %2048, %v692
      %v2050 = vpop.permute.xlu0 %2049
      %vm2051 = vcmp.eq.s32.totalorder %v694, %v2029
      %vm2052 = vcmp.eq.s32.totalorder %v694, %v2032
      %vm2053 = vcmp.eq.s32.totalorder %v694, %v2035
      %vm2054 = vcmp.eq.s32.totalorder %v694, %v2038
      %vm2055 = vcmp.eq.s32.totalorder %v694, %v2041
      %vm2056 = vcmp.eq.s32.totalorder %v694, %v2044
      %vm2057 = vcmp.eq.s32.totalorder %v694, %v2047
      %vm2058 = vcmp.eq.s32.totalorder %v694, %v2050
      %v2059 = vsel %vm2051, 1, 0
      %v2060 = vsel %vm2052, 1, 0
      %v2061 = vsel %vm2053, 1, 0
      %v2062 = vsel %vm2054, 1, 0
      %v2063 = vsel %vm2055, 1, 0
      %v2064 = vsel %vm2056, 1, 0
      %v2065 = vsel %vm2057, 1, 0
      %v2066 = vsel %vm2058, 1, 0
      %v2067 = vcvt.s32.f32 %v2059
      %v2068 = vcvt.s32.f32 %v2060
      %v2069 = vcvt.s32.f32 %v2061
      %v2070 = vcvt.s32.f32 %v2062
      %v2071 = vcvt.s32.f32 %v2063
      %v2072 = vcvt.s32.f32 %v2064
      %v2073 = vcvt.s32.f32 %v2065
      %v2074 = vcvt.s32.f32 %v2066
      %v2075 = vand.u32 %v684, 4294901760
      %2076 = vmatpush.msra.mxu0 %v2075
      %v2077 = vand.u32 %v683, 4294901760
      %2078 = vmatpush.msra.mxu0 %v2077
      %v2079 = vand.u32 %v682, 4294901760
      %2080 = vmatpush.msra.mxu0 %v2079
      %v2081 = vand.u32 %v681, 4294901760
      %2082 = vmatpush.msra.mxu0 %v2081
      %v2083 = vand.u32 %v680, 4294901760
      %2084 = vmatpush.msra.mxu0 %v2083
      %v2085 = vand.u32 %v679, 4294901760
      %2086 = vmatpush.msra.mxu0 %v2085
      %v2087 = vand.u32 %v678, 4294901760
      %2088 = vmatpush.msra.mxu0 %v2087
      %v2089 = vand.u32 %v677, 4294901760
      %2090 = vmatpush.msra.mxu0 %v2089
      %v2091 = vand.u32 %v676, 4294901760
      %2092 = vmatpush.msra.mxu0 %v2091
      %v2093 = vand.u32 %v675, 4294901760
      %2094 = vmatpush.msra.mxu0 %v2093
      %v2095 = vand.u32 %v674, 4294901760
      %2096 = vmatpush.msra.mxu0 %v2095
      %v2097 = vand.u32 %v673, 4294901760
      %2098 = vmatpush.msra.mxu0 %v2097
      %v2099 = vand.u32 %v672, 4294901760
      %2100 = vmatpush.msra.mxu0 %v2099
      %v2101 = vand.u32 %v671, 4294901760
      %2102 = vmatpush.msra.mxu0 %v2101
      %v2103 = vand.u32 %v670, 4294901760
      %2104 = vmatpush.msra.mxu0 %v2103
      %v2105 = vand.u32 %v669, 4294901760
      %2106 = vmatpush.msra.mxu0 %v2105
      %v2107 = vand.u32 %v2067, 4294901760
      %v2108 = vsub.f32 %v2067, %v2107
      %v2109 = vand.u32 %v2108, 4294901760
      %v2110 = vsub.f32 %v2108, %v2109
      %v2111 = vand.u32 %v2110, 4294901760
      %2112 = vmatmul.f32.gmra.mxu0 %v2111
      %v2113 = vpop.f32.mrf.mxu0
      %v2114 = vadd.f32 %v639, %v2113
      %v2115 = vand.u32 %v2068, 4294901760
      %v2116 = vsub.f32 %v2068, %v2115
      %v2117 = vand.u32 %v2116, 4294901760
      %v2118 = vsub.f32 %v2116, %v2117
      %v2119 = vand.u32 %v2118, 4294901760
      %2120 = vmatmul.f32.gmra.mxu0 %v2119
      %v2121 = vpop.f32.mrf.mxu0
      %v2122 = vadd.f32 %v643, %v2121
      %v2123 = vand.u32 %v2069, 4294901760
      %v2124 = vsub.f32 %v2069, %v2123
      %v2125 = vand.u32 %v2124, 4294901760
      %v2126 = vsub.f32 %v2124, %v2125
      %v2127 = vand.u32 %v2126, 4294901760
      %2128 = vmatmul.f32.gmra.mxu0 %v2127
      %v2129 = vpop.f32.mrf.mxu0
      %v2130 = vadd.f32 %v647, %v2129
      %v2131 = vand.u32 %v2070, 4294901760
      %v2132 = vsub.f32 %v2070, %v2131
      %v2133 = vand.u32 %v2132, 4294901760
      %v2134 = vsub.f32 %v2132, %v2133
      %v2135 = vand.u32 %v2134, 4294901760
      %2136 = vmatmul.f32.gmra.mxu0 %v2135
      %v2137 = vpop.f32.mrf.mxu0
      %v2138 = vadd.f32 %v651, %v2137
      %v2139 = vand.u32 %v2071, 4294901760
      %v2140 = vsub.f32 %v2071, %v2139
      %v2141 = vand.u32 %v2140, 4294901760
      %v2142 = vsub.f32 %v2140, %v2141
      %v2143 = vand.u32 %v2142, 4294901760
      %2144 = vmatmul.f32.gmra.mxu0 %v2143
      %v2145 = vpop.f32.mrf.mxu0
      %v2146 = vadd.f32 %v655, %v2145
      %v2147 = vand.u32 %v2072, 4294901760
      %v2148 = vsub.f32 %v2072, %v2147
      %v2149 = vand.u32 %v2148, 4294901760
      %v2150 = vsub.f32 %v2148, %v2149
      %v2151 = vand.u32 %v2150, 4294901760
      %2152 = vmatmul.f32.gmra.mxu0 %v2151
      %v2153 = vpop.f32.mrf.mxu0
      %v2154 = vadd.f32 %v659, %v2153
      %v2155 = vand.u32 %v2073, 4294901760
      %v2156 = vsub.f32 %v2073, %v2155
      %v2157 = vand.u32 %v2156, 4294901760
      %v2158 = vsub.f32 %v2156, %v2157
      %v2159 = vand.u32 %v2158, 4294901760
      %2160 = vmatmul.f32.gmra.mxu0 %v2159
      %v2161 = vpop.f32.mrf.mxu0
      %v2162 = vadd.f32 %v663, %v2161
      %v2163 = vand.u32 %v2074, 4294901760
      %v2164 = vsub.f32 %v2074, %v2163
      %v2165 = vand.u32 %v2164, 4294901760
      %v2166 = vsub.f32 %v2164, %v2165
      %v2167 = vand.u32 %v2166, 4294901760
      %2168 = vmatmul.f32.gmra.mxu0 %v2167
      %v2169 = vpop.f32.mrf.mxu0
      %v2170 = vadd.f32 %v667, %v2169
      %2171 = vdwg.mxu0
      %v2172 = vand.u32 %v684, 4294901760
      %v2173 = vsub.f32 %v684, %v2172
      %v2174 = vand.u32 %v2173, 4294901760
      %v2175 = vsub.f32 %v2173, %v2174
      %v2176 = vand.u32 %v2175, 4294901760
      %2177 = vmatpush.msra.mxu0 %v2176
      %v2178 = vand.u32 %v683, 4294901760
      %v2179 = vsub.f32 %v683, %v2178
      %v2180 = vand.u32 %v2179, 4294901760
      %v2181 = vsub.f32 %v2179, %v2180
      %v2182 = vand.u32 %v2181, 4294901760
      %2183 = vmatpush.msra.mxu0 %v2182
      %v2184 = vand.u32 %v682, 4294901760
      %v2185 = vsub.f32 %v682, %v2184
      %v2186 = vand.u32 %v2185, 4294901760
      %v2187 = vsub.f32 %v2185, %v2186
      %v2188 = vand.u32 %v2187, 4294901760
      %2189 = vmatpush.msra.mxu0 %v2188
      %v2190 = vand.u32 %v681, 4294901760
      %v2191 = vsub.f32 %v681, %v2190
      %v2192 = vand.u32 %v2191, 4294901760
      %v2193 = vsub.f32 %v2191, %v2192
      %v2194 = vand.u32 %v2193, 4294901760
      %2195 = vmatpush.msra.mxu0 %v2194
      %v2196 = vand.u32 %v680, 4294901760
      %v2197 = vsub.f32 %v680, %v2196
      %v2198 = vand.u32 %v2197, 4294901760
      %v2199 = vsub.f32 %v2197, %v2198
      %v2200 = vand.u32 %v2199, 4294901760
      %2201 = vmatpush.msra.mxu0 %v2200
      %v2202 = vand.u32 %v679, 4294901760
      %v2203 = vsub.f32 %v679, %v2202
      %v2204 = vand.u32 %v2203, 4294901760
      %v2205 = vsub.f32 %v2203, %v2204
      %v2206 = vand.u32 %v2205, 4294901760
      %2207 = vmatpush.msra.mxu0 %v2206
      %v2208 = vand.u32 %v678, 4294901760
      %v2209 = vsub.f32 %v678, %v2208
      %v2210 = vand.u32 %v2209, 4294901760
      %v2211 = vsub.f32 %v2209, %v2210
      %v2212 = vand.u32 %v2211, 4294901760
      %2213 = vmatpush.msra.mxu0 %v2212
      %v2214 = vand.u32 %v677, 4294901760
      %v2215 = vsub.f32 %v677, %v2214
      %v2216 = vand.u32 %v2215, 4294901760
      %v2217 = vsub.f32 %v2215, %v2216
      %v2218 = vand.u32 %v2217, 4294901760
      %2219 = vmatpush.msra.mxu0 %v2218
      %v2220 = vand.u32 %v676, 4294901760
      %v2221 = vsub.f32 %v676, %v2220
      %v2222 = vand.u32 %v2221, 4294901760
      %v2223 = vsub.f32 %v2221, %v2222
      %v2224 = vand.u32 %v2223, 4294901760
      %2225 = vmatpush.msra.mxu0 %v2224
      %v2226 = vand.u32 %v675, 4294901760
      %v2227 = vsub.f32 %v675, %v2226
      %v2228 = vand.u32 %v2227, 4294901760
      %v2229 = vsub.f32 %v2227, %v2228
      %v2230 = vand.u32 %v2229, 4294901760
      %2231 = vmatpush.msra.mxu0 %v2230
      %v2232 = vand.u32 %v674, 4294901760
      %v2233 = vsub.f32 %v674, %v2232
      %v2234 = vand.u32 %v2233, 4294901760
      %v2235 = vsub.f32 %v2233, %v2234
      %v2236 = vand.u32 %v2235, 4294901760
      %2237 = vmatpush.msra.mxu0 %v2236
      %v2238 = vand.u32 %v673, 4294901760
      %v2239 = vsub.f32 %v673, %v2238
      %v2240 = vand.u32 %v2239, 4294901760
      %v2241 = vsub.f32 %v2239, %v2240
      %v2242 = vand.u32 %v2241, 4294901760
      %2243 = vmatpush.msra.mxu0 %v2242
      %v2244 = vand.u32 %v672, 4294901760
      %v2245 = vsub.f32 %v672, %v2244
      %v2246 = vand.u32 %v2245, 4294901760
      %v2247 = vsub.f32 %v2245, %v2246
      %v2248 = vand.u32 %v2247, 4294901760
      %2249 = vmatpush.msra.mxu0 %v2248
      %v2250 = vand.u32 %v671, 4294901760
      %v2251 = vsub.f32 %v671, %v2250
      %v2252 = vand.u32 %v2251, 4294901760
      %v2253 = vsub.f32 %v2251, %v2252
      %v2254 = vand.u32 %v2253, 4294901760
      %2255 = vmatpush.msra.mxu0 %v2254
      %v2256 = vand.u32 %v670, 4294901760
      %v2257 = vsub.f32 %v670, %v2256
      %v2258 = vand.u32 %v2257, 4294901760
      %v2259 = vsub.f32 %v2257, %v2258
      %v2260 = vand.u32 %v2259, 4294901760
      %2261 = vmatpush.msra.mxu0 %v2260
      %v2262 = vand.u32 %v669, 4294901760
      %v2263 = vsub.f32 %v669, %v2262
      %v2264 = vand.u32 %v2263, 4294901760
      %v2265 = vsub.f32 %v2263, %v2264
      %v2266 = vand.u32 %v2265, 4294901760
      %2267 = vmatpush.msra.mxu0 %v2266
      %v2268 = vand.u32 %v2067, 4294901760
      %2269 = vmatmul.f32.gmra.mxu0 %v2268
      %v2270 = vpop.f32.mrf.mxu0
      %v2271 = vadd.f32 %v2114, %v2270
      %v2272 = vand.u32 %v2068, 4294901760
      %2273 = vmatmul.f32.gmra.mxu0 %v2272
      %v2274 = vpop.f32.mrf.mxu0
      %v2275 = vadd.f32 %v2122, %v2274
      %v2276 = vand.u32 %v2069, 4294901760
      %2277 = vmatmul.f32.gmra.mxu0 %v2276
      %v2278 = vpop.f32.mrf.mxu0
      %v2279 = vadd.f32 %v2130, %v2278
      %v2280 = vand.u32 %v2070, 4294901760
      %2281 = vmatmul.f32.gmra.mxu0 %v2280
      %v2282 = vpop.f32.mrf.mxu0
      %v2283 = vadd.f32 %v2138, %v2282
      %v2284 = vand.u32 %v2071, 4294901760
      %2285 = vmatmul.f32.gmra.mxu0 %v2284
      %v2286 = vpop.f32.mrf.mxu0
      %v2287 = vadd.f32 %v2146, %v2286
      %v2288 = vand.u32 %v2072, 4294901760
      %2289 = vmatmul.f32.gmra.mxu0 %v2288
      %v2290 = vpop.f32.mrf.mxu0
      %v2291 = vadd.f32 %v2154, %v2290
      %v2292 = vand.u32 %v2073, 4294901760
      %2293 = vmatmul.f32.gmra.mxu0 %v2292
      %v2294 = vpop.f32.mrf.mxu0
      %v2295 = vadd.f32 %v2162, %v2294
      %v2296 = vand.u32 %v2074, 4294901760
      %2297 = vmatmul.f32.gmra.mxu0 %v2296
      %v2298 = vpop.f32.mrf.mxu0
      %v2299 = vadd.f32 %v2170, %v2298
      %2300 = vdwg.mxu0
      %v2301 = vand.u32 %v684, 4294901760
      %v2302 = vsub.f32 %v684, %v2301
      %2303 = vmatpush.msra.mxu0 %v2302
      %v2304 = vand.u32 %v683, 4294901760
      %v2305 = vsub.f32 %v683, %v2304
      %2306 = vmatpush.msra.mxu0 %v2305
      %v2307 = vand.u32 %v682, 4294901760
      %v2308 = vsub.f32 %v682, %v2307
      %2309 = vmatpush.msra.mxu0 %v2308
      %v2310 = vand.u32 %v681, 4294901760
      %v2311 = vsub.f32 %v681, %v2310
      %2312 = vmatpush.msra.mxu0 %v2311
      %v2313 = vand.u32 %v680, 4294901760
      %v2314 = vsub.f32 %v680, %v2313
      %2315 = vmatpush.msra.mxu0 %v2314
      %v2316 = vand.u32 %v679, 4294901760
      %v2317 = vsub.f32 %v679, %v2316
      %2318 = vmatpush.msra.mxu0 %v2317
      %v2319 = vand.u32 %v678, 4294901760
      %v2320 = vsub.f32 %v678, %v2319
      %2321 = vmatpush.msra.mxu0 %v2320
      %v2322 = vand.u32 %v677, 4294901760
      %v2323 = vsub.f32 %v677, %v2322
      %2324 = vmatpush.msra.mxu0 %v2323
      %v2325 = vand.u32 %v676, 4294901760
      %v2326 = vsub.f32 %v676, %v2325
      %2327 = vmatpush.msra.mxu0 %v2326
      %v2328 = vand.u32 %v675, 4294901760
      %v2329 = vsub.f32 %v675, %v2328
      %2330 = vmatpush.msra.mxu0 %v2329
      %v2331 = vand.u32 %v674, 4294901760
      %v2332 = vsub.f32 %v674, %v2331
      %2333 = vmatpush.msra.mxu0 %v2332
      %v2334 = vand.u32 %v673, 4294901760
      %v2335 = vsub.f32 %v673, %v2334
      %2336 = vmatpush.msra.mxu0 %v2335
      %v2337 = vand.u32 %v672, 4294901760
      %v2338 = vsub.f32 %v672, %v2337
      %2339 = vmatpush.msra.mxu0 %v2338
      %v2340 = vand.u32 %v671, 4294901760
      %v2341 = vsub.f32 %v671, %v2340
      %2342 = vmatpush.msra.mxu0 %v2341
      %v2343 = vand.u32 %v670, 4294901760
      %v2344 = vsub.f32 %v670, %v2343
      %2345 = vmatpush.msra.mxu0 %v2344
      %v2346 = vand.u32 %v669, 4294901760
      %v2347 = vsub.f32 %v669, %v2346
      %2348 = vmatpush.msra.mxu0 %v2347
      %v2349 = vand.u32 %v2067, 4294901760
      %v2350 = vsub.f32 %v2067, %v2349
      %2351 = vmatmul.f32.gmra.mxu0 %v2350
      %v2352 = vpop.f32.mrf.mxu0
      %v2353 = vadd.f32 %v2271, %v2352
      %v2354 = vand.u32 %v2068, 4294901760
      %v2355 = vsub.f32 %v2068, %v2354
      %2356 = vmatmul.f32.gmra.mxu0 %v2355
      %v2357 = vpop.f32.mrf.mxu0
      %v2358 = vadd.f32 %v2275, %v2357
      %v2359 = vand.u32 %v2069, 4294901760
      %v2360 = vsub.f32 %v2069, %v2359
      %2361 = vmatmul.f32.gmra.mxu0 %v2360
      %v2362 = vpop.f32.mrf.mxu0
      %v2363 = vadd.f32 %v2279, %v2362
      %v2364 = vand.u32 %v2070, 4294901760
      %v2365 = vsub.f32 %v2070, %v2364
      %2366 = vmatmul.f32.gmra.mxu0 %v2365
      %v2367 = vpop.f32.mrf.mxu0
      %v2368 = vadd.f32 %v2283, %v2367
      %v2369 = vand.u32 %v2071, 4294901760
      %v2370 = vsub.f32 %v2071, %v2369
      %2371 = vmatmul.f32.gmra.mxu0 %v2370
      %v2372 = vpop.f32.mrf.mxu0
      %v2373 = vadd.f32 %v2287, %v2372
      %v2374 = vand.u32 %v2072, 4294901760
      %v2375 = vsub.f32 %v2072, %v2374
      %2376 = vmatmul.f32.gmra.mxu0 %v2375
      %v2377 = vpop.f32.mrf.mxu0
      %v2378 = vadd.f32 %v2291, %v2377
      %v2379 = vand.u32 %v2073, 4294901760
      %v2380 = vsub.f32 %v2073, %v2379
      %2381 = vmatmul.f32.gmra.mxu0 %v2380
      %v2382 = vpop.f32.mrf.mxu0
      %v2383 = vadd.f32 %v2295, %v2382
      %v2384 = vand.u32 %v2074, 4294901760
      %v2385 = vsub.f32 %v2074, %v2384
      %2386 = vmatmul.f32.gmra.mxu0 %v2385
      %v2387 = vpop.f32.mrf.mxu0
      %v2388 = vadd.f32 %v2299, %v2387
      %2389 = vdwg.mxu0
      %v2390 = vand.u32 %v684, 4294901760
      %2391 = vmatpush.msra.mxu0 %v2390
      %v2392 = vand.u32 %v683, 4294901760
      %2393 = vmatpush.msra.mxu0 %v2392
      %v2394 = vand.u32 %v682, 4294901760
      %2395 = vmatpush.msra.mxu0 %v2394
      %v2396 = vand.u32 %v681, 4294901760
      %2397 = vmatpush.msra.mxu0 %v2396
      %v2398 = vand.u32 %v680, 4294901760
      %2399 = vmatpush.msra.mxu0 %v2398
      %v2400 = vand.u32 %v679, 4294901760
      %2401 = vmatpush.msra.mxu0 %v2400
      %v2402 = vand.u32 %v678, 4294901760
      %2403 = vmatpush.msra.mxu0 %v2402
      %v2404 = vand.u32 %v677, 4294901760
      %2405 = vmatpush.msra.mxu0 %v2404
      %v2406 = vand.u32 %v676, 4294901760
      %2407 = vmatpush.msra.mxu0 %v2406
      %v2408 = vand.u32 %v675, 4294901760
      %2409 = vmatpush.msra.mxu0 %v2408
      %v2410 = vand.u32 %v674, 4294901760
      %2411 = vmatpush.msra.mxu0 %v2410
      %v2412 = vand.u32 %v673, 4294901760
      %2413 = vmatpush.msra.mxu0 %v2412
      %v2414 = vand.u32 %v672, 4294901760
      %2415 = vmatpush.msra.mxu0 %v2414
      %v2416 = vand.u32 %v671, 4294901760
      %2417 = vmatpush.msra.mxu0 %v2416
      %v2418 = vand.u32 %v670, 4294901760
      %2419 = vmatpush.msra.mxu0 %v2418
      %v2420 = vand.u32 %v669, 4294901760
      %2421 = vmatpush.msra.mxu0 %v2420
      %v2422 = vand.u32 %v2067, 4294901760
      %v2423 = vsub.f32 %v2067, %v2422
      %v2424 = vand.u32 %v2423, 4294901760
      %2425 = vmatmul.f32.gmra.mxu0 %v2424
      %v2426 = vpop.f32.mrf.mxu0
      %v2427 = vadd.f32 %v2353, %v2426
      %v2428 = vand.u32 %v2068, 4294901760
      %v2429 = vsub.f32 %v2068, %v2428
      %v2430 = vand.u32 %v2429, 4294901760
      %2431 = vmatmul.f32.gmra.mxu0 %v2430
      %v2432 = vpop.f32.mrf.mxu0
      %v2433 = vadd.f32 %v2358, %v2432
      %v2434 = vand.u32 %v2069, 4294901760
      %v2435 = vsub.f32 %v2069, %v2434
      %v2436 = vand.u32 %v2435, 4294901760
      %2437 = vmatmul.f32.gmra.mxu0 %v2436
      %v2438 = vpop.f32.mrf.mxu0
      %v2439 = vadd.f32 %v2363, %v2438
      %v2440 = vand.u32 %v2070, 4294901760
      %v2441 = vsub.f32 %v2070, %v2440
      %v2442 = vand.u32 %v2441, 4294901760
      %2443 = vmatmul.f32.gmra.mxu0 %v2442
      %v2444 = vpop.f32.mrf.mxu0
      %v2445 = vadd.f32 %v2368, %v2444
      %v2446 = vand.u32 %v2071, 4294901760
      %v2447 = vsub.f32 %v2071, %v2446
      %v2448 = vand.u32 %v2447, 4294901760
      %2449 = vmatmul.f32.gmra.mxu0 %v2448
      %v2450 = vpop.f32.mrf.mxu0
      %v2451 = vadd.f32 %v2373, %v2450
      %v2452 = vand.u32 %v2072, 4294901760
      %v2453 = vsub.f32 %v2072, %v2452
      %v2454 = vand.u32 %v2453, 4294901760
      %2455 = vmatmul.f32.gmra.mxu0 %v2454
      %v2456 = vpop.f32.mrf.mxu0
      %v2457 = vadd.f32 %v2378, %v2456
      %v2458 = vand.u32 %v2073, 4294901760
      %v2459 = vsub.f32 %v2073, %v2458
      %v2460 = vand.u32 %v2459, 4294901760
      %2461 = vmatmul.f32.gmra.mxu0 %v2460
      %v2462 = vpop.f32.mrf.mxu0
      %v2463 = vadd.f32 %v2383, %v2462
      %v2464 = vand.u32 %v2074, 4294901760
      %v2465 = vsub.f32 %v2074, %v2464
      %v2466 = vand.u32 %v2465, 4294901760
      %2467 = vmatmul.f32.gmra.mxu0 %v2466
      %v2468 = vpop.f32.mrf.mxu0
      %v2469 = vadd.f32 %v2388, %v2468
      %2470 = vdwg.mxu0
      %v2471 = vand.u32 %v684, 4294901760
      %v2472 = vsub.f32 %v684, %v2471
      %v2473 = vand.u32 %v2472, 4294901760
      %2474 = vmatpush.msra.mxu0 %v2473
      %v2475 = vand.u32 %v683, 4294901760
      %v2476 = vsub.f32 %v683, %v2475
      %v2477 = vand.u32 %v2476, 4294901760
      %2478 = vmatpush.msra.mxu0 %v2477
      %v2479 = vand.u32 %v682, 4294901760
      %v2480 = vsub.f32 %v682, %v2479
      %v2481 = vand.u32 %v2480, 4294901760
      %2482 = vmatpush.msra.mxu0 %v2481
      %v2483 = vand.u32 %v681, 4294901760
      %v2484 = vsub.f32 %v681, %v2483
      %v2485 = vand.u32 %v2484, 4294901760
      %2486 = vmatpush.msra.mxu0 %v2485
      %v2487 = vand.u32 %v680, 4294901760
      %v2488 = vsub.f32 %v680, %v2487
      %v2489 = vand.u32 %v2488, 4294901760
      %2490 = vmatpush.msra.mxu0 %v2489
      %v2491 = vand.u32 %v679, 4294901760
      %v2492 = vsub.f32 %v679, %v2491
      %v2493 = vand.u32 %v2492, 4294901760
      %2494 = vmatpush.msra.mxu0 %v2493
      %v2495 = vand.u32 %v678, 4294901760
      %v2496 = vsub.f32 %v678, %v2495
      %v2497 = vand.u32 %v2496, 4294901760
      %2498 = vmatpush.msra.mxu0 %v2497
      %v2499 = vand.u32 %v677, 4294901760
      %v2500 = vsub.f32 %v677, %v2499
      %v2501 = vand.u32 %v2500, 4294901760
      %2502 = vmatpush.msra.mxu0 %v2501
      %v2503 = vand.u32 %v676, 4294901760
      %v2504 = vsub.f32 %v676, %v2503
      %v2505 = vand.u32 %v2504, 4294901760
      %2506 = vmatpush.msra.mxu0 %v2505
      %v2507 = vand.u32 %v675, 4294901760
      %v2508 = vsub.f32 %v675, %v2507
      %v2509 = vand.u32 %v2508, 4294901760
      %2510 = vmatpush.msra.mxu0 %v2509
      %v2511 = vand.u32 %v674, 4294901760
      %v2512 = vsub.f32 %v674, %v2511
      %v2513 = vand.u32 %v2512, 4294901760
      %2514 = vmatpush.msra.mxu0 %v2513
      %v2515 = vand.u32 %v673, 4294901760
      %v2516 = vsub.f32 %v673, %v2515
      %v2517 = vand.u32 %v2516, 4294901760
      %2518 = vmatpush.msra.mxu0 %v2517
      %v2519 = vand.u32 %v672, 4294901760
      %v2520 = vsub.f32 %v672, %v2519
      %v2521 = vand.u32 %v2520, 4294901760
      %2522 = vmatpush.msra.mxu0 %v2521
      %v2523 = vand.u32 %v671, 4294901760
      %v2524 = vsub.f32 %v671, %v2523
      %v2525 = vand.u32 %v2524, 4294901760
      %2526 = vmatpush.msra.mxu0 %v2525
      %v2527 = vand.u32 %v670, 4294901760
      %v2528 = vsub.f32 %v670, %v2527
      %v2529 = vand.u32 %v2528, 4294901760
      %2530 = vmatpush.msra.mxu0 %v2529
      %v2531 = vand.u32 %v669, 4294901760
      %v2532 = vsub.f32 %v669, %v2531
      %v2533 = vand.u32 %v2532, 4294901760
      %2534 = vmatpush.msra.mxu0 %v2533
      %v2535 = vand.u32 %v2067, 4294901760
      %2536 = vmatmul.f32.gmra.mxu0 %v2535
      %v2537 = vpop.f32.mrf.mxu0
      %v2538 = vadd.f32 %v2427, %v2537
      %v2539 = vand.u32 %v2068, 4294901760
      %2540 = vmatmul.f32.gmra.mxu0 %v2539
      %v2541 = vpop.f32.mrf.mxu0
      %v2542 = vadd.f32 %v2433, %v2541
      %v2543 = vand.u32 %v2069, 4294901760
      %2544 = vmatmul.f32.gmra.mxu0 %v2543
      %v2545 = vpop.f32.mrf.mxu0
      %v2546 = vadd.f32 %v2439, %v2545
      %v2547 = vand.u32 %v2070, 4294901760
      %2548 = vmatmul.f32.gmra.mxu0 %v2547
      %v2549 = vpop.f32.mrf.mxu0
      %v2550 = vadd.f32 %v2445, %v2549
      %v2551 = vand.u32 %v2071, 4294901760
      %2552 = vmatmul.f32.gmra.mxu0 %v2551
      %v2553 = vpop.f32.mrf.mxu0
      %v2554 = vadd.f32 %v2451, %v2553
      %v2555 = vand.u32 %v2072, 4294901760
      %2556 = vmatmul.f32.gmra.mxu0 %v2555
      %v2557 = vpop.f32.mrf.mxu0
      %v2558 = vadd.f32 %v2457, %v2557
      %v2559 = vand.u32 %v2073, 4294901760
      %2560 = vmatmul.f32.gmra.mxu0 %v2559
      %v2561 = vpop.f32.mrf.mxu0
      %v2562 = vadd.f32 %v2463, %v2561
      %v2563 = vand.u32 %v2074, 4294901760
      %2564 = vmatmul.f32.gmra.mxu0 %v2563
      %v2565 = vpop.f32.mrf.mxu0
      %v2566 = vadd.f32 %v2469, %v2565
      %2567 = vdwg.mxu0
      %v2568 = vand.u32 %v684, 4294901760
      %2569 = vmatpush.msra.mxu0 %v2568
      %v2570 = vand.u32 %v683, 4294901760
      %2571 = vmatpush.msra.mxu0 %v2570
      %v2572 = vand.u32 %v682, 4294901760
      %2573 = vmatpush.msra.mxu0 %v2572
      %v2574 = vand.u32 %v681, 4294901760
      %2575 = vmatpush.msra.mxu0 %v2574
      %v2576 = vand.u32 %v680, 4294901760
      %2577 = vmatpush.msra.mxu0 %v2576
      %v2578 = vand.u32 %v679, 4294901760
      %2579 = vmatpush.msra.mxu0 %v2578
      %v2580 = vand.u32 %v678, 4294901760
      %2581 = vmatpush.msra.mxu0 %v2580
      %v2582 = vand.u32 %v677, 4294901760
      %2583 = vmatpush.msra.mxu0 %v2582
      %v2584 = vand.u32 %v676, 4294901760
      %2585 = vmatpush.msra.mxu0 %v2584
      %v2586 = vand.u32 %v675, 4294901760
      %2587 = vmatpush.msra.mxu0 %v2586
      %v2588 = vand.u32 %v674, 4294901760
      %2589 = vmatpush.msra.mxu0 %v2588
      %v2590 = vand.u32 %v673, 4294901760
      %2591 = vmatpush.msra.mxu0 %v2590
      %v2592 = vand.u32 %v672, 4294901760
      %2593 = vmatpush.msra.mxu0 %v2592
      %v2594 = vand.u32 %v671, 4294901760
      %2595 = vmatpush.msra.mxu0 %v2594
      %v2596 = vand.u32 %v670, 4294901760
      %2597 = vmatpush.msra.mxu0 %v2596
      %v2598 = vand.u32 %v669, 4294901760
      %2599 = vmatpush.msra.mxu0 %v2598
      %v2600 = vand.u32 %v2067, 4294901760
      %2601 = vmatmul.f32.gmra.mxu0 %v2600
      %v2602 = vpop.f32.mrf.mxu0
      %v2603 = vadd.f32 %v2538, %v2602
      %v2604 = vand.u32 %v2068, 4294901760
      %2605 = vmatmul.f32.gmra.mxu0 %v2604
      %v2606 = vpop.f32.mrf.mxu0
      %v2607 = vadd.f32 %v2542, %v2606
      %v2608 = vand.u32 %v2069, 4294901760
      %2609 = vmatmul.f32.gmra.mxu0 %v2608
      %v2610 = vpop.f32.mrf.mxu0
      %v2611 = vadd.f32 %v2546, %v2610
      %v2612 = vand.u32 %v2070, 4294901760
      %2613 = vmatmul.f32.gmra.mxu0 %v2612
      %v2614 = vpop.f32.mrf.mxu0
      %v2615 = vadd.f32 %v2550, %v2614
      %v2616 = vand.u32 %v2071, 4294901760
      %2617 = vmatmul.f32.gmra.mxu0 %v2616
      %v2618 = vpop.f32.mrf.mxu0
      %v2619 = vadd.f32 %v2554, %v2618
      %v2620 = vand.u32 %v2072, 4294901760
      %2621 = vmatmul.f32.gmra.mxu0 %v2620
      %v2622 = vpop.f32.mrf.mxu0
      %v2623 = vadd.f32 %v2558, %v2622
      %v2624 = vand.u32 %v2073, 4294901760
      %2625 = vmatmul.f32.gmra.mxu0 %v2624
      %v2626 = vpop.f32.mrf.mxu0
      %v2627 = vadd.f32 %v2562, %v2626
      %v2628 = vand.u32 %v2074, 4294901760
      %2629 = vmatmul.f32.gmra.mxu0 %v2628
      %v2630 = vpop.f32.mrf.mxu0
      %v2631 = vadd.f32 %v2566, %v2630
      %2632 = vdwg.mxu0
      %2633 = vset.pattern.permute.xlu0 2
      %2634 = vperm.xlu0 %2633, %v759
      %v2635 = vpop.permute.xlu0 %2634
      %2637 = vset.pattern.permute.xlu0 2
      %2638 = vperm.xlu0 %2637, %v760
      %v2639 = vpop.permute.xlu0 %2638
      %2641 = vset.pattern.permute.xlu0 2
      %2642 = vperm.xlu0 %2641, %v761
      %v2643 = vpop.permute.xlu0 %2642
      %2645 = vset.pattern.permute.xlu0 2
      %2646 = vperm.xlu0 %2645, %v762
      %v2647 = vpop.permute.xlu0 %2646
      %2649 = vset.pattern.permute.xlu0 2
      %2650 = vperm.xlu0 %2649, %v763
      %v2651 = vpop.permute.xlu0 %2650
      %2653 = vset.pattern.permute.xlu0 2
      %2654 = vperm.xlu0 %2653, %v764
      %v2655 = vpop.permute.xlu0 %2654
      %2657 = vset.pattern.permute.xlu0 2
      %2658 = vperm.xlu0 %2657, %v765
      %v2659 = vpop.permute.xlu0 %2658
      %2661 = vset.pattern.permute.xlu0 2
      %2662 = vperm.xlu0 %2661, %v766
      %v2663 = vpop.permute.xlu0 %2662
      %v2665 = vmul.f32 %v2603, %v2635
      %v2666 = vmul.f32 %v2607, %v2639
      %v2667 = vmul.f32 %v2611, %v2643
      %v2668 = vmul.f32 %v2615, %v2647
      %v2669 = vmul.f32 %v2619, %v2651
      %v2670 = vmul.f32 %v2623, %v2655
      %v2671 = vmul.f32 %v2627, %v2659
      %v2672 = vmul.f32 %v2631, %v2663
      %v2673 = vmax.f32 %v2019, %v2665
      %v2674 = vmax.f32 %v2020, %v2666
      %v2675 = vmax.f32 %v2021, %v2667
      %v2676 = vmax.f32 %v2022, %v2668
      %v2677 = vmax.f32 %v2023, %v2669
      %v2678 = vmax.f32 %v2024, %v2670
      %v2679 = vmax.f32 %v2025, %v2671
      %v2680 = vmax.f32 %v2026, %v2672
      %2681 = vset.pattern.permute.xlu0 3
      %2682 = vperm.xlu0 %2681, %v685
      %v2683 = vpop.permute.xlu0 %2682
      %2684 = vset.pattern.permute.xlu0 3
      %2685 = vperm.xlu0 %2684, %v686
      %v2686 = vpop.permute.xlu0 %2685
      %2687 = vset.pattern.permute.xlu0 3
      %2688 = vperm.xlu0 %2687, %v687
      %v2689 = vpop.permute.xlu0 %2688
      %2690 = vset.pattern.permute.xlu0 3
      %2691 = vperm.xlu0 %2690, %v688
      %v2692 = vpop.permute.xlu0 %2691
      %2693 = vset.pattern.permute.xlu0 3
      %2694 = vperm.xlu0 %2693, %v689
      %v2695 = vpop.permute.xlu0 %2694
      %2696 = vset.pattern.permute.xlu0 3
      %2697 = vperm.xlu0 %2696, %v690
      %v2698 = vpop.permute.xlu0 %2697
      %2699 = vset.pattern.permute.xlu0 3
      %2700 = vperm.xlu0 %2699, %v691
      %v2701 = vpop.permute.xlu0 %2700
      %2702 = vset.pattern.permute.xlu0 3
      %2703 = vperm.xlu0 %2702, %v692
      %v2704 = vpop.permute.xlu0 %2703
      %vm2705 = vcmp.eq.s32.totalorder %v694, %v2683
      %vm2706 = vcmp.eq.s32.totalorder %v694, %v2686
      %vm2707 = vcmp.eq.s32.totalorder %v694, %v2689
      %vm2708 = vcmp.eq.s32.totalorder %v694, %v2692
      %vm2709 = vcmp.eq.s32.totalorder %v694, %v2695
      %vm2710 = vcmp.eq.s32.totalorder %v694, %v2698
      %vm2711 = vcmp.eq.s32.totalorder %v694, %v2701
      %vm2712 = vcmp.eq.s32.totalorder %v694, %v2704
      %v2713 = vsel %vm2705, 1, 0
      %v2714 = vsel %vm2706, 1, 0
      %v2715 = vsel %vm2707, 1, 0
      %v2716 = vsel %vm2708, 1, 0
      %v2717 = vsel %vm2709, 1, 0
      %v2718 = vsel %vm2710, 1, 0
      %v2719 = vsel %vm2711, 1, 0
      %v2720 = vsel %vm2712, 1, 0
      %v2721 = vcvt.s32.f32 %v2713
      %v2722 = vcvt.s32.f32 %v2714
      %v2723 = vcvt.s32.f32 %v2715
      %v2724 = vcvt.s32.f32 %v2716
      %v2725 = vcvt.s32.f32 %v2717
      %v2726 = vcvt.s32.f32 %v2718
      %v2727 = vcvt.s32.f32 %v2719
      %v2728 = vcvt.s32.f32 %v2720
      %v2729 = vand.u32 %v684, 4294901760
      %2730 = vmatpush.msra.mxu0 %v2729
      %v2731 = vand.u32 %v683, 4294901760
      %2732 = vmatpush.msra.mxu0 %v2731
      %v2733 = vand.u32 %v682, 4294901760
      %2734 = vmatpush.msra.mxu0 %v2733
      %v2735 = vand.u32 %v681, 4294901760
      %2736 = vmatpush.msra.mxu0 %v2735
      %v2737 = vand.u32 %v680, 4294901760
      %2738 = vmatpush.msra.mxu0 %v2737
      %v2739 = vand.u32 %v679, 4294901760
      %2740 = vmatpush.msra.mxu0 %v2739
      %v2741 = vand.u32 %v678, 4294901760
      %2742 = vmatpush.msra.mxu0 %v2741
      %v2743 = vand.u32 %v677, 4294901760
      %2744 = vmatpush.msra.mxu0 %v2743
      %v2745 = vand.u32 %v676, 4294901760
      %2746 = vmatpush.msra.mxu0 %v2745
      %v2747 = vand.u32 %v675, 4294901760
      %2748 = vmatpush.msra.mxu0 %v2747
      %v2749 = vand.u32 %v674, 4294901760
      %2750 = vmatpush.msra.mxu0 %v2749
      %v2751 = vand.u32 %v673, 4294901760
      %2752 = vmatpush.msra.mxu0 %v2751
      %v2753 = vand.u32 %v672, 4294901760
      %2754 = vmatpush.msra.mxu0 %v2753
      %v2755 = vand.u32 %v671, 4294901760
      %2756 = vmatpush.msra.mxu0 %v2755
      %v2757 = vand.u32 %v670, 4294901760
      %2758 = vmatpush.msra.mxu0 %v2757
      %v2759 = vand.u32 %v669, 4294901760
      %2760 = vmatpush.msra.mxu0 %v2759
      %v2761 = vand.u32 %v2721, 4294901760
      %v2762 = vsub.f32 %v2721, %v2761
      %v2763 = vand.u32 %v2762, 4294901760
      %v2764 = vsub.f32 %v2762, %v2763
      %v2765 = vand.u32 %v2764, 4294901760
      %2766 = vmatmul.f32.gmra.mxu0 %v2765
      %v2767 = vpop.f32.mrf.mxu0
      %v2768 = vadd.f32 %v639, %v2767
      %v2769 = vand.u32 %v2722, 4294901760
      %v2770 = vsub.f32 %v2722, %v2769
      %v2771 = vand.u32 %v2770, 4294901760
      %v2772 = vsub.f32 %v2770, %v2771
      %v2773 = vand.u32 %v2772, 4294901760
      %2774 = vmatmul.f32.gmra.mxu0 %v2773
      %v2775 = vpop.f32.mrf.mxu0
      %v2776 = vadd.f32 %v643, %v2775
      %v2777 = vand.u32 %v2723, 4294901760
      %v2778 = vsub.f32 %v2723, %v2777
      %v2779 = vand.u32 %v2778, 4294901760
      %v2780 = vsub.f32 %v2778, %v2779
      %v2781 = vand.u32 %v2780, 4294901760
      %2782 = vmatmul.f32.gmra.mxu0 %v2781
      %v2783 = vpop.f32.mrf.mxu0
      %v2784 = vadd.f32 %v647, %v2783
      %v2785 = vand.u32 %v2724, 4294901760
      %v2786 = vsub.f32 %v2724, %v2785
      %v2787 = vand.u32 %v2786, 4294901760
      %v2788 = vsub.f32 %v2786, %v2787
      %v2789 = vand.u32 %v2788, 4294901760
      %2790 = vmatmul.f32.gmra.mxu0 %v2789
      %v2791 = vpop.f32.mrf.mxu0
      %v2792 = vadd.f32 %v651, %v2791
      %v2793 = vand.u32 %v2725, 4294901760
      %v2794 = vsub.f32 %v2725, %v2793
      %v2795 = vand.u32 %v2794, 4294901760
      %v2796 = vsub.f32 %v2794, %v2795
      %v2797 = vand.u32 %v2796, 4294901760
      %2798 = vmatmul.f32.gmra.mxu0 %v2797
      %v2799 = vpop.f32.mrf.mxu0
      %v2800 = vadd.f32 %v655, %v2799
      %v2801 = vand.u32 %v2726, 4294901760
      %v2802 = vsub.f32 %v2726, %v2801
      %v2803 = vand.u32 %v2802, 4294901760
      %v2804 = vsub.f32 %v2802, %v2803
      %v2805 = vand.u32 %v2804, 4294901760
      %2806 = vmatmul.f32.gmra.mxu0 %v2805
      %v2807 = vpop.f32.mrf.mxu0
      %v2808 = vadd.f32 %v659, %v2807
      %v2809 = vand.u32 %v2727, 4294901760
      %v2810 = vsub.f32 %v2727, %v2809
      %v2811 = vand.u32 %v2810, 4294901760
      %v2812 = vsub.f32 %v2810, %v2811
      %v2813 = vand.u32 %v2812, 4294901760
      %2814 = vmatmul.f32.gmra.mxu0 %v2813
      %v2815 = vpop.f32.mrf.mxu0
      %v2816 = vadd.f32 %v663, %v2815
      %v2817 = vand.u32 %v2728, 4294901760
      %v2818 = vsub.f32 %v2728, %v2817
      %v2819 = vand.u32 %v2818, 4294901760
      %v2820 = vsub.f32 %v2818, %v2819
      %v2821 = vand.u32 %v2820, 4294901760
      %2822 = vmatmul.f32.gmra.mxu0 %v2821
      %v2823 = vpop.f32.mrf.mxu0
      %v2824 = vadd.f32 %v667, %v2823
      %2825 = vdwg.mxu0
      %v2826 = vand.u32 %v684, 4294901760
      %v2827 = vsub.f32 %v684, %v2826
      %v2828 = vand.u32 %v2827, 4294901760
      %v2829 = vsub.f32 %v2827, %v2828
      %v2830 = vand.u32 %v2829, 4294901760
      %2831 = vmatpush.msra.mxu0 %v2830
      %v2832 = vand.u32 %v683, 4294901760
      %v2833 = vsub.f32 %v683, %v2832
      %v2834 = vand.u32 %v2833, 4294901760
      %v2835 = vsub.f32 %v2833, %v2834
      %v2836 = vand.u32 %v2835, 4294901760
      %2837 = vmatpush.msra.mxu0 %v2836
      %v2838 = vand.u32 %v682, 4294901760
      %v2839 = vsub.f32 %v682, %v2838
      %v2840 = vand.u32 %v2839, 4294901760
      %v2841 = vsub.f32 %v2839, %v2840
      %v2842 = vand.u32 %v2841, 4294901760
      %2843 = vmatpush.msra.mxu0 %v2842
      %v2844 = vand.u32 %v681, 4294901760
      %v2845 = vsub.f32 %v681, %v2844
      %v2846 = vand.u32 %v2845, 4294901760
      %v2847 = vsub.f32 %v2845, %v2846
      %v2848 = vand.u32 %v2847, 4294901760
      %2849 = vmatpush.msra.mxu0 %v2848
      %v2850 = vand.u32 %v680, 4294901760
      %v2851 = vsub.f32 %v680, %v2850
      %v2852 = vand.u32 %v2851, 4294901760
      %v2853 = vsub.f32 %v2851, %v2852
      %v2854 = vand.u32 %v2853, 4294901760
      %2855 = vmatpush.msra.mxu0 %v2854
      %v2856 = vand.u32 %v679, 4294901760
      %v2857 = vsub.f32 %v679, %v2856
      %v2858 = vand.u32 %v2857, 4294901760
      %v2859 = vsub.f32 %v2857, %v2858
      %v2860 = vand.u32 %v2859, 4294901760
      %2861 = vmatpush.msra.mxu0 %v2860
      %v2862 = vand.u32 %v678, 4294901760
      %v2863 = vsub.f32 %v678, %v2862
      %v2864 = vand.u32 %v2863, 4294901760
      %v2865 = vsub.f32 %v2863, %v2864
      %v2866 = vand.u32 %v2865, 4294901760
      %2867 = vmatpush.msra.mxu0 %v2866
      %v2868 = vand.u32 %v677, 4294901760
      %v2869 = vsub.f32 %v677, %v2868
      %v2870 = vand.u32 %v2869, 4294901760
      %v2871 = vsub.f32 %v2869, %v2870
      %v2872 = vand.u32 %v2871, 4294901760
      %2873 = vmatpush.msra.mxu0 %v2872
      %v2874 = vand.u32 %v676, 4294901760
      %v2875 = vsub.f32 %v676, %v2874
      %v2876 = vand.u32 %v2875, 4294901760
      %v2877 = vsub.f32 %v2875, %v2876
      %v2878 = vand.u32 %v2877, 4294901760
      %2879 = vmatpush.msra.mxu0 %v2878
      %v2880 = vand.u32 %v675, 4294901760
      %v2881 = vsub.f32 %v675, %v2880
      %v2882 = vand.u32 %v2881, 4294901760
      %v2883 = vsub.f32 %v2881, %v2882
      %v2884 = vand.u32 %v2883, 4294901760
      %2885 = vmatpush.msra.mxu0 %v2884
      %v2886 = vand.u32 %v674, 4294901760
      %v2887 = vsub.f32 %v674, %v2886
      %v2888 = vand.u32 %v2887, 4294901760
      %v2889 = vsub.f32 %v2887, %v2888
      %v2890 = vand.u32 %v2889, 4294901760
      %2891 = vmatpush.msra.mxu0 %v2890
      %v2892 = vand.u32 %v673, 4294901760
      %v2893 = vsub.f32 %v673, %v2892
      %v2894 = vand.u32 %v2893, 4294901760
      %v2895 = vsub.f32 %v2893, %v2894
      %v2896 = vand.u32 %v2895, 4294901760
      %2897 = vmatpush.msra.mxu0 %v2896
      %v2898 = vand.u32 %v672, 4294901760
      %v2899 = vsub.f32 %v672, %v2898
      %v2900 = vand.u32 %v2899, 4294901760
      %v2901 = vsub.f32 %v2899, %v2900
      %v2902 = vand.u32 %v2901, 4294901760
      %2903 = vmatpush.msra.mxu0 %v2902
      %v2904 = vand.u32 %v671, 4294901760
      %v2905 = vsub.f32 %v671, %v2904
      %v2906 = vand.u32 %v2905, 4294901760
      %v2907 = vsub.f32 %v2905, %v2906
      %v2908 = vand.u32 %v2907, 4294901760
      %2909 = vmatpush.msra.mxu0 %v2908
      %v2910 = vand.u32 %v670, 4294901760
      %v2911 = vsub.f32 %v670, %v2910
      %v2912 = vand.u32 %v2911, 4294901760
      %v2913 = vsub.f32 %v2911, %v2912
      %v2914 = vand.u32 %v2913, 4294901760
      %2915 = vmatpush.msra.mxu0 %v2914
      %v2916 = vand.u32 %v669, 4294901760
      %v2917 = vsub.f32 %v669, %v2916
      %v2918 = vand.u32 %v2917, 4294901760
      %v2919 = vsub.f32 %v2917, %v2918
      %v2920 = vand.u32 %v2919, 4294901760
      %2921 = vmatpush.msra.mxu0 %v2920
      %v2922 = vand.u32 %v2721, 4294901760
      %2923 = vmatmul.f32.gmra.mxu0 %v2922
      %v2924 = vpop.f32.mrf.mxu0
      %v2925 = vadd.f32 %v2768, %v2924
      %v2926 = vand.u32 %v2722, 4294901760
      %2927 = vmatmul.f32.gmra.mxu0 %v2926
      %v2928 = vpop.f32.mrf.mxu0
      %v2929 = vadd.f32 %v2776, %v2928
      %v2930 = vand.u32 %v2723, 4294901760
      %2931 = vmatmul.f32.gmra.mxu0 %v2930
      %v2932 = vpop.f32.mrf.mxu0
      %v2933 = vadd.f32 %v2784, %v2932
      %v2934 = vand.u32 %v2724, 4294901760
      %2935 = vmatmul.f32.gmra.mxu0 %v2934
      %v2936 = vpop.f32.mrf.mxu0
      %v2937 = vadd.f32 %v2792, %v2936
      %v2938 = vand.u32 %v2725, 4294901760
      %2939 = vmatmul.f32.gmra.mxu0 %v2938
      %v2940 = vpop.f32.mrf.mxu0
      %v2941 = vadd.f32 %v2800, %v2940
      %v2942 = vand.u32 %v2726, 4294901760
      %2943 = vmatmul.f32.gmra.mxu0 %v2942
      %v2944 = vpop.f32.mrf.mxu0
      %v2945 = vadd.f32 %v2808, %v2944
      %v2946 = vand.u32 %v2727, 4294901760
      %2947 = vmatmul.f32.gmra.mxu0 %v2946
      %v2948 = vpop.f32.mrf.mxu0
      %v2949 = vadd.f32 %v2816, %v2948
      %v2950 = vand.u32 %v2728, 4294901760
      %2951 = vmatmul.f32.gmra.mxu0 %v2950
      %v2952 = vpop.f32.mrf.mxu0
      %v2953 = vadd.f32 %v2824, %v2952
      %2954 = vdwg.mxu0
      %v2955 = vand.u32 %v684, 4294901760
      %v2956 = vsub.f32 %v684, %v2955
      %2957 = vmatpush.msra.mxu0 %v2956
      %v2958 = vand.u32 %v683, 4294901760
      %v2959 = vsub.f32 %v683, %v2958
      %2960 = vmatpush.msra.mxu0 %v2959
      %v2961 = vand.u32 %v682, 4294901760
      %v2962 = vsub.f32 %v682, %v2961
      %2963 = vmatpush.msra.mxu0 %v2962
      %v2964 = vand.u32 %v681, 4294901760
      %v2965 = vsub.f32 %v681, %v2964
      %2966 = vmatpush.msra.mxu0 %v2965
      %v2967 = vand.u32 %v680, 4294901760
      %v2968 = vsub.f32 %v680, %v2967
      %2969 = vmatpush.msra.mxu0 %v2968
      %v2970 = vand.u32 %v679, 4294901760
      %v2971 = vsub.f32 %v679, %v2970
      %2972 = vmatpush.msra.mxu0 %v2971
      %v2973 = vand.u32 %v678, 4294901760
      %v2974 = vsub.f32 %v678, %v2973
      %2975 = vmatpush.msra.mxu0 %v2974
      %v2976 = vand.u32 %v677, 4294901760
      %v2977 = vsub.f32 %v677, %v2976
      %2978 = vmatpush.msra.mxu0 %v2977
      %v2979 = vand.u32 %v676, 4294901760
      %v2980 = vsub.f32 %v676, %v2979
      %2981 = vmatpush.msra.mxu0 %v2980
      %v2982 = vand.u32 %v675, 4294901760
      %v2983 = vsub.f32 %v675, %v2982
      %2984 = vmatpush.msra.mxu0 %v2983
      %v2985 = vand.u32 %v674, 4294901760
      %v2986 = vsub.f32 %v674, %v2985
      %2987 = vmatpush.msra.mxu0 %v2986
      %v2988 = vand.u32 %v673, 4294901760
      %v2989 = vsub.f32 %v673, %v2988
      %2990 = vmatpush.msra.mxu0 %v2989
      %v2991 = vand.u32 %v672, 4294901760
      %v2992 = vsub.f32 %v672, %v2991
      %2993 = vmatpush.msra.mxu0 %v2992
      %v2994 = vand.u32 %v671, 4294901760
      %v2995 = vsub.f32 %v671, %v2994
      %2996 = vmatpush.msra.mxu0 %v2995
      %v2997 = vand.u32 %v670, 4294901760
      %v2998 = vsub.f32 %v670, %v2997
      %2999 = vmatpush.msra.mxu0 %v2998
      %v3000 = vand.u32 %v669, 4294901760
      %v3001 = vsub.f32 %v669, %v3000
      %3002 = vmatpush.msra.mxu0 %v3001
      %v3003 = vand.u32 %v2721, 4294901760
      %v3004 = vsub.f32 %v2721, %v3003
      %3005 = vmatmul.f32.gmra.mxu0 %v3004
      %v3006 = vpop.f32.mrf.mxu0
      %v3007 = vadd.f32 %v2925, %v3006
      %v3008 = vand.u32 %v2722, 4294901760
      %v3009 = vsub.f32 %v2722, %v3008
      %3010 = vmatmul.f32.gmra.mxu0 %v3009
      %v3011 = vpop.f32.mrf.mxu0
      %v3012 = vadd.f32 %v2929, %v3011
      %v3013 = vand.u32 %v2723, 4294901760
      %v3014 = vsub.f32 %v2723, %v3013
      %3015 = vmatmul.f32.gmra.mxu0 %v3014
      %v3016 = vpop.f32.mrf.mxu0
      %v3017 = vadd.f32 %v2933, %v3016
      %v3018 = vand.u32 %v2724, 4294901760
      %v3019 = vsub.f32 %v2724, %v3018
      %3020 = vmatmul.f32.gmra.mxu0 %v3019
      %v3021 = vpop.f32.mrf.mxu0
      %v3022 = vadd.f32 %v2937, %v3021
      %v3023 = vand.u32 %v2725, 4294901760
      %v3024 = vsub.f32 %v2725, %v3023
      %3025 = vmatmul.f32.gmra.mxu0 %v3024
      %v3026 = vpop.f32.mrf.mxu0
      %v3027 = vadd.f32 %v2941, %v3026
      %v3028 = vand.u32 %v2726, 4294901760
      %v3029 = vsub.f32 %v2726, %v3028
      %3030 = vmatmul.f32.gmra.mxu0 %v3029
      %v3031 = vpop.f32.mrf.mxu0
      %v3032 = vadd.f32 %v2945, %v3031
      %v3033 = vand.u32 %v2727, 4294901760
      %v3034 = vsub.f32 %v2727, %v3033
      %3035 = vmatmul.f32.gmra.mxu0 %v3034
      %v3036 = vpop.f32.mrf.mxu0
      %v3037 = vadd.f32 %v2949, %v3036
      %v3038 = vand.u32 %v2728, 4294901760
      %v3039 = vsub.f32 %v2728, %v3038
      %3040 = vmatmul.f32.gmra.mxu0 %v3039
      %v3041 = vpop.f32.mrf.mxu0
      %v3042 = vadd.f32 %v2953, %v3041
      %3043 = vdwg.mxu0
      %v3044 = vand.u32 %v684, 4294901760
      %3045 = vmatpush.msra.mxu0 %v3044
      %v3046 = vand.u32 %v683, 4294901760
      %3047 = vmatpush.msra.mxu0 %v3046
      %v3048 = vand.u32 %v682, 4294901760
      %3049 = vmatpush.msra.mxu0 %v3048
      %v3050 = vand.u32 %v681, 4294901760
      %3051 = vmatpush.msra.mxu0 %v3050
      %v3052 = vand.u32 %v680, 4294901760
      %3053 = vmatpush.msra.mxu0 %v3052
      %v3054 = vand.u32 %v679, 4294901760
      %3055 = vmatpush.msra.mxu0 %v3054
      %v3056 = vand.u32 %v678, 4294901760
      %3057 = vmatpush.msra.mxu0 %v3056
      %v3058 = vand.u32 %v677, 4294901760
      %3059 = vmatpush.msra.mxu0 %v3058
      %v3060 = vand.u32 %v676, 4294901760
      %3061 = vmatpush.msra.mxu0 %v3060
      %v3062 = vand.u32 %v675, 4294901760
      %3063 = vmatpush.msra.mxu0 %v3062
      %v3064 = vand.u32 %v674, 4294901760
      %3065 = vmatpush.msra.mxu0 %v3064
      %v3066 = vand.u32 %v673, 4294901760
      %3067 = vmatpush.msra.mxu0 %v3066
      %v3068 = vand.u32 %v672, 4294901760
      %3069 = vmatpush.msra.mxu0 %v3068
      %v3070 = vand.u32 %v671, 4294901760
      %3071 = vmatpush.msra.mxu0 %v3070
      %v3072 = vand.u32 %v670, 4294901760
      %3073 = vmatpush.msra.mxu0 %v3072
      %v3074 = vand.u32 %v669, 4294901760
      %3075 = vmatpush.msra.mxu0 %v3074
      %v3076 = vand.u32 %v2721, 4294901760
      %v3077 = vsub.f32 %v2721, %v3076
      %v3078 = vand.u32 %v3077, 4294901760
      %3079 = vmatmul.f32.gmra.mxu0 %v3078
      %v3080 = vpop.f32.mrf.mxu0
      %v3081 = vadd.f32 %v3007, %v3080
      %v3082 = vand.u32 %v2722, 4294901760
      %v3083 = vsub.f32 %v2722, %v3082
      %v3084 = vand.u32 %v3083, 4294901760
      %3085 = vmatmul.f32.gmra.mxu0 %v3084
      %v3086 = vpop.f32.mrf.mxu0
      %v3087 = vadd.f32 %v3012, %v3086
      %v3088 = vand.u32 %v2723, 4294901760
      %v3089 = vsub.f32 %v2723, %v3088
      %v3090 = vand.u32 %v3089, 4294901760
      %3091 = vmatmul.f32.gmra.mxu0 %v3090
      %v3092 = vpop.f32.mrf.mxu0
      %v3093 = vadd.f32 %v3017, %v3092
      %v3094 = vand.u32 %v2724, 4294901760
      %v3095 = vsub.f32 %v2724, %v3094
      %v3096 = vand.u32 %v3095, 4294901760
      %3097 = vmatmul.f32.gmra.mxu0 %v3096
      %v3098 = vpop.f32.mrf.mxu0
      %v3099 = vadd.f32 %v3022, %v3098
      %v3100 = vand.u32 %v2725, 4294901760
      %v3101 = vsub.f32 %v2725, %v3100
      %v3102 = vand.u32 %v3101, 4294901760
      %3103 = vmatmul.f32.gmra.mxu0 %v3102
      %v3104 = vpop.f32.mrf.mxu0
      %v3105 = vadd.f32 %v3027, %v3104
      %v3106 = vand.u32 %v2726, 4294901760
      %v3107 = vsub.f32 %v2726, %v3106
      %v3108 = vand.u32 %v3107, 4294901760
      %3109 = vmatmul.f32.gmra.mxu0 %v3108
      %v3110 = vpop.f32.mrf.mxu0
      %v3111 = vadd.f32 %v3032, %v3110
      %v3112 = vand.u32 %v2727, 4294901760
      %v3113 = vsub.f32 %v2727, %v3112
      %v3114 = vand.u32 %v3113, 4294901760
      %3115 = vmatmul.f32.gmra.mxu0 %v3114
      %v3116 = vpop.f32.mrf.mxu0
      %v3117 = vadd.f32 %v3037, %v3116
      %v3118 = vand.u32 %v2728, 4294901760
      %v3119 = vsub.f32 %v2728, %v3118
      %v3120 = vand.u32 %v3119, 4294901760
      %3121 = vmatmul.f32.gmra.mxu0 %v3120
      %v3122 = vpop.f32.mrf.mxu0
      %v3123 = vadd.f32 %v3042, %v3122
      %3124 = vdwg.mxu0
      %v3125 = vand.u32 %v684, 4294901760
      %v3126 = vsub.f32 %v684, %v3125
      %v3127 = vand.u32 %v3126, 4294901760
      %3128 = vmatpush.msra.mxu0 %v3127
      %v3129 = vand.u32 %v683, 4294901760
      %v3130 = vsub.f32 %v683, %v3129
      %v3131 = vand.u32 %v3130, 4294901760
      %3132 = vmatpush.msra.mxu0 %v3131
      %v3133 = vand.u32 %v682, 4294901760
      %v3134 = vsub.f32 %v682, %v3133
      %v3135 = vand.u32 %v3134, 4294901760
      %3136 = vmatpush.msra.mxu0 %v3135
      %v3137 = vand.u32 %v681, 4294901760
      %v3138 = vsub.f32 %v681, %v3137
      %v3139 = vand.u32 %v3138, 4294901760
      %3140 = vmatpush.msra.mxu0 %v3139
      %v3141 = vand.u32 %v680, 4294901760
      %v3142 = vsub.f32 %v680, %v3141
      %v3143 = vand.u32 %v3142, 4294901760
      %3144 = vmatpush.msra.mxu0 %v3143
      %v3145 = vand.u32 %v679, 4294901760
      %v3146 = vsub.f32 %v679, %v3145
      %v3147 = vand.u32 %v3146, 4294901760
      %3148 = vmatpush.msra.mxu0 %v3147
      %v3149 = vand.u32 %v678, 4294901760
      %v3150 = vsub.f32 %v678, %v3149
      %v3151 = vand.u32 %v3150, 4294901760
      %3152 = vmatpush.msra.mxu0 %v3151
      %v3153 = vand.u32 %v677, 4294901760
      %v3154 = vsub.f32 %v677, %v3153
      %v3155 = vand.u32 %v3154, 4294901760
      %3156 = vmatpush.msra.mxu0 %v3155
      %v3157 = vand.u32 %v676, 4294901760
      %v3158 = vsub.f32 %v676, %v3157
      %v3159 = vand.u32 %v3158, 4294901760
      %3160 = vmatpush.msra.mxu0 %v3159
      %v3161 = vand.u32 %v675, 4294901760
      %v3162 = vsub.f32 %v675, %v3161
      %v3163 = vand.u32 %v3162, 4294901760
      %3164 = vmatpush.msra.mxu0 %v3163
      %v3165 = vand.u32 %v674, 4294901760
      %v3166 = vsub.f32 %v674, %v3165
      %v3167 = vand.u32 %v3166, 4294901760
      %3168 = vmatpush.msra.mxu0 %v3167
      %v3169 = vand.u32 %v673, 4294901760
      %v3170 = vsub.f32 %v673, %v3169
      %v3171 = vand.u32 %v3170, 4294901760
      %3172 = vmatpush.msra.mxu0 %v3171
      %v3173 = vand.u32 %v672, 4294901760
      %v3174 = vsub.f32 %v672, %v3173
      %v3175 = vand.u32 %v3174, 4294901760
      %3176 = vmatpush.msra.mxu0 %v3175
      %v3177 = vand.u32 %v671, 4294901760
      %v3178 = vsub.f32 %v671, %v3177
      %v3179 = vand.u32 %v3178, 4294901760
      %3180 = vmatpush.msra.mxu0 %v3179
      %v3181 = vand.u32 %v670, 4294901760
      %v3182 = vsub.f32 %v670, %v3181
      %v3183 = vand.u32 %v3182, 4294901760
      %3184 = vmatpush.msra.mxu0 %v3183
      %v3185 = vand.u32 %v669, 4294901760
      %v3186 = vsub.f32 %v669, %v3185
      %v3187 = vand.u32 %v3186, 4294901760
      %3188 = vmatpush.msra.mxu0 %v3187
      %v3189 = vand.u32 %v2721, 4294901760
      %3190 = vmatmul.f32.gmra.mxu0 %v3189
      %v3191 = vpop.f32.mrf.mxu0
      %v3192 = vadd.f32 %v3081, %v3191
      %v3193 = vand.u32 %v2722, 4294901760
      %3194 = vmatmul.f32.gmra.mxu0 %v3193
      %v3195 = vpop.f32.mrf.mxu0
      %v3196 = vadd.f32 %v3087, %v3195
      %v3197 = vand.u32 %v2723, 4294901760
      %3198 = vmatmul.f32.gmra.mxu0 %v3197
      %v3199 = vpop.f32.mrf.mxu0
      %v3200 = vadd.f32 %v3093, %v3199
      %v3201 = vand.u32 %v2724, 4294901760
      %3202 = vmatmul.f32.gmra.mxu0 %v3201
      %v3203 = vpop.f32.mrf.mxu0
      %v3204 = vadd.f32 %v3099, %v3203
      %v3205 = vand.u32 %v2725, 4294901760
      %3206 = vmatmul.f32.gmra.mxu0 %v3205
      %v3207 = vpop.f32.mrf.mxu0
      %v3208 = vadd.f32 %v3105, %v3207
      %v3209 = vand.u32 %v2726, 4294901760
      %3210 = vmatmul.f32.gmra.mxu0 %v3209
      %v3211 = vpop.f32.mrf.mxu0
      %v3212 = vadd.f32 %v3111, %v3211
      %v3213 = vand.u32 %v2727, 4294901760
      %3214 = vmatmul.f32.gmra.mxu0 %v3213
      %v3215 = vpop.f32.mrf.mxu0
      %v3216 = vadd.f32 %v3117, %v3215
      %v3217 = vand.u32 %v2728, 4294901760
      %3218 = vmatmul.f32.gmra.mxu0 %v3217
      %v3219 = vpop.f32.mrf.mxu0
      %v3220 = vadd.f32 %v3123, %v3219
      %3221 = vdwg.mxu0
      %v3222 = vand.u32 %v684, 4294901760
      %3223 = vmatpush.msra.mxu0 %v3222
      %v3224 = vand.u32 %v683, 4294901760
      %3225 = vmatpush.msra.mxu0 %v3224
      %v3226 = vand.u32 %v682, 4294901760
      %3227 = vmatpush.msra.mxu0 %v3226
      %v3228 = vand.u32 %v681, 4294901760
      %3229 = vmatpush.msra.mxu0 %v3228
      %v3230 = vand.u32 %v680, 4294901760
      %3231 = vmatpush.msra.mxu0 %v3230
      %v3232 = vand.u32 %v679, 4294901760
      %3233 = vmatpush.msra.mxu0 %v3232
      %v3234 = vand.u32 %v678, 4294901760
      %3235 = vmatpush.msra.mxu0 %v3234
      %v3236 = vand.u32 %v677, 4294901760
      %3237 = vmatpush.msra.mxu0 %v3236
      %v3238 = vand.u32 %v676, 4294901760
      %3239 = vmatpush.msra.mxu0 %v3238
      %v3240 = vand.u32 %v675, 4294901760
      %3241 = vmatpush.msra.mxu0 %v3240
      %v3242 = vand.u32 %v674, 4294901760
      %3243 = vmatpush.msra.mxu0 %v3242
      %v3244 = vand.u32 %v673, 4294901760
      %3245 = vmatpush.msra.mxu0 %v3244
      %v3246 = vand.u32 %v672, 4294901760
      %3247 = vmatpush.msra.mxu0 %v3246
      %v3248 = vand.u32 %v671, 4294901760
      %3249 = vmatpush.msra.mxu0 %v3248
      %v3250 = vand.u32 %v670, 4294901760
      %3251 = vmatpush.msra.mxu0 %v3250
      %v3252 = vand.u32 %v669, 4294901760
      %3253 = vmatpush.msra.mxu0 %v3252
      %v3254 = vand.u32 %v2721, 4294901760
      %3255 = vmatmul.f32.gmra.mxu0 %v3254
      %v3256 = vpop.f32.mrf.mxu0
      %v3257 = vadd.f32 %v3192, %v3256
      %v3258 = vand.u32 %v2722, 4294901760
      %3259 = vmatmul.f32.gmra.mxu0 %v3258
      %v3260 = vpop.f32.mrf.mxu0
      %v3261 = vadd.f32 %v3196, %v3260
      %v3262 = vand.u32 %v2723, 4294901760
      %3263 = vmatmul.f32.gmra.mxu0 %v3262
      %v3264 = vpop.f32.mrf.mxu0
      %v3265 = vadd.f32 %v3200, %v3264
      %v3266 = vand.u32 %v2724, 4294901760
      %3267 = vmatmul.f32.gmra.mxu0 %v3266
      %v3268 = vpop.f32.mrf.mxu0
      %v3269 = vadd.f32 %v3204, %v3268
      %v3270 = vand.u32 %v2725, 4294901760
      %3271 = vmatmul.f32.gmra.mxu0 %v3270
      %v3272 = vpop.f32.mrf.mxu0
      %v3273 = vadd.f32 %v3208, %v3272
      %v3274 = vand.u32 %v2726, 4294901760
      %3275 = vmatmul.f32.gmra.mxu0 %v3274
      %v3276 = vpop.f32.mrf.mxu0
      %v3277 = vadd.f32 %v3212, %v3276
      %v3278 = vand.u32 %v2727, 4294901760
      %3279 = vmatmul.f32.gmra.mxu0 %v3278
      %v3280 = vpop.f32.mrf.mxu0
      %v3281 = vadd.f32 %v3216, %v3280
      %v3282 = vand.u32 %v2728, 4294901760
      %3283 = vmatmul.f32.gmra.mxu0 %v3282
      %v3284 = vpop.f32.mrf.mxu0
      %v3285 = vadd.f32 %v3220, %v3284
      %3286 = vdwg.mxu0
      %3287 = vset.pattern.permute.xlu0 3
      %3288 = vperm.xlu0 %3287, %v759
      %v3289 = vpop.permute.xlu0 %3288
      %3291 = vset.pattern.permute.xlu0 3
      %3292 = vperm.xlu0 %3291, %v760
      %v3293 = vpop.permute.xlu0 %3292
      %3295 = vset.pattern.permute.xlu0 3
      %3296 = vperm.xlu0 %3295, %v761
      %v3297 = vpop.permute.xlu0 %3296
      %3299 = vset.pattern.permute.xlu0 3
      %3300 = vperm.xlu0 %3299, %v762
      %v3301 = vpop.permute.xlu0 %3300
      %3303 = vset.pattern.permute.xlu0 3
      %3304 = vperm.xlu0 %3303, %v763
      %v3305 = vpop.permute.xlu0 %3304
      %3307 = vset.pattern.permute.xlu0 3
      %3308 = vperm.xlu0 %3307, %v764
      %v3309 = vpop.permute.xlu0 %3308
      %3311 = vset.pattern.permute.xlu0 3
      %3312 = vperm.xlu0 %3311, %v765
      %v3313 = vpop.permute.xlu0 %3312
      %3315 = vset.pattern.permute.xlu0 3
      %3316 = vperm.xlu0 %3315, %v766
      %v3317 = vpop.permute.xlu0 %3316
      %v3319 = vmul.f32 %v3257, %v3289
      %v3320 = vmul.f32 %v3261, %v3293
      %v3321 = vmul.f32 %v3265, %v3297
      %v3322 = vmul.f32 %v3269, %v3301
      %v3323 = vmul.f32 %v3273, %v3305
      %v3324 = vmul.f32 %v3277, %v3309
      %v3325 = vmul.f32 %v3281, %v3313
      %v3326 = vmul.f32 %v3285, %v3317
      %v3327 = vmax.f32 %v2673, %v3319
      %v3328 = vmax.f32 %v2674, %v3320
      %v3329 = vmax.f32 %v2675, %v3321
      %v3330 = vmax.f32 %v2676, %v3322
      %v3331 = vmax.f32 %v2677, %v3323
      %v3332 = vmax.f32 %v2678, %v3324
      %v3333 = vmax.f32 %v2679, %v3325
      %v3334 = vmax.f32 %v2680, %v3326
      %3335 = vset.pattern.permute.xlu0 4
      %3336 = vperm.xlu0 %3335, %v685
      %v3337 = vpop.permute.xlu0 %3336
      %3338 = vset.pattern.permute.xlu0 4
      %3339 = vperm.xlu0 %3338, %v686
      %v3340 = vpop.permute.xlu0 %3339
      %3341 = vset.pattern.permute.xlu0 4
      %3342 = vperm.xlu0 %3341, %v687
      %v3343 = vpop.permute.xlu0 %3342
      %3344 = vset.pattern.permute.xlu0 4
      %3345 = vperm.xlu0 %3344, %v688
      %v3346 = vpop.permute.xlu0 %3345
      %3347 = vset.pattern.permute.xlu0 4
      %3348 = vperm.xlu0 %3347, %v689
      %v3349 = vpop.permute.xlu0 %3348
      %3350 = vset.pattern.permute.xlu0 4
      %3351 = vperm.xlu0 %3350, %v690
      %v3352 = vpop.permute.xlu0 %3351
      %3353 = vset.pattern.permute.xlu0 4
      %3354 = vperm.xlu0 %3353, %v691
      %v3355 = vpop.permute.xlu0 %3354
      %3356 = vset.pattern.permute.xlu0 4
      %3357 = vperm.xlu0 %3356, %v692
      %v3358 = vpop.permute.xlu0 %3357
      %vm3359 = vcmp.eq.s32.totalorder %v694, %v3337
      %vm3360 = vcmp.eq.s32.totalorder %v694, %v3340
      %vm3361 = vcmp.eq.s32.totalorder %v694, %v3343
      %vm3362 = vcmp.eq.s32.totalorder %v694, %v3346
      %vm3363 = vcmp.eq.s32.totalorder %v694, %v3349
      %vm3364 = vcmp.eq.s32.totalorder %v694, %v3352
      %vm3365 = vcmp.eq.s32.totalorder %v694, %v3355
      %vm3366 = vcmp.eq.s32.totalorder %v694, %v3358
      %v3367 = vsel %vm3359, 1, 0
      %v3368 = vsel %vm3360, 1, 0
      %v3369 = vsel %vm3361, 1, 0
      %v3370 = vsel %vm3362, 1, 0
      %v3371 = vsel %vm3363, 1, 0
      %v3372 = vsel %vm3364, 1, 0
      %v3373 = vsel %vm3365, 1, 0
      %v3374 = vsel %vm3366, 1, 0
      %v3375 = vcvt.s32.f32 %v3367
      %v3376 = vcvt.s32.f32 %v3368
      %v3377 = vcvt.s32.f32 %v3369
      %v3378 = vcvt.s32.f32 %v3370
      %v3379 = vcvt.s32.f32 %v3371
      %v3380 = vcvt.s32.f32 %v3372
      %v3381 = vcvt.s32.f32 %v3373
      %v3382 = vcvt.s32.f32 %v3374
      %v3383 = vand.u32 %v684, 4294901760
      %3384 = vmatpush.msra.mxu0 %v3383
      %v3385 = vand.u32 %v683, 4294901760
      %3386 = vmatpush.msra.mxu0 %v3385
      %v3387 = vand.u32 %v682, 4294901760
      %3388 = vmatpush.msra.mxu0 %v3387
      %v3389 = vand.u32 %v681, 4294901760
      %3390 = vmatpush.msra.mxu0 %v3389
      %v3391 = vand.u32 %v680, 4294901760
      %3392 = vmatpush.msra.mxu0 %v3391
      %v3393 = vand.u32 %v679, 4294901760
      %3394 = vmatpush.msra.mxu0 %v3393
      %v3395 = vand.u32 %v678, 4294901760
      %3396 = vmatpush.msra.mxu0 %v3395
      %v3397 = vand.u32 %v677, 4294901760
      %3398 = vmatpush.msra.mxu0 %v3397
      %v3399 = vand.u32 %v676, 4294901760
      %3400 = vmatpush.msra.mxu0 %v3399
      %v3401 = vand.u32 %v675, 4294901760
      %3402 = vmatpush.msra.mxu0 %v3401
      %v3403 = vand.u32 %v674, 4294901760
      %3404 = vmatpush.msra.mxu0 %v3403
      %v3405 = vand.u32 %v673, 4294901760
      %3406 = vmatpush.msra.mxu0 %v3405
      %v3407 = vand.u32 %v672, 4294901760
      %3408 = vmatpush.msra.mxu0 %v3407
      %v3409 = vand.u32 %v671, 4294901760
      %3410 = vmatpush.msra.mxu0 %v3409
      %v3411 = vand.u32 %v670, 4294901760
      %3412 = vmatpush.msra.mxu0 %v3411
      %v3413 = vand.u32 %v669, 4294901760
      %3414 = vmatpush.msra.mxu0 %v3413
      %v3415 = vand.u32 %v3375, 4294901760
      %v3416 = vsub.f32 %v3375, %v3415
      %v3417 = vand.u32 %v3416, 4294901760
      %v3418 = vsub.f32 %v3416, %v3417
      %v3419 = vand.u32 %v3418, 4294901760
      %3420 = vmatmul.f32.gmra.mxu0 %v3419
      %v3421 = vpop.f32.mrf.mxu0
      %v3422 = vadd.f32 %v639, %v3421
      %v3423 = vand.u32 %v3376, 4294901760
      %v3424 = vsub.f32 %v3376, %v3423
      %v3425 = vand.u32 %v3424, 4294901760
      %v3426 = vsub.f32 %v3424, %v3425
      %v3427 = vand.u32 %v3426, 4294901760
      %3428 = vmatmul.f32.gmra.mxu0 %v3427
      %v3429 = vpop.f32.mrf.mxu0
      %v3430 = vadd.f32 %v643, %v3429
      %v3431 = vand.u32 %v3377, 4294901760
      %v3432 = vsub.f32 %v3377, %v3431
      %v3433 = vand.u32 %v3432, 4294901760
      %v3434 = vsub.f32 %v3432, %v3433
      %v3435 = vand.u32 %v3434, 4294901760
      %3436 = vmatmul.f32.gmra.mxu0 %v3435
      %v3437 = vpop.f32.mrf.mxu0
      %v3438 = vadd.f32 %v647, %v3437
      %v3439 = vand.u32 %v3378, 4294901760
      %v3440 = vsub.f32 %v3378, %v3439
      %v3441 = vand.u32 %v3440, 4294901760
      %v3442 = vsub.f32 %v3440, %v3441
      %v3443 = vand.u32 %v3442, 4294901760
      %3444 = vmatmul.f32.gmra.mxu0 %v3443
      %v3445 = vpop.f32.mrf.mxu0
      %v3446 = vadd.f32 %v651, %v3445
      %v3447 = vand.u32 %v3379, 4294901760
      %v3448 = vsub.f32 %v3379, %v3447
      %v3449 = vand.u32 %v3448, 4294901760
      %v3450 = vsub.f32 %v3448, %v3449
      %v3451 = vand.u32 %v3450, 4294901760
      %3452 = vmatmul.f32.gmra.mxu0 %v3451
      %v3453 = vpop.f32.mrf.mxu0
      %v3454 = vadd.f32 %v655, %v3453
      %v3455 = vand.u32 %v3380, 4294901760
      %v3456 = vsub.f32 %v3380, %v3455
      %v3457 = vand.u32 %v3456, 4294901760
      %v3458 = vsub.f32 %v3456, %v3457
      %v3459 = vand.u32 %v3458, 4294901760
      %3460 = vmatmul.f32.gmra.mxu0 %v3459
      %v3461 = vpop.f32.mrf.mxu0
      %v3462 = vadd.f32 %v659, %v3461
      %v3463 = vand.u32 %v3381, 4294901760
      %v3464 = vsub.f32 %v3381, %v3463
      %v3465 = vand.u32 %v3464, 4294901760
      %v3466 = vsub.f32 %v3464, %v3465
      %v3467 = vand.u32 %v3466, 4294901760
      %3468 = vmatmul.f32.gmra.mxu0 %v3467
      %v3469 = vpop.f32.mrf.mxu0
      %v3470 = vadd.f32 %v663, %v3469
      %v3471 = vand.u32 %v3382, 4294901760
      %v3472 = vsub.f32 %v3382, %v3471
      %v3473 = vand.u32 %v3472, 4294901760
      %v3474 = vsub.f32 %v3472, %v3473
      %v3475 = vand.u32 %v3474, 4294901760
      %3476 = vmatmul.f32.gmra.mxu0 %v3475
      %v3477 = vpop.f32.mrf.mxu0
      %v3478 = vadd.f32 %v667, %v3477
      %3479 = vdwg.mxu0
      %v3480 = vand.u32 %v684, 4294901760
      %v3481 = vsub.f32 %v684, %v3480
      %v3482 = vand.u32 %v3481, 4294901760
      %v3483 = vsub.f32 %v3481, %v3482
      %v3484 = vand.u32 %v3483, 4294901760
      %3485 = vmatpush.msra.mxu0 %v3484
      %v3486 = vand.u32 %v683, 4294901760
      %v3487 = vsub.f32 %v683, %v3486
      %v3488 = vand.u32 %v3487, 4294901760
      %v3489 = vsub.f32 %v3487, %v3488
      %v3490 = vand.u32 %v3489, 4294901760
      %3491 = vmatpush.msra.mxu0 %v3490
      %v3492 = vand.u32 %v682, 4294901760
      %v3493 = vsub.f32 %v682, %v3492
      %v3494 = vand.u32 %v3493, 4294901760
      %v3495 = vsub.f32 %v3493, %v3494
      %v3496 = vand.u32 %v3495, 4294901760
      %3497 = vmatpush.msra.mxu0 %v3496
      %v3498 = vand.u32 %v681, 4294901760
      %v3499 = vsub.f32 %v681, %v3498
      %v3500 = vand.u32 %v3499, 4294901760
      %v3501 = vsub.f32 %v3499, %v3500
      %v3502 = vand.u32 %v3501, 4294901760
      %3503 = vmatpush.msra.mxu0 %v3502
      %v3504 = vand.u32 %v680, 4294901760
      %v3505 = vsub.f32 %v680, %v3504
      %v3506 = vand.u32 %v3505, 4294901760
      %v3507 = vsub.f32 %v3505, %v3506
      %v3508 = vand.u32 %v3507, 4294901760
      %3509 = vmatpush.msra.mxu0 %v3508
      %v3510 = vand.u32 %v679, 4294901760
      %v3511 = vsub.f32 %v679, %v3510
      %v3512 = vand.u32 %v3511, 4294901760
      %v3513 = vsub.f32 %v3511, %v3512
      %v3514 = vand.u32 %v3513, 4294901760
      %3515 = vmatpush.msra.mxu0 %v3514
      %v3516 = vand.u32 %v678, 4294901760
      %v3517 = vsub.f32 %v678, %v3516
      %v3518 = vand.u32 %v3517, 4294901760
      %v3519 = vsub.f32 %v3517, %v3518
      %v3520 = vand.u32 %v3519, 4294901760
      %3521 = vmatpush.msra.mxu0 %v3520
      %v3522 = vand.u32 %v677, 4294901760
      %v3523 = vsub.f32 %v677, %v3522
      %v3524 = vand.u32 %v3523, 4294901760
      %v3525 = vsub.f32 %v3523, %v3524
      %v3526 = vand.u32 %v3525, 4294901760
      %3527 = vmatpush.msra.mxu0 %v3526
      %v3528 = vand.u32 %v676, 4294901760
      %v3529 = vsub.f32 %v676, %v3528
      %v3530 = vand.u32 %v3529, 4294901760
      %v3531 = vsub.f32 %v3529, %v3530
      %v3532 = vand.u32 %v3531, 4294901760
      %3533 = vmatpush.msra.mxu0 %v3532
      %v3534 = vand.u32 %v675, 4294901760
      %v3535 = vsub.f32 %v675, %v3534
      %v3536 = vand.u32 %v3535, 4294901760
      %v3537 = vsub.f32 %v3535, %v3536
      %v3538 = vand.u32 %v3537, 4294901760
      %3539 = vmatpush.msra.mxu0 %v3538
      %v3540 = vand.u32 %v674, 4294901760
      %v3541 = vsub.f32 %v674, %v3540
      %v3542 = vand.u32 %v3541, 4294901760
      %v3543 = vsub.f32 %v3541, %v3542
      %v3544 = vand.u32 %v3543, 4294901760
      %3545 = vmatpush.msra.mxu0 %v3544
      %v3546 = vand.u32 %v673, 4294901760
      %v3547 = vsub.f32 %v673, %v3546
      %v3548 = vand.u32 %v3547, 4294901760
      %v3549 = vsub.f32 %v3547, %v3548
      %v3550 = vand.u32 %v3549, 4294901760
      %3551 = vmatpush.msra.mxu0 %v3550
      %v3552 = vand.u32 %v672, 4294901760
      %v3553 = vsub.f32 %v672, %v3552
      %v3554 = vand.u32 %v3553, 4294901760
      %v3555 = vsub.f32 %v3553, %v3554
      %v3556 = vand.u32 %v3555, 4294901760
      %3557 = vmatpush.msra.mxu0 %v3556
      %v3558 = vand.u32 %v671, 4294901760
      %v3559 = vsub.f32 %v671, %v3558
      %v3560 = vand.u32 %v3559, 4294901760
      %v3561 = vsub.f32 %v3559, %v3560
      %v3562 = vand.u32 %v3561, 4294901760
      %3563 = vmatpush.msra.mxu0 %v3562
      %v3564 = vand.u32 %v670, 4294901760
      %v3565 = vsub.f32 %v670, %v3564
      %v3566 = vand.u32 %v3565, 4294901760
      %v3567 = vsub.f32 %v3565, %v3566
      %v3568 = vand.u32 %v3567, 4294901760
      %3569 = vmatpush.msra.mxu0 %v3568
      %v3570 = vand.u32 %v669, 4294901760
      %v3571 = vsub.f32 %v669, %v3570
      %v3572 = vand.u32 %v3571, 4294901760
      %v3573 = vsub.f32 %v3571, %v3572
      %v3574 = vand.u32 %v3573, 4294901760
      %3575 = vmatpush.msra.mxu0 %v3574
      %v3576 = vand.u32 %v3375, 4294901760
      %3577 = vmatmul.f32.gmra.mxu0 %v3576
      %v3578 = vpop.f32.mrf.mxu0
      %v3579 = vadd.f32 %v3422, %v3578
      %v3580 = vand.u32 %v3376, 4294901760
      %3581 = vmatmul.f32.gmra.mxu0 %v3580
      %v3582 = vpop.f32.mrf.mxu0
      %v3583 = vadd.f32 %v3430, %v3582
      %v3584 = vand.u32 %v3377, 4294901760
      %3585 = vmatmul.f32.gmra.mxu0 %v3584
      %v3586 = vpop.f32.mrf.mxu0
      %v3587 = vadd.f32 %v3438, %v3586
      %v3588 = vand.u32 %v3378, 4294901760
      %3589 = vmatmul.f32.gmra.mxu0 %v3588
      %v3590 = vpop.f32.mrf.mxu0
      %v3591 = vadd.f32 %v3446, %v3590
      %v3592 = vand.u32 %v3379, 4294901760
      %3593 = vmatmul.f32.gmra.mxu0 %v3592
      %v3594 = vpop.f32.mrf.mxu0
      %v3595 = vadd.f32 %v3454, %v3594
      %v3596 = vand.u32 %v3380, 4294901760
      %3597 = vmatmul.f32.gmra.mxu0 %v3596
      %v3598 = vpop.f32.mrf.mxu0
      %v3599 = vadd.f32 %v3462, %v3598
      %v3600 = vand.u32 %v3381, 4294901760
      %3601 = vmatmul.f32.gmra.mxu0 %v3600
      %v3602 = vpop.f32.mrf.mxu0
      %v3603 = vadd.f32 %v3470, %v3602
      %v3604 = vand.u32 %v3382, 4294901760
      %3605 = vmatmul.f32.gmra.mxu0 %v3604
      %v3606 = vpop.f32.mrf.mxu0
      %v3607 = vadd.f32 %v3478, %v3606
      %3608 = vdwg.mxu0
      %v3609 = vand.u32 %v684, 4294901760
      %v3610 = vsub.f32 %v684, %v3609
      %3611 = vmatpush.msra.mxu0 %v3610
      %v3612 = vand.u32 %v683, 4294901760
      %v3613 = vsub.f32 %v683, %v3612
      %3614 = vmatpush.msra.mxu0 %v3613
      %v3615 = vand.u32 %v682, 4294901760
      %v3616 = vsub.f32 %v682, %v3615
      %3617 = vmatpush.msra.mxu0 %v3616
      %v3618 = vand.u32 %v681, 4294901760
      %v3619 = vsub.f32 %v681, %v3618
      %3620 = vmatpush.msra.mxu0 %v3619
      %v3621 = vand.u32 %v680, 4294901760
      %v3622 = vsub.f32 %v680, %v3621
      %3623 = vmatpush.msra.mxu0 %v3622
      %v3624 = vand.u32 %v679, 4294901760
      %v3625 = vsub.f32 %v679, %v3624
      %3626 = vmatpush.msra.mxu0 %v3625
      %v3627 = vand.u32 %v678, 4294901760
      %v3628 = vsub.f32 %v678, %v3627
      %3629 = vmatpush.msra.mxu0 %v3628
      %v3630 = vand.u32 %v677, 4294901760
      %v3631 = vsub.f32 %v677, %v3630
      %3632 = vmatpush.msra.mxu0 %v3631
      %v3633 = vand.u32 %v676, 4294901760
      %v3634 = vsub.f32 %v676, %v3633
      %3635 = vmatpush.msra.mxu0 %v3634
      %v3636 = vand.u32 %v675, 4294901760
      %v3637 = vsub.f32 %v675, %v3636
      %3638 = vmatpush.msra.mxu0 %v3637
      %v3639 = vand.u32 %v674, 4294901760
      %v3640 = vsub.f32 %v674, %v3639
      %3641 = vmatpush.msra.mxu0 %v3640
      %v3642 = vand.u32 %v673, 4294901760
      %v3643 = vsub.f32 %v673, %v3642
      %3644 = vmatpush.msra.mxu0 %v3643
      %v3645 = vand.u32 %v672, 4294901760
      %v3646 = vsub.f32 %v672, %v3645
      %3647 = vmatpush.msra.mxu0 %v3646
      %v3648 = vand.u32 %v671, 4294901760
      %v3649 = vsub.f32 %v671, %v3648
      %3650 = vmatpush.msra.mxu0 %v3649
      %v3651 = vand.u32 %v670, 4294901760
      %v3652 = vsub.f32 %v670, %v3651
      %3653 = vmatpush.msra.mxu0 %v3652
      %v3654 = vand.u32 %v669, 4294901760
      %v3655 = vsub.f32 %v669, %v3654
      %3656 = vmatpush.msra.mxu0 %v3655
      %v3657 = vand.u32 %v3375, 4294901760
      %v3658 = vsub.f32 %v3375, %v3657
      %3659 = vmatmul.f32.gmra.mxu0 %v3658
      %v3660 = vpop.f32.mrf.mxu0
      %v3661 = vadd.f32 %v3579, %v3660
      %v3662 = vand.u32 %v3376, 4294901760
      %v3663 = vsub.f32 %v3376, %v3662
      %3664 = vmatmul.f32.gmra.mxu0 %v3663
      %v3665 = vpop.f32.mrf.mxu0
      %v3666 = vadd.f32 %v3583, %v3665
      %v3667 = vand.u32 %v3377, 4294901760
      %v3668 = vsub.f32 %v3377, %v3667
      %3669 = vmatmul.f32.gmra.mxu0 %v3668
      %v3670 = vpop.f32.mrf.mxu0
      %v3671 = vadd.f32 %v3587, %v3670
      %v3672 = vand.u32 %v3378, 4294901760
      %v3673 = vsub.f32 %v3378, %v3672
      %3674 = vmatmul.f32.gmra.mxu0 %v3673
      %v3675 = vpop.f32.mrf.mxu0
      %v3676 = vadd.f32 %v3591, %v3675
      %v3677 = vand.u32 %v3379, 4294901760
      %v3678 = vsub.f32 %v3379, %v3677
      %3679 = vmatmul.f32.gmra.mxu0 %v3678
      %v3680 = vpop.f32.mrf.mxu0
      %v3681 = vadd.f32 %v3595, %v3680
      %v3682 = vand.u32 %v3380, 4294901760
      %v3683 = vsub.f32 %v3380, %v3682
      %3684 = vmatmul.f32.gmra.mxu0 %v3683
      %v3685 = vpop.f32.mrf.mxu0
      %v3686 = vadd.f32 %v3599, %v3685
      %v3687 = vand.u32 %v3381, 4294901760
      %v3688 = vsub.f32 %v3381, %v3687
      %3689 = vmatmul.f32.gmra.mxu0 %v3688
      %v3690 = vpop.f32.mrf.mxu0
      %v3691 = vadd.f32 %v3603, %v3690
      %v3692 = vand.u32 %v3382, 4294901760
      %v3693 = vsub.f32 %v3382, %v3692
      %3694 = vmatmul.f32.gmra.mxu0 %v3693
      %v3695 = vpop.f32.mrf.mxu0
      %v3696 = vadd.f32 %v3607, %v3695
      %3697 = vdwg.mxu0
      %v3698 = vand.u32 %v684, 4294901760
      %3699 = vmatpush.msra.mxu0 %v3698
      %v3700 = vand.u32 %v683, 4294901760
      %3701 = vmatpush.msra.mxu0 %v3700
      %v3702 = vand.u32 %v682, 4294901760
      %3703 = vmatpush.msra.mxu0 %v3702
      %v3704 = vand.u32 %v681, 4294901760
      %3705 = vmatpush.msra.mxu0 %v3704
      %v3706 = vand.u32 %v680, 4294901760
      %3707 = vmatpush.msra.mxu0 %v3706
      %v3708 = vand.u32 %v679, 4294901760
      %3709 = vmatpush.msra.mxu0 %v3708
      %v3710 = vand.u32 %v678, 4294901760
      %3711 = vmatpush.msra.mxu0 %v3710
      %v3712 = vand.u32 %v677, 4294901760
      %3713 = vmatpush.msra.mxu0 %v3712
      %v3714 = vand.u32 %v676, 4294901760
      %3715 = vmatpush.msra.mxu0 %v3714
      %v3716 = vand.u32 %v675, 4294901760
      %3717 = vmatpush.msra.mxu0 %v3716
      %v3718 = vand.u32 %v674, 4294901760
      %3719 = vmatpush.msra.mxu0 %v3718
      %v3720 = vand.u32 %v673, 4294901760
      %3721 = vmatpush.msra.mxu0 %v3720
      %v3722 = vand.u32 %v672, 4294901760
      %3723 = vmatpush.msra.mxu0 %v3722
      %v3724 = vand.u32 %v671, 4294901760
      %3725 = vmatpush.msra.mxu0 %v3724
      %v3726 = vand.u32 %v670, 4294901760
      %3727 = vmatpush.msra.mxu0 %v3726
      %v3728 = vand.u32 %v669, 4294901760
      %3729 = vmatpush.msra.mxu0 %v3728
      %v3730 = vand.u32 %v3375, 4294901760
      %v3731 = vsub.f32 %v3375, %v3730
      %v3732 = vand.u32 %v3731, 4294901760
      %3733 = vmatmul.f32.gmra.mxu0 %v3732
      %v3734 = vpop.f32.mrf.mxu0
      %v3735 = vadd.f32 %v3661, %v3734
      %v3736 = vand.u32 %v3376, 4294901760
      %v3737 = vsub.f32 %v3376, %v3736
      %v3738 = vand.u32 %v3737, 4294901760
      %3739 = vmatmul.f32.gmra.mxu0 %v3738
      %v3740 = vpop.f32.mrf.mxu0
      %v3741 = vadd.f32 %v3666, %v3740
      %v3742 = vand.u32 %v3377, 4294901760
      %v3743 = vsub.f32 %v3377, %v3742
      %v3744 = vand.u32 %v3743, 4294901760
      %3745 = vmatmul.f32.gmra.mxu0 %v3744
      %v3746 = vpop.f32.mrf.mxu0
      %v3747 = vadd.f32 %v3671, %v3746
      %v3748 = vand.u32 %v3378, 4294901760
      %v3749 = vsub.f32 %v3378, %v3748
      %v3750 = vand.u32 %v3749, 4294901760
      %3751 = vmatmul.f32.gmra.mxu0 %v3750
      %v3752 = vpop.f32.mrf.mxu0
      %v3753 = vadd.f32 %v3676, %v3752
      %v3754 = vand.u32 %v3379, 4294901760
      %v3755 = vsub.f32 %v3379, %v3754
      %v3756 = vand.u32 %v3755, 4294901760
      %3757 = vmatmul.f32.gmra.mxu0 %v3756
      %v3758 = vpop.f32.mrf.mxu0
      %v3759 = vadd.f32 %v3681, %v3758
      %v3760 = vand.u32 %v3380, 4294901760
      %v3761 = vsub.f32 %v3380, %v3760
      %v3762 = vand.u32 %v3761, 4294901760
      %3763 = vmatmul.f32.gmra.mxu0 %v3762
      %v3764 = vpop.f32.mrf.mxu0
      %v3765 = vadd.f32 %v3686, %v3764
      %v3766 = vand.u32 %v3381, 4294901760
      %v3767 = vsub.f32 %v3381, %v3766
      %v3768 = vand.u32 %v3767, 4294901760
      %3769 = vmatmul.f32.gmra.mxu0 %v3768
      %v3770 = vpop.f32.mrf.mxu0
      %v3771 = vadd.f32 %v3691, %v3770
      %v3772 = vand.u32 %v3382, 4294901760
      %v3773 = vsub.f32 %v3382, %v3772
      %v3774 = vand.u32 %v3773, 4294901760
      %3775 = vmatmul.f32.gmra.mxu0 %v3774
      %v3776 = vpop.f32.mrf.mxu0
      %v3777 = vadd.f32 %v3696, %v3776
      %3778 = vdwg.mxu0
      %v3779 = vand.u32 %v684, 4294901760
      %v3780 = vsub.f32 %v684, %v3779
      %v3781 = vand.u32 %v3780, 4294901760
      %3782 = vmatpush.msra.mxu0 %v3781
      %v3783 = vand.u32 %v683, 4294901760
      %v3784 = vsub.f32 %v683, %v3783
      %v3785 = vand.u32 %v3784, 4294901760
      %3786 = vmatpush.msra.mxu0 %v3785
      %v3787 = vand.u32 %v682, 4294901760
      %v3788 = vsub.f32 %v682, %v3787
      %v3789 = vand.u32 %v3788, 4294901760
      %3790 = vmatpush.msra.mxu0 %v3789
      %v3791 = vand.u32 %v681, 4294901760
      %v3792 = vsub.f32 %v681, %v3791
      %v3793 = vand.u32 %v3792, 4294901760
      %3794 = vmatpush.msra.mxu0 %v3793
      %v3795 = vand.u32 %v680, 4294901760
      %v3796 = vsub.f32 %v680, %v3795
      %v3797 = vand.u32 %v3796, 4294901760
      %3798 = vmatpush.msra.mxu0 %v3797
      %v3799 = vand.u32 %v679, 4294901760
      %v3800 = vsub.f32 %v679, %v3799
      %v3801 = vand.u32 %v3800, 4294901760
      %3802 = vmatpush.msra.mxu0 %v3801
      %v3803 = vand.u32 %v678, 4294901760
      %v3804 = vsub.f32 %v678, %v3803
      %v3805 = vand.u32 %v3804, 4294901760
      %3806 = vmatpush.msra.mxu0 %v3805
      %v3807 = vand.u32 %v677, 4294901760
      %v3808 = vsub.f32 %v677, %v3807
      %v3809 = vand.u32 %v3808, 4294901760
      %3810 = vmatpush.msra.mxu0 %v3809
      %v3811 = vand.u32 %v676, 4294901760
      %v3812 = vsub.f32 %v676, %v3811
      %v3813 = vand.u32 %v3812, 4294901760
      %3814 = vmatpush.msra.mxu0 %v3813
      %v3815 = vand.u32 %v675, 4294901760
      %v3816 = vsub.f32 %v675, %v3815
      %v3817 = vand.u32 %v3816, 4294901760
      %3818 = vmatpush.msra.mxu0 %v3817
      %v3819 = vand.u32 %v674, 4294901760
      %v3820 = vsub.f32 %v674, %v3819
      %v3821 = vand.u32 %v3820, 4294901760
      %3822 = vmatpush.msra.mxu0 %v3821
      %v3823 = vand.u32 %v673, 4294901760
      %v3824 = vsub.f32 %v673, %v3823
      %v3825 = vand.u32 %v3824, 4294901760
      %3826 = vmatpush.msra.mxu0 %v3825
      %v3827 = vand.u32 %v672, 4294901760
      %v3828 = vsub.f32 %v672, %v3827
      %v3829 = vand.u32 %v3828, 4294901760
      %3830 = vmatpush.msra.mxu0 %v3829
      %v3831 = vand.u32 %v671, 4294901760
      %v3832 = vsub.f32 %v671, %v3831
      %v3833 = vand.u32 %v3832, 4294901760
      %3834 = vmatpush.msra.mxu0 %v3833
      %v3835 = vand.u32 %v670, 4294901760
      %v3836 = vsub.f32 %v670, %v3835
      %v3837 = vand.u32 %v3836, 4294901760
      %3838 = vmatpush.msra.mxu0 %v3837
      %v3839 = vand.u32 %v669, 4294901760
      %v3840 = vsub.f32 %v669, %v3839
      %v3841 = vand.u32 %v3840, 4294901760
      %3842 = vmatpush.msra.mxu0 %v3841
      %v3843 = vand.u32 %v3375, 4294901760
      %3844 = vmatmul.f32.gmra.mxu0 %v3843
      %v3845 = vpop.f32.mrf.mxu0
      %v3846 = vadd.f32 %v3735, %v3845
      %v3847 = vand.u32 %v3376, 4294901760
      %3848 = vmatmul.f32.gmra.mxu0 %v3847
      %v3849 = vpop.f32.mrf.mxu0
      %v3850 = vadd.f32 %v3741, %v3849
      %v3851 = vand.u32 %v3377, 4294901760
      %3852 = vmatmul.f32.gmra.mxu0 %v3851
      %v3853 = vpop.f32.mrf.mxu0
      %v3854 = vadd.f32 %v3747, %v3853
      %v3855 = vand.u32 %v3378, 4294901760
      %3856 = vmatmul.f32.gmra.mxu0 %v3855
      %v3857 = vpop.f32.mrf.mxu0
      %v3858 = vadd.f32 %v3753, %v3857
      %v3859 = vand.u32 %v3379, 4294901760
      %3860 = vmatmul.f32.gmra.mxu0 %v3859
      %v3861 = vpop.f32.mrf.mxu0
      %v3862 = vadd.f32 %v3759, %v3861
      %v3863 = vand.u32 %v3380, 4294901760
      %3864 = vmatmul.f32.gmra.mxu0 %v3863
      %v3865 = vpop.f32.mrf.mxu0
      %v3866 = vadd.f32 %v3765, %v3865
      %v3867 = vand.u32 %v3381, 4294901760
      %3868 = vmatmul.f32.gmra.mxu0 %v3867
      %v3869 = vpop.f32.mrf.mxu0
      %v3870 = vadd.f32 %v3771, %v3869
      %v3871 = vand.u32 %v3382, 4294901760
      %3872 = vmatmul.f32.gmra.mxu0 %v3871
      %v3873 = vpop.f32.mrf.mxu0
      %v3874 = vadd.f32 %v3777, %v3873
      %3875 = vdwg.mxu0
      %v3876 = vand.u32 %v684, 4294901760
      %3877 = vmatpush.msra.mxu0 %v3876
      %v3878 = vand.u32 %v683, 4294901760
      %3879 = vmatpush.msra.mxu0 %v3878
      %v3880 = vand.u32 %v682, 4294901760
      %3881 = vmatpush.msra.mxu0 %v3880
      %v3882 = vand.u32 %v681, 4294901760
      %3883 = vmatpush.msra.mxu0 %v3882
      %v3884 = vand.u32 %v680, 4294901760
      %3885 = vmatpush.msra.mxu0 %v3884
      %v3886 = vand.u32 %v679, 4294901760
      %3887 = vmatpush.msra.mxu0 %v3886
      %v3888 = vand.u32 %v678, 4294901760
      %3889 = vmatpush.msra.mxu0 %v3888
      %v3890 = vand.u32 %v677, 4294901760
      %3891 = vmatpush.msra.mxu0 %v3890
      %v3892 = vand.u32 %v676, 4294901760
      %3893 = vmatpush.msra.mxu0 %v3892
      %v3894 = vand.u32 %v675, 4294901760
      %3895 = vmatpush.msra.mxu0 %v3894
      %v3896 = vand.u32 %v674, 4294901760
      %3897 = vmatpush.msra.mxu0 %v3896
      %v3898 = vand.u32 %v673, 4294901760
      %3899 = vmatpush.msra.mxu0 %v3898
      %v3900 = vand.u32 %v672, 4294901760
      %3901 = vmatpush.msra.mxu0 %v3900
      %v3902 = vand.u32 %v671, 4294901760
      %3903 = vmatpush.msra.mxu0 %v3902
      %v3904 = vand.u32 %v670, 4294901760
      %3905 = vmatpush.msra.mxu0 %v3904
      %v3906 = vand.u32 %v669, 4294901760
      %3907 = vmatpush.msra.mxu0 %v3906
      %v3908 = vand.u32 %v3375, 4294901760
      %3909 = vmatmul.f32.gmra.mxu0 %v3908
      %v3910 = vpop.f32.mrf.mxu0
      %v3911 = vadd.f32 %v3846, %v3910
      %v3912 = vand.u32 %v3376, 4294901760
      %3913 = vmatmul.f32.gmra.mxu0 %v3912
      %v3914 = vpop.f32.mrf.mxu0
      %v3915 = vadd.f32 %v3850, %v3914
      %v3916 = vand.u32 %v3377, 4294901760
      %3917 = vmatmul.f32.gmra.mxu0 %v3916
      %v3918 = vpop.f32.mrf.mxu0
      %v3919 = vadd.f32 %v3854, %v3918
      %v3920 = vand.u32 %v3378, 4294901760
      %3921 = vmatmul.f32.gmra.mxu0 %v3920
      %v3922 = vpop.f32.mrf.mxu0
      %v3923 = vadd.f32 %v3858, %v3922
      %v3924 = vand.u32 %v3379, 4294901760
      %3925 = vmatmul.f32.gmra.mxu0 %v3924
      %v3926 = vpop.f32.mrf.mxu0
      %v3927 = vadd.f32 %v3862, %v3926
      %v3928 = vand.u32 %v3380, 4294901760
      %3929 = vmatmul.f32.gmra.mxu0 %v3928
      %v3930 = vpop.f32.mrf.mxu0
      %v3931 = vadd.f32 %v3866, %v3930
      %v3932 = vand.u32 %v3381, 4294901760
      %3933 = vmatmul.f32.gmra.mxu0 %v3932
      %v3934 = vpop.f32.mrf.mxu0
      %v3935 = vadd.f32 %v3870, %v3934
      %v3936 = vand.u32 %v3382, 4294901760
      %3937 = vmatmul.f32.gmra.mxu0 %v3936
      %v3938 = vpop.f32.mrf.mxu0
      %v3939 = vadd.f32 %v3874, %v3938
      %3940 = vdwg.mxu0
      %3941 = vset.pattern.permute.xlu0 4
      %3942 = vperm.xlu0 %3941, %v759
      %v3943 = vpop.permute.xlu0 %3942
      %3945 = vset.pattern.permute.xlu0 4
      %3946 = vperm.xlu0 %3945, %v760
      %v3947 = vpop.permute.xlu0 %3946
      %3949 = vset.pattern.permute.xlu0 4
      %3950 = vperm.xlu0 %3949, %v761
      %v3951 = vpop.permute.xlu0 %3950
      %3953 = vset.pattern.permute.xlu0 4
      %3954 = vperm.xlu0 %3953, %v762
      %v3955 = vpop.permute.xlu0 %3954
      %3957 = vset.pattern.permute.xlu0 4
      %3958 = vperm.xlu0 %3957, %v763
      %v3959 = vpop.permute.xlu0 %3958
      %3961 = vset.pattern.permute.xlu0 4
      %3962 = vperm.xlu0 %3961, %v764
      %v3963 = vpop.permute.xlu0 %3962
      %3965 = vset.pattern.permute.xlu0 4
      %3966 = vperm.xlu0 %3965, %v765
      %v3967 = vpop.permute.xlu0 %3966
      %3969 = vset.pattern.permute.xlu0 4
      %3970 = vperm.xlu0 %3969, %v766
      %v3971 = vpop.permute.xlu0 %3970
      %v3973 = vmul.f32 %v3911, %v3943
      %v3974 = vmul.f32 %v3915, %v3947
      %v3975 = vmul.f32 %v3919, %v3951
      %v3976 = vmul.f32 %v3923, %v3955
      %v3977 = vmul.f32 %v3927, %v3959
      %v3978 = vmul.f32 %v3931, %v3963
      %v3979 = vmul.f32 %v3935, %v3967
      %v3980 = vmul.f32 %v3939, %v3971
      %v3981 = vmax.f32 %v3327, %v3973
      %v3982 = vmax.f32 %v3328, %v3974
      %v3983 = vmax.f32 %v3329, %v3975
      %v3984 = vmax.f32 %v3330, %v3976
      %v3985 = vmax.f32 %v3331, %v3977
      %v3986 = vmax.f32 %v3332, %v3978
      %v3987 = vmax.f32 %v3333, %v3979
      %v3988 = vmax.f32 %v3334, %v3980
      %3989 = vset.pattern.permute.xlu0 5
      %3990 = vperm.xlu0 %3989, %v685
      %v3991 = vpop.permute.xlu0 %3990
      %3992 = vset.pattern.permute.xlu0 5
      %3993 = vperm.xlu0 %3992, %v686
      %v3994 = vpop.permute.xlu0 %3993
      %3995 = vset.pattern.permute.xlu0 5
      %3996 = vperm.xlu0 %3995, %v687
      %v3997 = vpop.permute.xlu0 %3996
      %3998 = vset.pattern.permute.xlu0 5
      %3999 = vperm.xlu0 %3998, %v688
      %v4000 = vpop.permute.xlu0 %3999
      %4001 = vset.pattern.permute.xlu0 5
      %4002 = vperm.xlu0 %4001, %v689
      %v4003 = vpop.permute.xlu0 %4002
      %4004 = vset.pattern.permute.xlu0 5
      %4005 = vperm.xlu0 %4004, %v690
      %v4006 = vpop.permute.xlu0 %4005
      %4007 = vset.pattern.permute.xlu0 5
      %4008 = vperm.xlu0 %4007, %v691
      %v4009 = vpop.permute.xlu0 %4008
      %4010 = vset.pattern.permute.xlu0 5
      %4011 = vperm.xlu0 %4010, %v692
      %v4012 = vpop.permute.xlu0 %4011
      %vm4013 = vcmp.eq.s32.totalorder %v694, %v3991
      %vm4014 = vcmp.eq.s32.totalorder %v694, %v3994
      %vm4015 = vcmp.eq.s32.totalorder %v694, %v3997
      %vm4016 = vcmp.eq.s32.totalorder %v694, %v4000
      %vm4017 = vcmp.eq.s32.totalorder %v694, %v4003
      %vm4018 = vcmp.eq.s32.totalorder %v694, %v4006
      %vm4019 = vcmp.eq.s32.totalorder %v694, %v4009
      %vm4020 = vcmp.eq.s32.totalorder %v694, %v4012
      %v4021 = vsel %vm4013, 1, 0
      %v4022 = vsel %vm4014, 1, 0
      %v4023 = vsel %vm4015, 1, 0
      %v4024 = vsel %vm4016, 1, 0
      %v4025 = vsel %vm4017, 1, 0
      %v4026 = vsel %vm4018, 1, 0
      %v4027 = vsel %vm4019, 1, 0
      %v4028 = vsel %vm4020, 1, 0
      %v4029 = vcvt.s32.f32 %v4021
      %v4030 = vcvt.s32.f32 %v4022
      %v4031 = vcvt.s32.f32 %v4023
      %v4032 = vcvt.s32.f32 %v4024
      %v4033 = vcvt.s32.f32 %v4025
      %v4034 = vcvt.s32.f32 %v4026
      %v4035 = vcvt.s32.f32 %v4027
      %v4036 = vcvt.s32.f32 %v4028
      %v4037 = vand.u32 %v684, 4294901760
      %4038 = vmatpush.msra.mxu0 %v4037
      %v4039 = vand.u32 %v683, 4294901760
      %4040 = vmatpush.msra.mxu0 %v4039
      %v4041 = vand.u32 %v682, 4294901760
      %4042 = vmatpush.msra.mxu0 %v4041
      %v4043 = vand.u32 %v681, 4294901760
      %4044 = vmatpush.msra.mxu0 %v4043
      %v4045 = vand.u32 %v680, 4294901760
      %4046 = vmatpush.msra.mxu0 %v4045
      %v4047 = vand.u32 %v679, 4294901760
      %4048 = vmatpush.msra.mxu0 %v4047
      %v4049 = vand.u32 %v678, 4294901760
      %4050 = vmatpush.msra.mxu0 %v4049
      %v4051 = vand.u32 %v677, 4294901760
      %4052 = vmatpush.msra.mxu0 %v4051
      %v4053 = vand.u32 %v676, 4294901760
      %4054 = vmatpush.msra.mxu0 %v4053
      %v4055 = vand.u32 %v675, 4294901760
      %4056 = vmatpush.msra.mxu0 %v4055
      %v4057 = vand.u32 %v674, 4294901760
      %4058 = vmatpush.msra.mxu0 %v4057
      %v4059 = vand.u32 %v673, 4294901760
      %4060 = vmatpush.msra.mxu0 %v4059
      %v4061 = vand.u32 %v672, 4294901760
      %4062 = vmatpush.msra.mxu0 %v4061
      %v4063 = vand.u32 %v671, 4294901760
      %4064 = vmatpush.msra.mxu0 %v4063
      %v4065 = vand.u32 %v670, 4294901760
      %4066 = vmatpush.msra.mxu0 %v4065
      %v4067 = vand.u32 %v669, 4294901760
      %4068 = vmatpush.msra.mxu0 %v4067
      %v4069 = vand.u32 %v4029, 4294901760
      %v4070 = vsub.f32 %v4029, %v4069
      %v4071 = vand.u32 %v4070, 4294901760
      %v4072 = vsub.f32 %v4070, %v4071
      %v4073 = vand.u32 %v4072, 4294901760
      %4074 = vmatmul.f32.gmra.mxu0 %v4073
      %v4075 = vpop.f32.mrf.mxu0
      %v4076 = vadd.f32 %v639, %v4075
      %v4077 = vand.u32 %v4030, 4294901760
      %v4078 = vsub.f32 %v4030, %v4077
      %v4079 = vand.u32 %v4078, 4294901760
      %v4080 = vsub.f32 %v4078, %v4079
      %v4081 = vand.u32 %v4080, 4294901760
      %4082 = vmatmul.f32.gmra.mxu0 %v4081
      %v4083 = vpop.f32.mrf.mxu0
      %v4084 = vadd.f32 %v643, %v4083
      %v4085 = vand.u32 %v4031, 4294901760
      %v4086 = vsub.f32 %v4031, %v4085
      %v4087 = vand.u32 %v4086, 4294901760
      %v4088 = vsub.f32 %v4086, %v4087
      %v4089 = vand.u32 %v4088, 4294901760
      %4090 = vmatmul.f32.gmra.mxu0 %v4089
      %v4091 = vpop.f32.mrf.mxu0
      %v4092 = vadd.f32 %v647, %v4091
      %v4093 = vand.u32 %v4032, 4294901760
      %v4094 = vsub.f32 %v4032, %v4093
      %v4095 = vand.u32 %v4094, 4294901760
      %v4096 = vsub.f32 %v4094, %v4095
      %v4097 = vand.u32 %v4096, 4294901760
      %4098 = vmatmul.f32.gmra.mxu0 %v4097
      %v4099 = vpop.f32.mrf.mxu0
      %v4100 = vadd.f32 %v651, %v4099
      %v4101 = vand.u32 %v4033, 4294901760
      %v4102 = vsub.f32 %v4033, %v4101
      %v4103 = vand.u32 %v4102, 4294901760
      %v4104 = vsub.f32 %v4102, %v4103
      %v4105 = vand.u32 %v4104, 4294901760
      %4106 = vmatmul.f32.gmra.mxu0 %v4105
      %v4107 = vpop.f32.mrf.mxu0
      %v4108 = vadd.f32 %v655, %v4107
      %v4109 = vand.u32 %v4034, 4294901760
      %v4110 = vsub.f32 %v4034, %v4109
      %v4111 = vand.u32 %v4110, 4294901760
      %v4112 = vsub.f32 %v4110, %v4111
      %v4113 = vand.u32 %v4112, 4294901760
      %4114 = vmatmul.f32.gmra.mxu0 %v4113
      %v4115 = vpop.f32.mrf.mxu0
      %v4116 = vadd.f32 %v659, %v4115
      %v4117 = vand.u32 %v4035, 4294901760
      %v4118 = vsub.f32 %v4035, %v4117
      %v4119 = vand.u32 %v4118, 4294901760
      %v4120 = vsub.f32 %v4118, %v4119
      %v4121 = vand.u32 %v4120, 4294901760
      %4122 = vmatmul.f32.gmra.mxu0 %v4121
      %v4123 = vpop.f32.mrf.mxu0
      %v4124 = vadd.f32 %v663, %v4123
      %v4125 = vand.u32 %v4036, 4294901760
      %v4126 = vsub.f32 %v4036, %v4125
      %v4127 = vand.u32 %v4126, 4294901760
      %v4128 = vsub.f32 %v4126, %v4127
      %v4129 = vand.u32 %v4128, 4294901760
      %4130 = vmatmul.f32.gmra.mxu0 %v4129
      %v4131 = vpop.f32.mrf.mxu0
      %v4132 = vadd.f32 %v667, %v4131
      %4133 = vdwg.mxu0
      %v4134 = vand.u32 %v684, 4294901760
      %v4135 = vsub.f32 %v684, %v4134
      %v4136 = vand.u32 %v4135, 4294901760
      %v4137 = vsub.f32 %v4135, %v4136
      %v4138 = vand.u32 %v4137, 4294901760
      %4139 = vmatpush.msra.mxu0 %v4138
      %v4140 = vand.u32 %v683, 4294901760
      %v4141 = vsub.f32 %v683, %v4140
      %v4142 = vand.u32 %v4141, 4294901760
      %v4143 = vsub.f32 %v4141, %v4142
      %v4144 = vand.u32 %v4143, 4294901760
      %4145 = vmatpush.msra.mxu0 %v4144
      %v4146 = vand.u32 %v682, 4294901760
      %v4147 = vsub.f32 %v682, %v4146
      %v4148 = vand.u32 %v4147, 4294901760
      %v4149 = vsub.f32 %v4147, %v4148
      %v4150 = vand.u32 %v4149, 4294901760
      %4151 = vmatpush.msra.mxu0 %v4150
      %v4152 = vand.u32 %v681, 4294901760
      %v4153 = vsub.f32 %v681, %v4152
      %v4154 = vand.u32 %v4153, 4294901760
      %v4155 = vsub.f32 %v4153, %v4154
      %v4156 = vand.u32 %v4155, 4294901760
      %4157 = vmatpush.msra.mxu0 %v4156
      %v4158 = vand.u32 %v680, 4294901760
      %v4159 = vsub.f32 %v680, %v4158
      %v4160 = vand.u32 %v4159, 4294901760
      %v4161 = vsub.f32 %v4159, %v4160
      %v4162 = vand.u32 %v4161, 4294901760
      %4163 = vmatpush.msra.mxu0 %v4162
      %v4164 = vand.u32 %v679, 4294901760
      %v4165 = vsub.f32 %v679, %v4164
      %v4166 = vand.u32 %v4165, 4294901760
      %v4167 = vsub.f32 %v4165, %v4166
      %v4168 = vand.u32 %v4167, 4294901760
      %4169 = vmatpush.msra.mxu0 %v4168
      %v4170 = vand.u32 %v678, 4294901760
      %v4171 = vsub.f32 %v678, %v4170
      %v4172 = vand.u32 %v4171, 4294901760
      %v4173 = vsub.f32 %v4171, %v4172
      %v4174 = vand.u32 %v4173, 4294901760
      %4175 = vmatpush.msra.mxu0 %v4174
      %v4176 = vand.u32 %v677, 4294901760
      %v4177 = vsub.f32 %v677, %v4176
      %v4178 = vand.u32 %v4177, 4294901760
      %v4179 = vsub.f32 %v4177, %v4178
      %v4180 = vand.u32 %v4179, 4294901760
      %4181 = vmatpush.msra.mxu0 %v4180
      %v4182 = vand.u32 %v676, 4294901760
      %v4183 = vsub.f32 %v676, %v4182
      %v4184 = vand.u32 %v4183, 4294901760
      %v4185 = vsub.f32 %v4183, %v4184
      %v4186 = vand.u32 %v4185, 4294901760
      %4187 = vmatpush.msra.mxu0 %v4186
      %v4188 = vand.u32 %v675, 4294901760
      %v4189 = vsub.f32 %v675, %v4188
      %v4190 = vand.u32 %v4189, 4294901760
      %v4191 = vsub.f32 %v4189, %v4190
      %v4192 = vand.u32 %v4191, 4294901760
      %4193 = vmatpush.msra.mxu0 %v4192
      %v4194 = vand.u32 %v674, 4294901760
      %v4195 = vsub.f32 %v674, %v4194
      %v4196 = vand.u32 %v4195, 4294901760
      %v4197 = vsub.f32 %v4195, %v4196
      %v4198 = vand.u32 %v4197, 4294901760
      %4199 = vmatpush.msra.mxu0 %v4198
      %v4200 = vand.u32 %v673, 4294901760
      %v4201 = vsub.f32 %v673, %v4200
      %v4202 = vand.u32 %v4201, 4294901760
      %v4203 = vsub.f32 %v4201, %v4202
      %v4204 = vand.u32 %v4203, 4294901760
      %4205 = vmatpush.msra.mxu0 %v4204
      %v4206 = vand.u32 %v672, 4294901760
      %v4207 = vsub.f32 %v672, %v4206
      %v4208 = vand.u32 %v4207, 4294901760
      %v4209 = vsub.f32 %v4207, %v4208
      %v4210 = vand.u32 %v4209, 4294901760
      %4211 = vmatpush.msra.mxu0 %v4210
      %v4212 = vand.u32 %v671, 4294901760
      %v4213 = vsub.f32 %v671, %v4212
      %v4214 = vand.u32 %v4213, 4294901760
      %v4215 = vsub.f32 %v4213, %v4214
      %v4216 = vand.u32 %v4215, 4294901760
      %4217 = vmatpush.msra.mxu0 %v4216
      %v4218 = vand.u32 %v670, 4294901760
      %v4219 = vsub.f32 %v670, %v4218
      %v4220 = vand.u32 %v4219, 4294901760
      %v4221 = vsub.f32 %v4219, %v4220
      %v4222 = vand.u32 %v4221, 4294901760
      %4223 = vmatpush.msra.mxu0 %v4222
      %v4224 = vand.u32 %v669, 4294901760
      %v4225 = vsub.f32 %v669, %v4224
      %v4226 = vand.u32 %v4225, 4294901760
      %v4227 = vsub.f32 %v4225, %v4226
      %v4228 = vand.u32 %v4227, 4294901760
      %4229 = vmatpush.msra.mxu0 %v4228
      %v4230 = vand.u32 %v4029, 4294901760
      %4231 = vmatmul.f32.gmra.mxu0 %v4230
      %v4232 = vpop.f32.mrf.mxu0
      %v4233 = vadd.f32 %v4076, %v4232
      %v4234 = vand.u32 %v4030, 4294901760
      %4235 = vmatmul.f32.gmra.mxu0 %v4234
      %v4236 = vpop.f32.mrf.mxu0
      %v4237 = vadd.f32 %v4084, %v4236
      %v4238 = vand.u32 %v4031, 4294901760
      %4239 = vmatmul.f32.gmra.mxu0 %v4238
      %v4240 = vpop.f32.mrf.mxu0
      %v4241 = vadd.f32 %v4092, %v4240
      %v4242 = vand.u32 %v4032, 4294901760
      %4243 = vmatmul.f32.gmra.mxu0 %v4242
      %v4244 = vpop.f32.mrf.mxu0
      %v4245 = vadd.f32 %v4100, %v4244
      %v4246 = vand.u32 %v4033, 4294901760
      %4247 = vmatmul.f32.gmra.mxu0 %v4246
      %v4248 = vpop.f32.mrf.mxu0
      %v4249 = vadd.f32 %v4108, %v4248
      %v4250 = vand.u32 %v4034, 4294901760
      %4251 = vmatmul.f32.gmra.mxu0 %v4250
      %v4252 = vpop.f32.mrf.mxu0
      %v4253 = vadd.f32 %v4116, %v4252
      %v4254 = vand.u32 %v4035, 4294901760
      %4255 = vmatmul.f32.gmra.mxu0 %v4254
      %v4256 = vpop.f32.mrf.mxu0
      %v4257 = vadd.f32 %v4124, %v4256
      %v4258 = vand.u32 %v4036, 4294901760
      %4259 = vmatmul.f32.gmra.mxu0 %v4258
      %v4260 = vpop.f32.mrf.mxu0
      %v4261 = vadd.f32 %v4132, %v4260
      %4262 = vdwg.mxu0
      %v4263 = vand.u32 %v684, 4294901760
      %v4264 = vsub.f32 %v684, %v4263
      %4265 = vmatpush.msra.mxu0 %v4264
      %v4266 = vand.u32 %v683, 4294901760
      %v4267 = vsub.f32 %v683, %v4266
      %4268 = vmatpush.msra.mxu0 %v4267
      %v4269 = vand.u32 %v682, 4294901760
      %v4270 = vsub.f32 %v682, %v4269
      %4271 = vmatpush.msra.mxu0 %v4270
      %v4272 = vand.u32 %v681, 4294901760
      %v4273 = vsub.f32 %v681, %v4272
      %4274 = vmatpush.msra.mxu0 %v4273
      %v4275 = vand.u32 %v680, 4294901760
      %v4276 = vsub.f32 %v680, %v4275
      %4277 = vmatpush.msra.mxu0 %v4276
      %v4278 = vand.u32 %v679, 4294901760
      %v4279 = vsub.f32 %v679, %v4278
      %4280 = vmatpush.msra.mxu0 %v4279
      %v4281 = vand.u32 %v678, 4294901760
      %v4282 = vsub.f32 %v678, %v4281
      %4283 = vmatpush.msra.mxu0 %v4282
      %v4284 = vand.u32 %v677, 4294901760
      %v4285 = vsub.f32 %v677, %v4284
      %4286 = vmatpush.msra.mxu0 %v4285
      %v4287 = vand.u32 %v676, 4294901760
      %v4288 = vsub.f32 %v676, %v4287
      %4289 = vmatpush.msra.mxu0 %v4288
      %v4290 = vand.u32 %v675, 4294901760
      %v4291 = vsub.f32 %v675, %v4290
      %4292 = vmatpush.msra.mxu0 %v4291
      %v4293 = vand.u32 %v674, 4294901760
      %v4294 = vsub.f32 %v674, %v4293
      %4295 = vmatpush.msra.mxu0 %v4294
      %v4296 = vand.u32 %v673, 4294901760
      %v4297 = vsub.f32 %v673, %v4296
      %4298 = vmatpush.msra.mxu0 %v4297
      %v4299 = vand.u32 %v672, 4294901760
      %v4300 = vsub.f32 %v672, %v4299
      %4301 = vmatpush.msra.mxu0 %v4300
      %v4302 = vand.u32 %v671, 4294901760
      %v4303 = vsub.f32 %v671, %v4302
      %4304 = vmatpush.msra.mxu0 %v4303
      %v4305 = vand.u32 %v670, 4294901760
      %v4306 = vsub.f32 %v670, %v4305
      %4307 = vmatpush.msra.mxu0 %v4306
      %v4308 = vand.u32 %v669, 4294901760
      %v4309 = vsub.f32 %v669, %v4308
      %4310 = vmatpush.msra.mxu0 %v4309
      %v4311 = vand.u32 %v4029, 4294901760
      %v4312 = vsub.f32 %v4029, %v4311
      %4313 = vmatmul.f32.gmra.mxu0 %v4312
      %v4314 = vpop.f32.mrf.mxu0
      %v4315 = vadd.f32 %v4233, %v4314
      %v4316 = vand.u32 %v4030, 4294901760
      %v4317 = vsub.f32 %v4030, %v4316
      %4318 = vmatmul.f32.gmra.mxu0 %v4317
      %v4319 = vpop.f32.mrf.mxu0
      %v4320 = vadd.f32 %v4237, %v4319
      %v4321 = vand.u32 %v4031, 4294901760
      %v4322 = vsub.f32 %v4031, %v4321
      %4323 = vmatmul.f32.gmra.mxu0 %v4322
      %v4324 = vpop.f32.mrf.mxu0
      %v4325 = vadd.f32 %v4241, %v4324
      %v4326 = vand.u32 %v4032, 4294901760
      %v4327 = vsub.f32 %v4032, %v4326
      %4328 = vmatmul.f32.gmra.mxu0 %v4327
      %v4329 = vpop.f32.mrf.mxu0
      %v4330 = vadd.f32 %v4245, %v4329
      %v4331 = vand.u32 %v4033, 4294901760
      %v4332 = vsub.f32 %v4033, %v4331
      %4333 = vmatmul.f32.gmra.mxu0 %v4332
      %v4334 = vpop.f32.mrf.mxu0
      %v4335 = vadd.f32 %v4249, %v4334
      %v4336 = vand.u32 %v4034, 4294901760
      %v4337 = vsub.f32 %v4034, %v4336
      %4338 = vmatmul.f32.gmra.mxu0 %v4337
      %v4339 = vpop.f32.mrf.mxu0
      %v4340 = vadd.f32 %v4253, %v4339
      %v4341 = vand.u32 %v4035, 4294901760
      %v4342 = vsub.f32 %v4035, %v4341
      %4343 = vmatmul.f32.gmra.mxu0 %v4342
      %v4344 = vpop.f32.mrf.mxu0
      %v4345 = vadd.f32 %v4257, %v4344
      %v4346 = vand.u32 %v4036, 4294901760
      %v4347 = vsub.f32 %v4036, %v4346
      %4348 = vmatmul.f32.gmra.mxu0 %v4347
      %v4349 = vpop.f32.mrf.mxu0
      %v4350 = vadd.f32 %v4261, %v4349
      %4351 = vdwg.mxu0
      %v4352 = vand.u32 %v684, 4294901760
      %4353 = vmatpush.msra.mxu0 %v4352
      %v4354 = vand.u32 %v683, 4294901760
      %4355 = vmatpush.msra.mxu0 %v4354
      %v4356 = vand.u32 %v682, 4294901760
      %4357 = vmatpush.msra.mxu0 %v4356
      %v4358 = vand.u32 %v681, 4294901760
      %4359 = vmatpush.msra.mxu0 %v4358
      %v4360 = vand.u32 %v680, 4294901760
      %4361 = vmatpush.msra.mxu0 %v4360
      %v4362 = vand.u32 %v679, 4294901760
      %4363 = vmatpush.msra.mxu0 %v4362
      %v4364 = vand.u32 %v678, 4294901760
      %4365 = vmatpush.msra.mxu0 %v4364
      %v4366 = vand.u32 %v677, 4294901760
      %4367 = vmatpush.msra.mxu0 %v4366
      %v4368 = vand.u32 %v676, 4294901760
      %4369 = vmatpush.msra.mxu0 %v4368
      %v4370 = vand.u32 %v675, 4294901760
      %4371 = vmatpush.msra.mxu0 %v4370
      %v4372 = vand.u32 %v674, 4294901760
      %4373 = vmatpush.msra.mxu0 %v4372
      %v4374 = vand.u32 %v673, 4294901760
      %4375 = vmatpush.msra.mxu0 %v4374
      %v4376 = vand.u32 %v672, 4294901760
      %4377 = vmatpush.msra.mxu0 %v4376
      %v4378 = vand.u32 %v671, 4294901760
      %4379 = vmatpush.msra.mxu0 %v4378
      %v4380 = vand.u32 %v670, 4294901760
      %4381 = vmatpush.msra.mxu0 %v4380
      %v4382 = vand.u32 %v669, 4294901760
      %4383 = vmatpush.msra.mxu0 %v4382
      %v4384 = vand.u32 %v4029, 4294901760
      %v4385 = vsub.f32 %v4029, %v4384
      %v4386 = vand.u32 %v4385, 4294901760
      %4387 = vmatmul.f32.gmra.mxu0 %v4386
      %v4388 = vpop.f32.mrf.mxu0
      %v4389 = vadd.f32 %v4315, %v4388
      %v4390 = vand.u32 %v4030, 4294901760
      %v4391 = vsub.f32 %v4030, %v4390
      %v4392 = vand.u32 %v4391, 4294901760
      %4393 = vmatmul.f32.gmra.mxu0 %v4392
      %v4394 = vpop.f32.mrf.mxu0
      %v4395 = vadd.f32 %v4320, %v4394
      %v4396 = vand.u32 %v4031, 4294901760
      %v4397 = vsub.f32 %v4031, %v4396
      %v4398 = vand.u32 %v4397, 4294901760
      %4399 = vmatmul.f32.gmra.mxu0 %v4398
      %v4400 = vpop.f32.mrf.mxu0
      %v4401 = vadd.f32 %v4325, %v4400
      %v4402 = vand.u32 %v4032, 4294901760
      %v4403 = vsub.f32 %v4032, %v4402
      %v4404 = vand.u32 %v4403, 4294901760
      %4405 = vmatmul.f32.gmra.mxu0 %v4404
      %v4406 = vpop.f32.mrf.mxu0
      %v4407 = vadd.f32 %v4330, %v4406
      %v4408 = vand.u32 %v4033, 4294901760
      %v4409 = vsub.f32 %v4033, %v4408
      %v4410 = vand.u32 %v4409, 4294901760
      %4411 = vmatmul.f32.gmra.mxu0 %v4410
      %v4412 = vpop.f32.mrf.mxu0
      %v4413 = vadd.f32 %v4335, %v4412
      %v4414 = vand.u32 %v4034, 4294901760
      %v4415 = vsub.f32 %v4034, %v4414
      %v4416 = vand.u32 %v4415, 4294901760
      %4417 = vmatmul.f32.gmra.mxu0 %v4416
      %v4418 = vpop.f32.mrf.mxu0
      %v4419 = vadd.f32 %v4340, %v4418
      %v4420 = vand.u32 %v4035, 4294901760
      %v4421 = vsub.f32 %v4035, %v4420
      %v4422 = vand.u32 %v4421, 4294901760
      %4423 = vmatmul.f32.gmra.mxu0 %v4422
      %v4424 = vpop.f32.mrf.mxu0
      %v4425 = vadd.f32 %v4345, %v4424
      %v4426 = vand.u32 %v4036, 4294901760
      %v4427 = vsub.f32 %v4036, %v4426
      %v4428 = vand.u32 %v4427, 4294901760
      %4429 = vmatmul.f32.gmra.mxu0 %v4428
      %v4430 = vpop.f32.mrf.mxu0
      %v4431 = vadd.f32 %v4350, %v4430
      %4432 = vdwg.mxu0
      %v4433 = vand.u32 %v684, 4294901760
      %v4434 = vsub.f32 %v684, %v4433
      %v4435 = vand.u32 %v4434, 4294901760
      %4436 = vmatpush.msra.mxu0 %v4435
      %v4437 = vand.u32 %v683, 4294901760
      %v4438 = vsub.f32 %v683, %v4437
      %v4439 = vand.u32 %v4438, 4294901760
      %4440 = vmatpush.msra.mxu0 %v4439
      %v4441 = vand.u32 %v682, 4294901760
      %v4442 = vsub.f32 %v682, %v4441
      %v4443 = vand.u32 %v4442, 4294901760
      %4444 = vmatpush.msra.mxu0 %v4443
      %v4445 = vand.u32 %v681, 4294901760
      %v4446 = vsub.f32 %v681, %v4445
      %v4447 = vand.u32 %v4446, 4294901760
      %4448 = vmatpush.msra.mxu0 %v4447
      %v4449 = vand.u32 %v680, 4294901760
      %v4450 = vsub.f32 %v680, %v4449
      %v4451 = vand.u32 %v4450, 4294901760
      %4452 = vmatpush.msra.mxu0 %v4451
      %v4453 = vand.u32 %v679, 4294901760
      %v4454 = vsub.f32 %v679, %v4453
      %v4455 = vand.u32 %v4454, 4294901760
      %4456 = vmatpush.msra.mxu0 %v4455
      %v4457 = vand.u32 %v678, 4294901760
      %v4458 = vsub.f32 %v678, %v4457
      %v4459 = vand.u32 %v4458, 4294901760
      %4460 = vmatpush.msra.mxu0 %v4459
      %v4461 = vand.u32 %v677, 4294901760
      %v4462 = vsub.f32 %v677, %v4461
      %v4463 = vand.u32 %v4462, 4294901760
      %4464 = vmatpush.msra.mxu0 %v4463
      %v4465 = vand.u32 %v676, 4294901760
      %v4466 = vsub.f32 %v676, %v4465
      %v4467 = vand.u32 %v4466, 4294901760
      %4468 = vmatpush.msra.mxu0 %v4467
      %v4469 = vand.u32 %v675, 4294901760
      %v4470 = vsub.f32 %v675, %v4469
      %v4471 = vand.u32 %v4470, 4294901760
      %4472 = vmatpush.msra.mxu0 %v4471
      %v4473 = vand.u32 %v674, 4294901760
      %v4474 = vsub.f32 %v674, %v4473
      %v4475 = vand.u32 %v4474, 4294901760
      %4476 = vmatpush.msra.mxu0 %v4475
      %v4477 = vand.u32 %v673, 4294901760
      %v4478 = vsub.f32 %v673, %v4477
      %v4479 = vand.u32 %v4478, 4294901760
      %4480 = vmatpush.msra.mxu0 %v4479
      %v4481 = vand.u32 %v672, 4294901760
      %v4482 = vsub.f32 %v672, %v4481
      %v4483 = vand.u32 %v4482, 4294901760
      %4484 = vmatpush.msra.mxu0 %v4483
      %v4485 = vand.u32 %v671, 4294901760
      %v4486 = vsub.f32 %v671, %v4485
      %v4487 = vand.u32 %v4486, 4294901760
      %4488 = vmatpush.msra.mxu0 %v4487
      %v4489 = vand.u32 %v670, 4294901760
      %v4490 = vsub.f32 %v670, %v4489
      %v4491 = vand.u32 %v4490, 4294901760
      %4492 = vmatpush.msra.mxu0 %v4491
      %v4493 = vand.u32 %v669, 4294901760
      %v4494 = vsub.f32 %v669, %v4493
      %v4495 = vand.u32 %v4494, 4294901760
      %4496 = vmatpush.msra.mxu0 %v4495
      %v4497 = vand.u32 %v4029, 4294901760
      %4498 = vmatmul.f32.gmra.mxu0 %v4497
      %v4499 = vpop.f32.mrf.mxu0
      %v4500 = vadd.f32 %v4389, %v4499
      %v4501 = vand.u32 %v4030, 4294901760
      %4502 = vmatmul.f32.gmra.mxu0 %v4501
      %v4503 = vpop.f32.mrf.mxu0
      %v4504 = vadd.f32 %v4395, %v4503
      %v4505 = vand.u32 %v4031, 4294901760
      %4506 = vmatmul.f32.gmra.mxu0 %v4505
      %v4507 = vpop.f32.mrf.mxu0
      %v4508 = vadd.f32 %v4401, %v4507
      %v4509 = vand.u32 %v4032, 4294901760
      %4510 = vmatmul.f32.gmra.mxu0 %v4509
      %v4511 = vpop.f32.mrf.mxu0
      %v4512 = vadd.f32 %v4407, %v4511
      %v4513 = vand.u32 %v4033, 4294901760
      %4514 = vmatmul.f32.gmra.mxu0 %v4513
      %v4515 = vpop.f32.mrf.mxu0
      %v4516 = vadd.f32 %v4413, %v4515
      %v4517 = vand.u32 %v4034, 4294901760
      %4518 = vmatmul.f32.gmra.mxu0 %v4517
      %v4519 = vpop.f32.mrf.mxu0
      %v4520 = vadd.f32 %v4419, %v4519
      %v4521 = vand.u32 %v4035, 4294901760
      %4522 = vmatmul.f32.gmra.mxu0 %v4521
      %v4523 = vpop.f32.mrf.mxu0
      %v4524 = vadd.f32 %v4425, %v4523
      %v4525 = vand.u32 %v4036, 4294901760
      %4526 = vmatmul.f32.gmra.mxu0 %v4525
      %v4527 = vpop.f32.mrf.mxu0
      %v4528 = vadd.f32 %v4431, %v4527
      %4529 = vdwg.mxu0
      %v4530 = vand.u32 %v684, 4294901760
      %4531 = vmatpush.msra.mxu0 %v4530
      %v4532 = vand.u32 %v683, 4294901760
      %4533 = vmatpush.msra.mxu0 %v4532
      %v4534 = vand.u32 %v682, 4294901760
      %4535 = vmatpush.msra.mxu0 %v4534
      %v4536 = vand.u32 %v681, 4294901760
      %4537 = vmatpush.msra.mxu0 %v4536
      %v4538 = vand.u32 %v680, 4294901760
      %4539 = vmatpush.msra.mxu0 %v4538
      %v4540 = vand.u32 %v679, 4294901760
      %4541 = vmatpush.msra.mxu0 %v4540
      %v4542 = vand.u32 %v678, 4294901760
      %4543 = vmatpush.msra.mxu0 %v4542
      %v4544 = vand.u32 %v677, 4294901760
      %4545 = vmatpush.msra.mxu0 %v4544
      %v4546 = vand.u32 %v676, 4294901760
      %4547 = vmatpush.msra.mxu0 %v4546
      %v4548 = vand.u32 %v675, 4294901760
      %4549 = vmatpush.msra.mxu0 %v4548
      %v4550 = vand.u32 %v674, 4294901760
      %4551 = vmatpush.msra.mxu0 %v4550
      %v4552 = vand.u32 %v673, 4294901760
      %4553 = vmatpush.msra.mxu0 %v4552
      %v4554 = vand.u32 %v672, 4294901760
      %4555 = vmatpush.msra.mxu0 %v4554
      %v4556 = vand.u32 %v671, 4294901760
      %4557 = vmatpush.msra.mxu0 %v4556
      %v4558 = vand.u32 %v670, 4294901760
      %4559 = vmatpush.msra.mxu0 %v4558
      %v4560 = vand.u32 %v669, 4294901760
      %4561 = vmatpush.msra.mxu0 %v4560
      %v4562 = vand.u32 %v4029, 4294901760
      %4563 = vmatmul.f32.gmra.mxu0 %v4562
      %v4564 = vpop.f32.mrf.mxu0
      %v4565 = vadd.f32 %v4500, %v4564
      %v4566 = vand.u32 %v4030, 4294901760
      %4567 = vmatmul.f32.gmra.mxu0 %v4566
      %v4568 = vpop.f32.mrf.mxu0
      %v4569 = vadd.f32 %v4504, %v4568
      %v4570 = vand.u32 %v4031, 4294901760
      %4571 = vmatmul.f32.gmra.mxu0 %v4570
      %v4572 = vpop.f32.mrf.mxu0
      %v4573 = vadd.f32 %v4508, %v4572
      %v4574 = vand.u32 %v4032, 4294901760
      %4575 = vmatmul.f32.gmra.mxu0 %v4574
      %v4576 = vpop.f32.mrf.mxu0
      %v4577 = vadd.f32 %v4512, %v4576
      %v4578 = vand.u32 %v4033, 4294901760
      %4579 = vmatmul.f32.gmra.mxu0 %v4578
      %v4580 = vpop.f32.mrf.mxu0
      %v4581 = vadd.f32 %v4516, %v4580
      %v4582 = vand.u32 %v4034, 4294901760
      %4583 = vmatmul.f32.gmra.mxu0 %v4582
      %v4584 = vpop.f32.mrf.mxu0
      %v4585 = vadd.f32 %v4520, %v4584
      %v4586 = vand.u32 %v4035, 4294901760
      %4587 = vmatmul.f32.gmra.mxu0 %v4586
      %v4588 = vpop.f32.mrf.mxu0
      %v4589 = vadd.f32 %v4524, %v4588
      %v4590 = vand.u32 %v4036, 4294901760
      %4591 = vmatmul.f32.gmra.mxu0 %v4590
      %v4592 = vpop.f32.mrf.mxu0
      %v4593 = vadd.f32 %v4528, %v4592
      %4594 = vdwg.mxu0
      %4595 = vset.pattern.permute.xlu0 5
      %4596 = vperm.xlu0 %4595, %v759
      %v4597 = vpop.permute.xlu0 %4596
      %4599 = vset.pattern.permute.xlu0 5
      %4600 = vperm.xlu0 %4599, %v760
      %v4601 = vpop.permute.xlu0 %4600
      %4603 = vset.pattern.permute.xlu0 5
      %4604 = vperm.xlu0 %4603, %v761
      %v4605 = vpop.permute.xlu0 %4604
      %4607 = vset.pattern.permute.xlu0 5
      %4608 = vperm.xlu0 %4607, %v762
      %v4609 = vpop.permute.xlu0 %4608
      %4611 = vset.pattern.permute.xlu0 5
      %4612 = vperm.xlu0 %4611, %v763
      %v4613 = vpop.permute.xlu0 %4612
      %4615 = vset.pattern.permute.xlu0 5
      %4616 = vperm.xlu0 %4615, %v764
      %v4617 = vpop.permute.xlu0 %4616
      %4619 = vset.pattern.permute.xlu0 5
      %4620 = vperm.xlu0 %4619, %v765
      %v4621 = vpop.permute.xlu0 %4620
      %4623 = vset.pattern.permute.xlu0 5
      %4624 = vperm.xlu0 %4623, %v766
      %v4625 = vpop.permute.xlu0 %4624
      %v4627 = vmul.f32 %v4565, %v4597
      %v4628 = vmul.f32 %v4569, %v4601
      %v4629 = vmul.f32 %v4573, %v4605
      %v4630 = vmul.f32 %v4577, %v4609
      %v4631 = vmul.f32 %v4581, %v4613
      %v4632 = vmul.f32 %v4585, %v4617
      %v4633 = vmul.f32 %v4589, %v4621
      %v4634 = vmul.f32 %v4593, %v4625
      %v4635 = vmax.f32 %v3981, %v4627
      %v4636 = vmax.f32 %v3982, %v4628
      %v4637 = vmax.f32 %v3983, %v4629
      %v4638 = vmax.f32 %v3984, %v4630
      %v4639 = vmax.f32 %v3985, %v4631
      %v4640 = vmax.f32 %v3986, %v4632
      %v4641 = vmax.f32 %v3987, %v4633
      %v4642 = vmax.f32 %v3988, %v4634
      %4643 = vset.pattern.permute.xlu0 6
      %4644 = vperm.xlu0 %4643, %v685
      %v4645 = vpop.permute.xlu0 %4644
      %4646 = vset.pattern.permute.xlu0 6
      %4647 = vperm.xlu0 %4646, %v686
      %v4648 = vpop.permute.xlu0 %4647
      %4649 = vset.pattern.permute.xlu0 6
      %4650 = vperm.xlu0 %4649, %v687
      %v4651 = vpop.permute.xlu0 %4650
      %4652 = vset.pattern.permute.xlu0 6
      %4653 = vperm.xlu0 %4652, %v688
      %v4654 = vpop.permute.xlu0 %4653
      %4655 = vset.pattern.permute.xlu0 6
      %4656 = vperm.xlu0 %4655, %v689
      %v4657 = vpop.permute.xlu0 %4656
      %4658 = vset.pattern.permute.xlu0 6
      %4659 = vperm.xlu0 %4658, %v690
      %v4660 = vpop.permute.xlu0 %4659
      %4661 = vset.pattern.permute.xlu0 6
      %4662 = vperm.xlu0 %4661, %v691
      %v4663 = vpop.permute.xlu0 %4662
      %4664 = vset.pattern.permute.xlu0 6
      %4665 = vperm.xlu0 %4664, %v692
      %v4666 = vpop.permute.xlu0 %4665
      %vm4667 = vcmp.eq.s32.totalorder %v694, %v4645
      %vm4668 = vcmp.eq.s32.totalorder %v694, %v4648
      %vm4669 = vcmp.eq.s32.totalorder %v694, %v4651
      %vm4670 = vcmp.eq.s32.totalorder %v694, %v4654
      %vm4671 = vcmp.eq.s32.totalorder %v694, %v4657
      %vm4672 = vcmp.eq.s32.totalorder %v694, %v4660
      %vm4673 = vcmp.eq.s32.totalorder %v694, %v4663
      %vm4674 = vcmp.eq.s32.totalorder %v694, %v4666
      %v4675 = vsel %vm4667, 1, 0
      %v4676 = vsel %vm4668, 1, 0
      %v4677 = vsel %vm4669, 1, 0
      %v4678 = vsel %vm4670, 1, 0
      %v4679 = vsel %vm4671, 1, 0
      %v4680 = vsel %vm4672, 1, 0
      %v4681 = vsel %vm4673, 1, 0
      %v4682 = vsel %vm4674, 1, 0
      %v4683 = vcvt.s32.f32 %v4675
      %v4684 = vcvt.s32.f32 %v4676
      %v4685 = vcvt.s32.f32 %v4677
      %v4686 = vcvt.s32.f32 %v4678
      %v4687 = vcvt.s32.f32 %v4679
      %v4688 = vcvt.s32.f32 %v4680
      %v4689 = vcvt.s32.f32 %v4681
      %v4690 = vcvt.s32.f32 %v4682
      %v4691 = vand.u32 %v684, 4294901760
      %4692 = vmatpush.msra.mxu0 %v4691
      %v4693 = vand.u32 %v683, 4294901760
      %4694 = vmatpush.msra.mxu0 %v4693
      %v4695 = vand.u32 %v682, 4294901760
      %4696 = vmatpush.msra.mxu0 %v4695
      %v4697 = vand.u32 %v681, 4294901760
      %4698 = vmatpush.msra.mxu0 %v4697
      %v4699 = vand.u32 %v680, 4294901760
      %4700 = vmatpush.msra.mxu0 %v4699
      %v4701 = vand.u32 %v679, 4294901760
      %4702 = vmatpush.msra.mxu0 %v4701
      %v4703 = vand.u32 %v678, 4294901760
      %4704 = vmatpush.msra.mxu0 %v4703
      %v4705 = vand.u32 %v677, 4294901760
      %4706 = vmatpush.msra.mxu0 %v4705
      %v4707 = vand.u32 %v676, 4294901760
      %4708 = vmatpush.msra.mxu0 %v4707
      %v4709 = vand.u32 %v675, 4294901760
      %4710 = vmatpush.msra.mxu0 %v4709
      %v4711 = vand.u32 %v674, 4294901760
      %4712 = vmatpush.msra.mxu0 %v4711
      %v4713 = vand.u32 %v673, 4294901760
      %4714 = vmatpush.msra.mxu0 %v4713
      %v4715 = vand.u32 %v672, 4294901760
      %4716 = vmatpush.msra.mxu0 %v4715
      %v4717 = vand.u32 %v671, 4294901760
      %4718 = vmatpush.msra.mxu0 %v4717
      %v4719 = vand.u32 %v670, 4294901760
      %4720 = vmatpush.msra.mxu0 %v4719
      %v4721 = vand.u32 %v669, 4294901760
      %4722 = vmatpush.msra.mxu0 %v4721
      %v4723 = vand.u32 %v4683, 4294901760
      %v4724 = vsub.f32 %v4683, %v4723
      %v4725 = vand.u32 %v4724, 4294901760
      %v4726 = vsub.f32 %v4724, %v4725
      %v4727 = vand.u32 %v4726, 4294901760
      %4728 = vmatmul.f32.gmra.mxu0 %v4727
      %v4729 = vpop.f32.mrf.mxu0
      %v4730 = vadd.f32 %v639, %v4729
      %v4731 = vand.u32 %v4684, 4294901760
      %v4732 = vsub.f32 %v4684, %v4731
      %v4733 = vand.u32 %v4732, 4294901760
      %v4734 = vsub.f32 %v4732, %v4733
      %v4735 = vand.u32 %v4734, 4294901760
      %4736 = vmatmul.f32.gmra.mxu0 %v4735
      %v4737 = vpop.f32.mrf.mxu0
      %v4738 = vadd.f32 %v643, %v4737
      %v4739 = vand.u32 %v4685, 4294901760
      %v4740 = vsub.f32 %v4685, %v4739
      %v4741 = vand.u32 %v4740, 4294901760
      %v4742 = vsub.f32 %v4740, %v4741
      %v4743 = vand.u32 %v4742, 4294901760
      %4744 = vmatmul.f32.gmra.mxu0 %v4743
      %v4745 = vpop.f32.mrf.mxu0
      %v4746 = vadd.f32 %v647, %v4745
      %v4747 = vand.u32 %v4686, 4294901760
      %v4748 = vsub.f32 %v4686, %v4747
      %v4749 = vand.u32 %v4748, 4294901760
      %v4750 = vsub.f32 %v4748, %v4749
      %v4751 = vand.u32 %v4750, 4294901760
      %4752 = vmatmul.f32.gmra.mxu0 %v4751
      %v4753 = vpop.f32.mrf.mxu0
      %v4754 = vadd.f32 %v651, %v4753
      %v4755 = vand.u32 %v4687, 4294901760
      %v4756 = vsub.f32 %v4687, %v4755
      %v4757 = vand.u32 %v4756, 4294901760
      %v4758 = vsub.f32 %v4756, %v4757
      %v4759 = vand.u32 %v4758, 4294901760
      %4760 = vmatmul.f32.gmra.mxu0 %v4759
      %v4761 = vpop.f32.mrf.mxu0
      %v4762 = vadd.f32 %v655, %v4761
      %v4763 = vand.u32 %v4688, 4294901760
      %v4764 = vsub.f32 %v4688, %v4763
      %v4765 = vand.u32 %v4764, 4294901760
      %v4766 = vsub.f32 %v4764, %v4765
      %v4767 = vand.u32 %v4766, 4294901760
      %4768 = vmatmul.f32.gmra.mxu0 %v4767
      %v4769 = vpop.f32.mrf.mxu0
      %v4770 = vadd.f32 %v659, %v4769
      %v4771 = vand.u32 %v4689, 4294901760
      %v4772 = vsub.f32 %v4689, %v4771
      %v4773 = vand.u32 %v4772, 4294901760
      %v4774 = vsub.f32 %v4772, %v4773
      %v4775 = vand.u32 %v4774, 4294901760
      %4776 = vmatmul.f32.gmra.mxu0 %v4775
      %v4777 = vpop.f32.mrf.mxu0
      %v4778 = vadd.f32 %v663, %v4777
      %v4779 = vand.u32 %v4690, 4294901760
      %v4780 = vsub.f32 %v4690, %v4779
      %v4781 = vand.u32 %v4780, 4294901760
      %v4782 = vsub.f32 %v4780, %v4781
      %v4783 = vand.u32 %v4782, 4294901760
      %4784 = vmatmul.f32.gmra.mxu0 %v4783
      %v4785 = vpop.f32.mrf.mxu0
      %v4786 = vadd.f32 %v667, %v4785
      %4787 = vdwg.mxu0
      %v4788 = vand.u32 %v684, 4294901760
      %v4789 = vsub.f32 %v684, %v4788
      %v4790 = vand.u32 %v4789, 4294901760
      %v4791 = vsub.f32 %v4789, %v4790
      %v4792 = vand.u32 %v4791, 4294901760
      %4793 = vmatpush.msra.mxu0 %v4792
      %v4794 = vand.u32 %v683, 4294901760
      %v4795 = vsub.f32 %v683, %v4794
      %v4796 = vand.u32 %v4795, 4294901760
      %v4797 = vsub.f32 %v4795, %v4796
      %v4798 = vand.u32 %v4797, 4294901760
      %4799 = vmatpush.msra.mxu0 %v4798
      %v4800 = vand.u32 %v682, 4294901760
      %v4801 = vsub.f32 %v682, %v4800
      %v4802 = vand.u32 %v4801, 4294901760
      %v4803 = vsub.f32 %v4801, %v4802
      %v4804 = vand.u32 %v4803, 4294901760
      %4805 = vmatpush.msra.mxu0 %v4804
      %v4806 = vand.u32 %v681, 4294901760
      %v4807 = vsub.f32 %v681, %v4806
      %v4808 = vand.u32 %v4807, 4294901760
      %v4809 = vsub.f32 %v4807, %v4808
      %v4810 = vand.u32 %v4809, 4294901760
      %4811 = vmatpush.msra.mxu0 %v4810
      %v4812 = vand.u32 %v680, 4294901760
      %v4813 = vsub.f32 %v680, %v4812
      %v4814 = vand.u32 %v4813, 4294901760
      %v4815 = vsub.f32 %v4813, %v4814
      %v4816 = vand.u32 %v4815, 4294901760
      %4817 = vmatpush.msra.mxu0 %v4816
      %v4818 = vand.u32 %v679, 4294901760
      %v4819 = vsub.f32 %v679, %v4818
      %v4820 = vand.u32 %v4819, 4294901760
      %v4821 = vsub.f32 %v4819, %v4820
      %v4822 = vand.u32 %v4821, 4294901760
      %4823 = vmatpush.msra.mxu0 %v4822
      %v4824 = vand.u32 %v678, 4294901760
      %v4825 = vsub.f32 %v678, %v4824
      %v4826 = vand.u32 %v4825, 4294901760
      %v4827 = vsub.f32 %v4825, %v4826
      %v4828 = vand.u32 %v4827, 4294901760
      %4829 = vmatpush.msra.mxu0 %v4828
      %v4830 = vand.u32 %v677, 4294901760
      %v4831 = vsub.f32 %v677, %v4830
      %v4832 = vand.u32 %v4831, 4294901760
      %v4833 = vsub.f32 %v4831, %v4832
      %v4834 = vand.u32 %v4833, 4294901760
      %4835 = vmatpush.msra.mxu0 %v4834
      %v4836 = vand.u32 %v676, 4294901760
      %v4837 = vsub.f32 %v676, %v4836
      %v4838 = vand.u32 %v4837, 4294901760
      %v4839 = vsub.f32 %v4837, %v4838
      %v4840 = vand.u32 %v4839, 4294901760
      %4841 = vmatpush.msra.mxu0 %v4840
      %v4842 = vand.u32 %v675, 4294901760
      %v4843 = vsub.f32 %v675, %v4842
      %v4844 = vand.u32 %v4843, 4294901760
      %v4845 = vsub.f32 %v4843, %v4844
      %v4846 = vand.u32 %v4845, 4294901760
      %4847 = vmatpush.msra.mxu0 %v4846
      %v4848 = vand.u32 %v674, 4294901760
      %v4849 = vsub.f32 %v674, %v4848
      %v4850 = vand.u32 %v4849, 4294901760
      %v4851 = vsub.f32 %v4849, %v4850
      %v4852 = vand.u32 %v4851, 4294901760
      %4853 = vmatpush.msra.mxu0 %v4852
      %v4854 = vand.u32 %v673, 4294901760
      %v4855 = vsub.f32 %v673, %v4854
      %v4856 = vand.u32 %v4855, 4294901760
      %v4857 = vsub.f32 %v4855, %v4856
      %v4858 = vand.u32 %v4857, 4294901760
      %4859 = vmatpush.msra.mxu0 %v4858
      %v4860 = vand.u32 %v672, 4294901760
      %v4861 = vsub.f32 %v672, %v4860
      %v4862 = vand.u32 %v4861, 4294901760
      %v4863 = vsub.f32 %v4861, %v4862
      %v4864 = vand.u32 %v4863, 4294901760
      %4865 = vmatpush.msra.mxu0 %v4864
      %v4866 = vand.u32 %v671, 4294901760
      %v4867 = vsub.f32 %v671, %v4866
      %v4868 = vand.u32 %v4867, 4294901760
      %v4869 = vsub.f32 %v4867, %v4868
      %v4870 = vand.u32 %v4869, 4294901760
      %4871 = vmatpush.msra.mxu0 %v4870
      %v4872 = vand.u32 %v670, 4294901760
      %v4873 = vsub.f32 %v670, %v4872
      %v4874 = vand.u32 %v4873, 4294901760
      %v4875 = vsub.f32 %v4873, %v4874
      %v4876 = vand.u32 %v4875, 4294901760
      %4877 = vmatpush.msra.mxu0 %v4876
      %v4878 = vand.u32 %v669, 4294901760
      %v4879 = vsub.f32 %v669, %v4878
      %v4880 = vand.u32 %v4879, 4294901760
      %v4881 = vsub.f32 %v4879, %v4880
      %v4882 = vand.u32 %v4881, 4294901760
      %4883 = vmatpush.msra.mxu0 %v4882
      %v4884 = vand.u32 %v4683, 4294901760
      %4885 = vmatmul.f32.gmra.mxu0 %v4884
      %v4886 = vpop.f32.mrf.mxu0
      %v4887 = vadd.f32 %v4730, %v4886
      %v4888 = vand.u32 %v4684, 4294901760
      %4889 = vmatmul.f32.gmra.mxu0 %v4888
      %v4890 = vpop.f32.mrf.mxu0
      %v4891 = vadd.f32 %v4738, %v4890
      %v4892 = vand.u32 %v4685, 4294901760
      %4893 = vmatmul.f32.gmra.mxu0 %v4892
      %v4894 = vpop.f32.mrf.mxu0
      %v4895 = vadd.f32 %v4746, %v4894
      %v4896 = vand.u32 %v4686, 4294901760
      %4897 = vmatmul.f32.gmra.mxu0 %v4896
      %v4898 = vpop.f32.mrf.mxu0
      %v4899 = vadd.f32 %v4754, %v4898
      %v4900 = vand.u32 %v4687, 4294901760
      %4901 = vmatmul.f32.gmra.mxu0 %v4900
      %v4902 = vpop.f32.mrf.mxu0
      %v4903 = vadd.f32 %v4762, %v4902
      %v4904 = vand.u32 %v4688, 4294901760
      %4905 = vmatmul.f32.gmra.mxu0 %v4904
      %v4906 = vpop.f32.mrf.mxu0
      %v4907 = vadd.f32 %v4770, %v4906
      %v4908 = vand.u32 %v4689, 4294901760
      %4909 = vmatmul.f32.gmra.mxu0 %v4908
      %v4910 = vpop.f32.mrf.mxu0
      %v4911 = vadd.f32 %v4778, %v4910
      %v4912 = vand.u32 %v4690, 4294901760
      %4913 = vmatmul.f32.gmra.mxu0 %v4912
      %v4914 = vpop.f32.mrf.mxu0
      %v4915 = vadd.f32 %v4786, %v4914
      %4916 = vdwg.mxu0
      %v4917 = vand.u32 %v684, 4294901760
      %v4918 = vsub.f32 %v684, %v4917
      %4919 = vmatpush.msra.mxu0 %v4918
      %v4920 = vand.u32 %v683, 4294901760
      %v4921 = vsub.f32 %v683, %v4920
      %4922 = vmatpush.msra.mxu0 %v4921
      %v4923 = vand.u32 %v682, 4294901760
      %v4924 = vsub.f32 %v682, %v4923
      %4925 = vmatpush.msra.mxu0 %v4924
      %v4926 = vand.u32 %v681, 4294901760
      %v4927 = vsub.f32 %v681, %v4926
      %4928 = vmatpush.msra.mxu0 %v4927
      %v4929 = vand.u32 %v680, 4294901760
      %v4930 = vsub.f32 %v680, %v4929
      %4931 = vmatpush.msra.mxu0 %v4930
      %v4932 = vand.u32 %v679, 4294901760
      %v4933 = vsub.f32 %v679, %v4932
      %4934 = vmatpush.msra.mxu0 %v4933
      %v4935 = vand.u32 %v678, 4294901760
      %v4936 = vsub.f32 %v678, %v4935
      %4937 = vmatpush.msra.mxu0 %v4936
      %v4938 = vand.u32 %v677, 4294901760
      %v4939 = vsub.f32 %v677, %v4938
      %4940 = vmatpush.msra.mxu0 %v4939
      %v4941 = vand.u32 %v676, 4294901760
      %v4942 = vsub.f32 %v676, %v4941
      %4943 = vmatpush.msra.mxu0 %v4942
      %v4944 = vand.u32 %v675, 4294901760
      %v4945 = vsub.f32 %v675, %v4944
      %4946 = vmatpush.msra.mxu0 %v4945
      %v4947 = vand.u32 %v674, 4294901760
      %v4948 = vsub.f32 %v674, %v4947
      %4949 = vmatpush.msra.mxu0 %v4948
      %v4950 = vand.u32 %v673, 4294901760
      %v4951 = vsub.f32 %v673, %v4950
      %4952 = vmatpush.msra.mxu0 %v4951
      %v4953 = vand.u32 %v672, 4294901760
      %v4954 = vsub.f32 %v672, %v4953
      %4955 = vmatpush.msra.mxu0 %v4954
      %v4956 = vand.u32 %v671, 4294901760
      %v4957 = vsub.f32 %v671, %v4956
      %4958 = vmatpush.msra.mxu0 %v4957
      %v4959 = vand.u32 %v670, 4294901760
      %v4960 = vsub.f32 %v670, %v4959
      %4961 = vmatpush.msra.mxu0 %v4960
      %v4962 = vand.u32 %v669, 4294901760
      %v4963 = vsub.f32 %v669, %v4962
      %4964 = vmatpush.msra.mxu0 %v4963
      %v4965 = vand.u32 %v4683, 4294901760
      %v4966 = vsub.f32 %v4683, %v4965
      %4967 = vmatmul.f32.gmra.mxu0 %v4966
      %v4968 = vpop.f32.mrf.mxu0
      %v4969 = vadd.f32 %v4887, %v4968
      %v4970 = vand.u32 %v4684, 4294901760
      %v4971 = vsub.f32 %v4684, %v4970
      %4972 = vmatmul.f32.gmra.mxu0 %v4971
      %v4973 = vpop.f32.mrf.mxu0
      %v4974 = vadd.f32 %v4891, %v4973
      %v4975 = vand.u32 %v4685, 4294901760
      %v4976 = vsub.f32 %v4685, %v4975
      %4977 = vmatmul.f32.gmra.mxu0 %v4976
      %v4978 = vpop.f32.mrf.mxu0
      %v4979 = vadd.f32 %v4895, %v4978
      %v4980 = vand.u32 %v4686, 4294901760
      %v4981 = vsub.f32 %v4686, %v4980
      %4982 = vmatmul.f32.gmra.mxu0 %v4981
      %v4983 = vpop.f32.mrf.mxu0
      %v4984 = vadd.f32 %v4899, %v4983
      %v4985 = vand.u32 %v4687, 4294901760
      %v4986 = vsub.f32 %v4687, %v4985
      %4987 = vmatmul.f32.gmra.mxu0 %v4986
      %v4988 = vpop.f32.mrf.mxu0
      %v4989 = vadd.f32 %v4903, %v4988
      %v4990 = vand.u32 %v4688, 4294901760
      %v4991 = vsub.f32 %v4688, %v4990
      %4992 = vmatmul.f32.gmra.mxu0 %v4991
      %v4993 = vpop.f32.mrf.mxu0
      %v4994 = vadd.f32 %v4907, %v4993
      %v4995 = vand.u32 %v4689, 4294901760
      %v4996 = vsub.f32 %v4689, %v4995
      %4997 = vmatmul.f32.gmra.mxu0 %v4996
      %v4998 = vpop.f32.mrf.mxu0
      %v4999 = vadd.f32 %v4911, %v4998
      %v5000 = vand.u32 %v4690, 4294901760
      %v5001 = vsub.f32 %v4690, %v5000
      %5002 = vmatmul.f32.gmra.mxu0 %v5001
      %v5003 = vpop.f32.mrf.mxu0
      %v5004 = vadd.f32 %v4915, %v5003
      %5005 = vdwg.mxu0
      %v5006 = vand.u32 %v684, 4294901760
      %5007 = vmatpush.msra.mxu0 %v5006
      %v5008 = vand.u32 %v683, 4294901760
      %5009 = vmatpush.msra.mxu0 %v5008
      %v5010 = vand.u32 %v682, 4294901760
      %5011 = vmatpush.msra.mxu0 %v5010
      %v5012 = vand.u32 %v681, 4294901760
      %5013 = vmatpush.msra.mxu0 %v5012
      %v5014 = vand.u32 %v680, 4294901760
      %5015 = vmatpush.msra.mxu0 %v5014
      %v5016 = vand.u32 %v679, 4294901760
      %5017 = vmatpush.msra.mxu0 %v5016
      %v5018 = vand.u32 %v678, 4294901760
      %5019 = vmatpush.msra.mxu0 %v5018
      %v5020 = vand.u32 %v677, 4294901760
      %5021 = vmatpush.msra.mxu0 %v5020
      %v5022 = vand.u32 %v676, 4294901760
      %5023 = vmatpush.msra.mxu0 %v5022
      %v5024 = vand.u32 %v675, 4294901760
      %5025 = vmatpush.msra.mxu0 %v5024
      %v5026 = vand.u32 %v674, 4294901760
      %5027 = vmatpush.msra.mxu0 %v5026
      %v5028 = vand.u32 %v673, 4294901760
      %5029 = vmatpush.msra.mxu0 %v5028
      %v5030 = vand.u32 %v672, 4294901760
      %5031 = vmatpush.msra.mxu0 %v5030
      %v5032 = vand.u32 %v671, 4294901760
      %5033 = vmatpush.msra.mxu0 %v5032
      %v5034 = vand.u32 %v670, 4294901760
      %5035 = vmatpush.msra.mxu0 %v5034
      %v5036 = vand.u32 %v669, 4294901760
      %5037 = vmatpush.msra.mxu0 %v5036
      %v5038 = vand.u32 %v4683, 4294901760
      %v5039 = vsub.f32 %v4683, %v5038
      %v5040 = vand.u32 %v5039, 4294901760
      %5041 = vmatmul.f32.gmra.mxu0 %v5040
      %v5042 = vpop.f32.mrf.mxu0
      %v5043 = vadd.f32 %v4969, %v5042
      %v5044 = vand.u32 %v4684, 4294901760
      %v5045 = vsub.f32 %v4684, %v5044
      %v5046 = vand.u32 %v5045, 4294901760
      %5047 = vmatmul.f32.gmra.mxu0 %v5046
      %v5048 = vpop.f32.mrf.mxu0
      %v5049 = vadd.f32 %v4974, %v5048
      %v5050 = vand.u32 %v4685, 4294901760
      %v5051 = vsub.f32 %v4685, %v5050
      %v5052 = vand.u32 %v5051, 4294901760
      %5053 = vmatmul.f32.gmra.mxu0 %v5052
      %v5054 = vpop.f32.mrf.mxu0
      %v5055 = vadd.f32 %v4979, %v5054
      %v5056 = vand.u32 %v4686, 4294901760
      %v5057 = vsub.f32 %v4686, %v5056
      %v5058 = vand.u32 %v5057, 4294901760
      %5059 = vmatmul.f32.gmra.mxu0 %v5058
      %v5060 = vpop.f32.mrf.mxu0
      %v5061 = vadd.f32 %v4984, %v5060
      %v5062 = vand.u32 %v4687, 4294901760
      %v5063 = vsub.f32 %v4687, %v5062
      %v5064 = vand.u32 %v5063, 4294901760
      %5065 = vmatmul.f32.gmra.mxu0 %v5064
      %v5066 = vpop.f32.mrf.mxu0
      %v5067 = vadd.f32 %v4989, %v5066
      %v5068 = vand.u32 %v4688, 4294901760
      %v5069 = vsub.f32 %v4688, %v5068
      %v5070 = vand.u32 %v5069, 4294901760
      %5071 = vmatmul.f32.gmra.mxu0 %v5070
      %v5072 = vpop.f32.mrf.mxu0
      %v5073 = vadd.f32 %v4994, %v5072
      %v5074 = vand.u32 %v4689, 4294901760
      %v5075 = vsub.f32 %v4689, %v5074
      %v5076 = vand.u32 %v5075, 4294901760
      %5077 = vmatmul.f32.gmra.mxu0 %v5076
      %v5078 = vpop.f32.mrf.mxu0
      %v5079 = vadd.f32 %v4999, %v5078
      %v5080 = vand.u32 %v4690, 4294901760
      %v5081 = vsub.f32 %v4690, %v5080
      %v5082 = vand.u32 %v5081, 4294901760
      %5083 = vmatmul.f32.gmra.mxu0 %v5082
      %v5084 = vpop.f32.mrf.mxu0
      %v5085 = vadd.f32 %v5004, %v5084
      %5086 = vdwg.mxu0
      %v5087 = vand.u32 %v684, 4294901760
      %v5088 = vsub.f32 %v684, %v5087
      %v5089 = vand.u32 %v5088, 4294901760
      %5090 = vmatpush.msra.mxu0 %v5089
      %v5091 = vand.u32 %v683, 4294901760
      %v5092 = vsub.f32 %v683, %v5091
      %v5093 = vand.u32 %v5092, 4294901760
      %5094 = vmatpush.msra.mxu0 %v5093
      %v5095 = vand.u32 %v682, 4294901760
      %v5096 = vsub.f32 %v682, %v5095
      %v5097 = vand.u32 %v5096, 4294901760
      %5098 = vmatpush.msra.mxu0 %v5097
      %v5099 = vand.u32 %v681, 4294901760
      %v5100 = vsub.f32 %v681, %v5099
      %v5101 = vand.u32 %v5100, 4294901760
      %5102 = vmatpush.msra.mxu0 %v5101
      %v5103 = vand.u32 %v680, 4294901760
      %v5104 = vsub.f32 %v680, %v5103
      %v5105 = vand.u32 %v5104, 4294901760
      %5106 = vmatpush.msra.mxu0 %v5105
      %v5107 = vand.u32 %v679, 4294901760
      %v5108 = vsub.f32 %v679, %v5107
      %v5109 = vand.u32 %v5108, 4294901760
      %5110 = vmatpush.msra.mxu0 %v5109
      %v5111 = vand.u32 %v678, 4294901760
      %v5112 = vsub.f32 %v678, %v5111
      %v5113 = vand.u32 %v5112, 4294901760
      %5114 = vmatpush.msra.mxu0 %v5113
      %v5115 = vand.u32 %v677, 4294901760
      %v5116 = vsub.f32 %v677, %v5115
      %v5117 = vand.u32 %v5116, 4294901760
      %5118 = vmatpush.msra.mxu0 %v5117
      %v5119 = vand.u32 %v676, 4294901760
      %v5120 = vsub.f32 %v676, %v5119
      %v5121 = vand.u32 %v5120, 4294901760
      %5122 = vmatpush.msra.mxu0 %v5121
      %v5123 = vand.u32 %v675, 4294901760
      %v5124 = vsub.f32 %v675, %v5123
      %v5125 = vand.u32 %v5124, 4294901760
      %5126 = vmatpush.msra.mxu0 %v5125
      %v5127 = vand.u32 %v674, 4294901760
      %v5128 = vsub.f32 %v674, %v5127
      %v5129 = vand.u32 %v5128, 4294901760
      %5130 = vmatpush.msra.mxu0 %v5129
      %v5131 = vand.u32 %v673, 4294901760
      %v5132 = vsub.f32 %v673, %v5131
      %v5133 = vand.u32 %v5132, 4294901760
      %5134 = vmatpush.msra.mxu0 %v5133
      %v5135 = vand.u32 %v672, 4294901760
      %v5136 = vsub.f32 %v672, %v5135
      %v5137 = vand.u32 %v5136, 4294901760
      %5138 = vmatpush.msra.mxu0 %v5137
      %v5139 = vand.u32 %v671, 4294901760
      %v5140 = vsub.f32 %v671, %v5139
      %v5141 = vand.u32 %v5140, 4294901760
      %5142 = vmatpush.msra.mxu0 %v5141
      %v5143 = vand.u32 %v670, 4294901760
      %v5144 = vsub.f32 %v670, %v5143
      %v5145 = vand.u32 %v5144, 4294901760
      %5146 = vmatpush.msra.mxu0 %v5145
      %v5147 = vand.u32 %v669, 4294901760
      %v5148 = vsub.f32 %v669, %v5147
      %v5149 = vand.u32 %v5148, 4294901760
      %5150 = vmatpush.msra.mxu0 %v5149
      %v5151 = vand.u32 %v4683, 4294901760
      %5152 = vmatmul.f32.gmra.mxu0 %v5151
      %v5153 = vpop.f32.mrf.mxu0
      %v5154 = vadd.f32 %v5043, %v5153
      %v5155 = vand.u32 %v4684, 4294901760
      %5156 = vmatmul.f32.gmra.mxu0 %v5155
      %v5157 = vpop.f32.mrf.mxu0
      %v5158 = vadd.f32 %v5049, %v5157
      %v5159 = vand.u32 %v4685, 4294901760
      %5160 = vmatmul.f32.gmra.mxu0 %v5159
      %v5161 = vpop.f32.mrf.mxu0
      %v5162 = vadd.f32 %v5055, %v5161
      %v5163 = vand.u32 %v4686, 4294901760
      %5164 = vmatmul.f32.gmra.mxu0 %v5163
      %v5165 = vpop.f32.mrf.mxu0
      %v5166 = vadd.f32 %v5061, %v5165
      %v5167 = vand.u32 %v4687, 4294901760
      %5168 = vmatmul.f32.gmra.mxu0 %v5167
      %v5169 = vpop.f32.mrf.mxu0
      %v5170 = vadd.f32 %v5067, %v5169
      %v5171 = vand.u32 %v4688, 4294901760
      %5172 = vmatmul.f32.gmra.mxu0 %v5171
      %v5173 = vpop.f32.mrf.mxu0
      %v5174 = vadd.f32 %v5073, %v5173
      %v5175 = vand.u32 %v4689, 4294901760
      %5176 = vmatmul.f32.gmra.mxu0 %v5175
      %v5177 = vpop.f32.mrf.mxu0
      %v5178 = vadd.f32 %v5079, %v5177
      %v5179 = vand.u32 %v4690, 4294901760
      %5180 = vmatmul.f32.gmra.mxu0 %v5179
      %v5181 = vpop.f32.mrf.mxu0
      %v5182 = vadd.f32 %v5085, %v5181
      %5183 = vdwg.mxu0
      %v5184 = vand.u32 %v684, 4294901760
      %5185 = vmatpush.msra.mxu0 %v5184
      %v5186 = vand.u32 %v683, 4294901760
      %5187 = vmatpush.msra.mxu0 %v5186
      %v5188 = vand.u32 %v682, 4294901760
      %5189 = vmatpush.msra.mxu0 %v5188
      %v5190 = vand.u32 %v681, 4294901760
      %5191 = vmatpush.msra.mxu0 %v5190
      %v5192 = vand.u32 %v680, 4294901760
      %5193 = vmatpush.msra.mxu0 %v5192
      %v5194 = vand.u32 %v679, 4294901760
      %5195 = vmatpush.msra.mxu0 %v5194
      %v5196 = vand.u32 %v678, 4294901760
      %5197 = vmatpush.msra.mxu0 %v5196
      %v5198 = vand.u32 %v677, 4294901760
      %5199 = vmatpush.msra.mxu0 %v5198
      %v5200 = vand.u32 %v676, 4294901760
      %5201 = vmatpush.msra.mxu0 %v5200
      %v5202 = vand.u32 %v675, 4294901760
      %5203 = vmatpush.msra.mxu0 %v5202
      %v5204 = vand.u32 %v674, 4294901760
      %5205 = vmatpush.msra.mxu0 %v5204
      %v5206 = vand.u32 %v673, 4294901760
      %5207 = vmatpush.msra.mxu0 %v5206
      %v5208 = vand.u32 %v672, 4294901760
      %5209 = vmatpush.msra.mxu0 %v5208
      %v5210 = vand.u32 %v671, 4294901760
      %5211 = vmatpush.msra.mxu0 %v5210
      %v5212 = vand.u32 %v670, 4294901760
      %5213 = vmatpush.msra.mxu0 %v5212
      %v5214 = vand.u32 %v669, 4294901760
      %5215 = vmatpush.msra.mxu0 %v5214
      %v5216 = vand.u32 %v4683, 4294901760
      %5217 = vmatmul.f32.gmra.mxu0 %v5216
      %v5218 = vpop.f32.mrf.mxu0
      %v5219 = vadd.f32 %v5154, %v5218
      %v5220 = vand.u32 %v4684, 4294901760
      %5221 = vmatmul.f32.gmra.mxu0 %v5220
      %v5222 = vpop.f32.mrf.mxu0
      %v5223 = vadd.f32 %v5158, %v5222
      %v5224 = vand.u32 %v4685, 4294901760
      %5225 = vmatmul.f32.gmra.mxu0 %v5224
      %v5226 = vpop.f32.mrf.mxu0
      %v5227 = vadd.f32 %v5162, %v5226
      %v5228 = vand.u32 %v4686, 4294901760
      %5229 = vmatmul.f32.gmra.mxu0 %v5228
      %v5230 = vpop.f32.mrf.mxu0
      %v5231 = vadd.f32 %v5166, %v5230
      %v5232 = vand.u32 %v4687, 4294901760
      %5233 = vmatmul.f32.gmra.mxu0 %v5232
      %v5234 = vpop.f32.mrf.mxu0
      %v5235 = vadd.f32 %v5170, %v5234
      %v5236 = vand.u32 %v4688, 4294901760
      %5237 = vmatmul.f32.gmra.mxu0 %v5236
      %v5238 = vpop.f32.mrf.mxu0
      %v5239 = vadd.f32 %v5174, %v5238
      %v5240 = vand.u32 %v4689, 4294901760
      %5241 = vmatmul.f32.gmra.mxu0 %v5240
      %v5242 = vpop.f32.mrf.mxu0
      %v5243 = vadd.f32 %v5178, %v5242
      %v5244 = vand.u32 %v4690, 4294901760
      %5245 = vmatmul.f32.gmra.mxu0 %v5244
      %v5246 = vpop.f32.mrf.mxu0
      %v5247 = vadd.f32 %v5182, %v5246
      %5248 = vdwg.mxu0
      %5249 = vset.pattern.permute.xlu0 6
      %5250 = vperm.xlu0 %5249, %v759
      %v5251 = vpop.permute.xlu0 %5250
      %5253 = vset.pattern.permute.xlu0 6
      %5254 = vperm.xlu0 %5253, %v760
      %v5255 = vpop.permute.xlu0 %5254
      %5257 = vset.pattern.permute.xlu0 6
      %5258 = vperm.xlu0 %5257, %v761
      %v5259 = vpop.permute.xlu0 %5258
      %5261 = vset.pattern.permute.xlu0 6
      %5262 = vperm.xlu0 %5261, %v762
      %v5263 = vpop.permute.xlu0 %5262
      %5265 = vset.pattern.permute.xlu0 6
      %5266 = vperm.xlu0 %5265, %v763
      %v5267 = vpop.permute.xlu0 %5266
      %5269 = vset.pattern.permute.xlu0 6
      %5270 = vperm.xlu0 %5269, %v764
      %v5271 = vpop.permute.xlu0 %5270
      %5273 = vset.pattern.permute.xlu0 6
      %5274 = vperm.xlu0 %5273, %v765
      %v5275 = vpop.permute.xlu0 %5274
      %5277 = vset.pattern.permute.xlu0 6
      %5278 = vperm.xlu0 %5277, %v766
      %v5279 = vpop.permute.xlu0 %5278
      %v5281 = vmul.f32 %v5219, %v5251
      %v5282 = vmul.f32 %v5223, %v5255
      %v5283 = vmul.f32 %v5227, %v5259
      %v5284 = vmul.f32 %v5231, %v5263
      %v5285 = vmul.f32 %v5235, %v5267
      %v5286 = vmul.f32 %v5239, %v5271
      %v5287 = vmul.f32 %v5243, %v5275
      %v5288 = vmul.f32 %v5247, %v5279
      %v5289 = vmax.f32 %v4635, %v5281
      %v5290 = vmax.f32 %v4636, %v5282
      %v5291 = vmax.f32 %v4637, %v5283
      %v5292 = vmax.f32 %v4638, %v5284
      %v5293 = vmax.f32 %v4639, %v5285
      %v5294 = vmax.f32 %v4640, %v5286
      %v5295 = vmax.f32 %v4641, %v5287
      %v5296 = vmax.f32 %v4642, %v5288
      %5297 = vset.pattern.permute.xlu0 7
      %5298 = vperm.xlu0 %5297, %v685
      %v5299 = vpop.permute.xlu0 %5298
      %5300 = vset.pattern.permute.xlu0 7
      %5301 = vperm.xlu0 %5300, %v686
      %v5302 = vpop.permute.xlu0 %5301
      %5303 = vset.pattern.permute.xlu0 7
      %5304 = vperm.xlu0 %5303, %v687
      %v5305 = vpop.permute.xlu0 %5304
      %5306 = vset.pattern.permute.xlu0 7
      %5307 = vperm.xlu0 %5306, %v688
      %v5308 = vpop.permute.xlu0 %5307
      %5309 = vset.pattern.permute.xlu0 7
      %5310 = vperm.xlu0 %5309, %v689
      %v5311 = vpop.permute.xlu0 %5310
      %5312 = vset.pattern.permute.xlu0 7
      %5313 = vperm.xlu0 %5312, %v690
      %v5314 = vpop.permute.xlu0 %5313
      %5315 = vset.pattern.permute.xlu0 7
      %5316 = vperm.xlu0 %5315, %v691
      %v5317 = vpop.permute.xlu0 %5316
      %5318 = vset.pattern.permute.xlu0 7
      %5319 = vperm.xlu0 %5318, %v692
      %v5320 = vpop.permute.xlu0 %5319
      %vm5321 = vcmp.eq.s32.totalorder %v694, %v5299
      %vm5322 = vcmp.eq.s32.totalorder %v694, %v5302
      %vm5323 = vcmp.eq.s32.totalorder %v694, %v5305
      %vm5324 = vcmp.eq.s32.totalorder %v694, %v5308
      %vm5325 = vcmp.eq.s32.totalorder %v694, %v5311
      %vm5326 = vcmp.eq.s32.totalorder %v694, %v5314
      %vm5327 = vcmp.eq.s32.totalorder %v694, %v5317
      %vm5328 = vcmp.eq.s32.totalorder %v694, %v5320
      %v5329 = vsel %vm5321, 1, 0
      %v5330 = vsel %vm5322, 1, 0
      %v5331 = vsel %vm5323, 1, 0
      %v5332 = vsel %vm5324, 1, 0
      %v5333 = vsel %vm5325, 1, 0
      %v5334 = vsel %vm5326, 1, 0
      %v5335 = vsel %vm5327, 1, 0
      %v5336 = vsel %vm5328, 1, 0
      %v5337 = vcvt.s32.f32 %v5329
      %v5338 = vcvt.s32.f32 %v5330
      %v5339 = vcvt.s32.f32 %v5331
      %v5340 = vcvt.s32.f32 %v5332
      %v5341 = vcvt.s32.f32 %v5333
      %v5342 = vcvt.s32.f32 %v5334
      %v5343 = vcvt.s32.f32 %v5335
      %v5344 = vcvt.s32.f32 %v5336
      %v5345 = vand.u32 %v684, 4294901760
      %5346 = vmatpush.msra.mxu0 %v5345
      %v5347 = vand.u32 %v683, 4294901760
      %5348 = vmatpush.msra.mxu0 %v5347
      %v5349 = vand.u32 %v682, 4294901760
      %5350 = vmatpush.msra.mxu0 %v5349
      %v5351 = vand.u32 %v681, 4294901760
      %5352 = vmatpush.msra.mxu0 %v5351
      %v5353 = vand.u32 %v680, 4294901760
      %5354 = vmatpush.msra.mxu0 %v5353
      %v5355 = vand.u32 %v679, 4294901760
      %5356 = vmatpush.msra.mxu0 %v5355
      %v5357 = vand.u32 %v678, 4294901760
      %5358 = vmatpush.msra.mxu0 %v5357
      %v5359 = vand.u32 %v677, 4294901760
      %5360 = vmatpush.msra.mxu0 %v5359
      %v5361 = vand.u32 %v676, 4294901760
      %5362 = vmatpush.msra.mxu0 %v5361
      %v5363 = vand.u32 %v675, 4294901760
      %5364 = vmatpush.msra.mxu0 %v5363
      %v5365 = vand.u32 %v674, 4294901760
      %5366 = vmatpush.msra.mxu0 %v5365
      %v5367 = vand.u32 %v673, 4294901760
      %5368 = vmatpush.msra.mxu0 %v5367
      %v5369 = vand.u32 %v672, 4294901760
      %5370 = vmatpush.msra.mxu0 %v5369
      %v5371 = vand.u32 %v671, 4294901760
      %5372 = vmatpush.msra.mxu0 %v5371
      %v5373 = vand.u32 %v670, 4294901760
      %5374 = vmatpush.msra.mxu0 %v5373
      %v5375 = vand.u32 %v669, 4294901760
      %5376 = vmatpush.msra.mxu0 %v5375
      %v5377 = vand.u32 %v5337, 4294901760
      %v5378 = vsub.f32 %v5337, %v5377
      %v5379 = vand.u32 %v5378, 4294901760
      %v5380 = vsub.f32 %v5378, %v5379
      %v5381 = vand.u32 %v5380, 4294901760
      %5382 = vmatmul.f32.gmra.mxu0 %v5381
      %v5383 = vpop.f32.mrf.mxu0
      %v5384 = vadd.f32 %v639, %v5383
      %v5385 = vand.u32 %v5338, 4294901760
      %v5386 = vsub.f32 %v5338, %v5385
      %v5387 = vand.u32 %v5386, 4294901760
      %v5388 = vsub.f32 %v5386, %v5387
      %v5389 = vand.u32 %v5388, 4294901760
      %5390 = vmatmul.f32.gmra.mxu0 %v5389
      %v5391 = vpop.f32.mrf.mxu0
      %v5392 = vadd.f32 %v643, %v5391
      %v5393 = vand.u32 %v5339, 4294901760
      %v5394 = vsub.f32 %v5339, %v5393
      %v5395 = vand.u32 %v5394, 4294901760
      %v5396 = vsub.f32 %v5394, %v5395
      %v5397 = vand.u32 %v5396, 4294901760
      %5398 = vmatmul.f32.gmra.mxu0 %v5397
      %v5399 = vpop.f32.mrf.mxu0
      %v5400 = vadd.f32 %v647, %v5399
      %v5401 = vand.u32 %v5340, 4294901760
      %v5402 = vsub.f32 %v5340, %v5401
      %v5403 = vand.u32 %v5402, 4294901760
      %v5404 = vsub.f32 %v5402, %v5403
      %v5405 = vand.u32 %v5404, 4294901760
      %5406 = vmatmul.f32.gmra.mxu0 %v5405
      %v5407 = vpop.f32.mrf.mxu0
      %v5408 = vadd.f32 %v651, %v5407
      %v5409 = vand.u32 %v5341, 4294901760
      %v5410 = vsub.f32 %v5341, %v5409
      %v5411 = vand.u32 %v5410, 4294901760
      %v5412 = vsub.f32 %v5410, %v5411
      %v5413 = vand.u32 %v5412, 4294901760
      %5414 = vmatmul.f32.gmra.mxu0 %v5413
      %v5415 = vpop.f32.mrf.mxu0
      %v5416 = vadd.f32 %v655, %v5415
      %v5417 = vand.u32 %v5342, 4294901760
      %v5418 = vsub.f32 %v5342, %v5417
      %v5419 = vand.u32 %v5418, 4294901760
      %v5420 = vsub.f32 %v5418, %v5419
      %v5421 = vand.u32 %v5420, 4294901760
      %5422 = vmatmul.f32.gmra.mxu0 %v5421
      %v5423 = vpop.f32.mrf.mxu0
      %v5424 = vadd.f32 %v659, %v5423
      %v5425 = vand.u32 %v5343, 4294901760
      %v5426 = vsub.f32 %v5343, %v5425
      %v5427 = vand.u32 %v5426, 4294901760
      %v5428 = vsub.f32 %v5426, %v5427
      %v5429 = vand.u32 %v5428, 4294901760
      %5430 = vmatmul.f32.gmra.mxu0 %v5429
      %v5431 = vpop.f32.mrf.mxu0
      %v5432 = vadd.f32 %v663, %v5431
      %v5433 = vand.u32 %v5344, 4294901760
      %v5434 = vsub.f32 %v5344, %v5433
      %v5435 = vand.u32 %v5434, 4294901760
      %v5436 = vsub.f32 %v5434, %v5435
      %v5437 = vand.u32 %v5436, 4294901760
      %5438 = vmatmul.f32.gmra.mxu0 %v5437
      %v5439 = vpop.f32.mrf.mxu0
      %v5440 = vadd.f32 %v667, %v5439
      %5441 = vdwg.mxu0
      %v5442 = vand.u32 %v684, 4294901760
      %v5443 = vsub.f32 %v684, %v5442
      %v5444 = vand.u32 %v5443, 4294901760
      %v5445 = vsub.f32 %v5443, %v5444
      %v5446 = vand.u32 %v5445, 4294901760
      %5447 = vmatpush.msra.mxu0 %v5446
      %v5448 = vand.u32 %v683, 4294901760
      %v5449 = vsub.f32 %v683, %v5448
      %v5450 = vand.u32 %v5449, 4294901760
      %v5451 = vsub.f32 %v5449, %v5450
      %v5452 = vand.u32 %v5451, 4294901760
      %5453 = vmatpush.msra.mxu0 %v5452
      %v5454 = vand.u32 %v682, 4294901760
      %v5455 = vsub.f32 %v682, %v5454
      %v5456 = vand.u32 %v5455, 4294901760
      %v5457 = vsub.f32 %v5455, %v5456
      %v5458 = vand.u32 %v5457, 4294901760
      %5459 = vmatpush.msra.mxu0 %v5458
      %v5460 = vand.u32 %v681, 4294901760
      %v5461 = vsub.f32 %v681, %v5460
      %v5462 = vand.u32 %v5461, 4294901760
      %v5463 = vsub.f32 %v5461, %v5462
      %v5464 = vand.u32 %v5463, 4294901760
      %5465 = vmatpush.msra.mxu0 %v5464
      %v5466 = vand.u32 %v680, 4294901760
      %v5467 = vsub.f32 %v680, %v5466
      %v5468 = vand.u32 %v5467, 4294901760
      %v5469 = vsub.f32 %v5467, %v5468
      %v5470 = vand.u32 %v5469, 4294901760
      %5471 = vmatpush.msra.mxu0 %v5470
      %v5472 = vand.u32 %v679, 4294901760
      %v5473 = vsub.f32 %v679, %v5472
      %v5474 = vand.u32 %v5473, 4294901760
      %v5475 = vsub.f32 %v5473, %v5474
      %v5476 = vand.u32 %v5475, 4294901760
      %5477 = vmatpush.msra.mxu0 %v5476
      %v5478 = vand.u32 %v678, 4294901760
      %v5479 = vsub.f32 %v678, %v5478
      %v5480 = vand.u32 %v5479, 4294901760
      %v5481 = vsub.f32 %v5479, %v5480
      %v5482 = vand.u32 %v5481, 4294901760
      %5483 = vmatpush.msra.mxu0 %v5482
      %v5484 = vand.u32 %v677, 4294901760
      %v5485 = vsub.f32 %v677, %v5484
      %v5486 = vand.u32 %v5485, 4294901760
      %v5487 = vsub.f32 %v5485, %v5486
      %v5488 = vand.u32 %v5487, 4294901760
      %5489 = vmatpush.msra.mxu0 %v5488
      %v5490 = vand.u32 %v676, 4294901760
      %v5491 = vsub.f32 %v676, %v5490
      %v5492 = vand.u32 %v5491, 4294901760
      %v5493 = vsub.f32 %v5491, %v5492
      %v5494 = vand.u32 %v5493, 4294901760
      %5495 = vmatpush.msra.mxu0 %v5494
      %v5496 = vand.u32 %v675, 4294901760
      %v5497 = vsub.f32 %v675, %v5496
      %v5498 = vand.u32 %v5497, 4294901760
      %v5499 = vsub.f32 %v5497, %v5498
      %v5500 = vand.u32 %v5499, 4294901760
      %5501 = vmatpush.msra.mxu0 %v5500
      %v5502 = vand.u32 %v674, 4294901760
      %v5503 = vsub.f32 %v674, %v5502
      %v5504 = vand.u32 %v5503, 4294901760
      %v5505 = vsub.f32 %v5503, %v5504
      %v5506 = vand.u32 %v5505, 4294901760
      %5507 = vmatpush.msra.mxu0 %v5506
      %v5508 = vand.u32 %v673, 4294901760
      %v5509 = vsub.f32 %v673, %v5508
      %v5510 = vand.u32 %v5509, 4294901760
      %v5511 = vsub.f32 %v5509, %v5510
      %v5512 = vand.u32 %v5511, 4294901760
      %5513 = vmatpush.msra.mxu0 %v5512
      %v5514 = vand.u32 %v672, 4294901760
      %v5515 = vsub.f32 %v672, %v5514
      %v5516 = vand.u32 %v5515, 4294901760
      %v5517 = vsub.f32 %v5515, %v5516
      %v5518 = vand.u32 %v5517, 4294901760
      %5519 = vmatpush.msra.mxu0 %v5518
      %v5520 = vand.u32 %v671, 4294901760
      %v5521 = vsub.f32 %v671, %v5520
      %v5522 = vand.u32 %v5521, 4294901760
      %v5523 = vsub.f32 %v5521, %v5522
      %v5524 = vand.u32 %v5523, 4294901760
      %5525 = vmatpush.msra.mxu0 %v5524
      %v5526 = vand.u32 %v670, 4294901760
      %v5527 = vsub.f32 %v670, %v5526
      %v5528 = vand.u32 %v5527, 4294901760
      %v5529 = vsub.f32 %v5527, %v5528
      %v5530 = vand.u32 %v5529, 4294901760
      %5531 = vmatpush.msra.mxu0 %v5530
      %v5532 = vand.u32 %v669, 4294901760
      %v5533 = vsub.f32 %v669, %v5532
      %v5534 = vand.u32 %v5533, 4294901760
      %v5535 = vsub.f32 %v5533, %v5534
      %v5536 = vand.u32 %v5535, 4294901760
      %5537 = vmatpush.msra.mxu0 %v5536
      %v5538 = vand.u32 %v5337, 4294901760
      %5539 = vmatmul.f32.gmra.mxu0 %v5538
      %v5540 = vpop.f32.mrf.mxu0
      %v5541 = vadd.f32 %v5384, %v5540
      %v5542 = vand.u32 %v5338, 4294901760
      %5543 = vmatmul.f32.gmra.mxu0 %v5542
      %v5544 = vpop.f32.mrf.mxu0
      %v5545 = vadd.f32 %v5392, %v5544
      %v5546 = vand.u32 %v5339, 4294901760
      %5547 = vmatmul.f32.gmra.mxu0 %v5546
      %v5548 = vpop.f32.mrf.mxu0
      %v5549 = vadd.f32 %v5400, %v5548
      %v5550 = vand.u32 %v5340, 4294901760
      %5551 = vmatmul.f32.gmra.mxu0 %v5550
      %v5552 = vpop.f32.mrf.mxu0
      %v5553 = vadd.f32 %v5408, %v5552
      %v5554 = vand.u32 %v5341, 4294901760
      %5555 = vmatmul.f32.gmra.mxu0 %v5554
      %v5556 = vpop.f32.mrf.mxu0
      %v5557 = vadd.f32 %v5416, %v5556
      %v5558 = vand.u32 %v5342, 4294901760
      %5559 = vmatmul.f32.gmra.mxu0 %v5558
      %v5560 = vpop.f32.mrf.mxu0
      %v5561 = vadd.f32 %v5424, %v5560
      %v5562 = vand.u32 %v5343, 4294901760
      %5563 = vmatmul.f32.gmra.mxu0 %v5562
      %v5564 = vpop.f32.mrf.mxu0
      %v5565 = vadd.f32 %v5432, %v5564
      %v5566 = vand.u32 %v5344, 4294901760
      %5567 = vmatmul.f32.gmra.mxu0 %v5566
      %v5568 = vpop.f32.mrf.mxu0
      %v5569 = vadd.f32 %v5440, %v5568
      %5570 = vdwg.mxu0
      %v5571 = vand.u32 %v684, 4294901760
      %v5572 = vsub.f32 %v684, %v5571
      %5573 = vmatpush.msra.mxu0 %v5572
      %v5574 = vand.u32 %v683, 4294901760
      %v5575 = vsub.f32 %v683, %v5574
      %5576 = vmatpush.msra.mxu0 %v5575
      %v5577 = vand.u32 %v682, 4294901760
      %v5578 = vsub.f32 %v682, %v5577
      %5579 = vmatpush.msra.mxu0 %v5578
      %v5580 = vand.u32 %v681, 4294901760
      %v5581 = vsub.f32 %v681, %v5580
      %5582 = vmatpush.msra.mxu0 %v5581
      %v5583 = vand.u32 %v680, 4294901760
      %v5584 = vsub.f32 %v680, %v5583
      %5585 = vmatpush.msra.mxu0 %v5584
      %v5586 = vand.u32 %v679, 4294901760
      %v5587 = vsub.f32 %v679, %v5586
      %5588 = vmatpush.msra.mxu0 %v5587
      %v5589 = vand.u32 %v678, 4294901760
      %v5590 = vsub.f32 %v678, %v5589
      %5591 = vmatpush.msra.mxu0 %v5590
      %v5592 = vand.u32 %v677, 4294901760
      %v5593 = vsub.f32 %v677, %v5592
      %5594 = vmatpush.msra.mxu0 %v5593
      %v5595 = vand.u32 %v676, 4294901760
      %v5596 = vsub.f32 %v676, %v5595
      %5597 = vmatpush.msra.mxu0 %v5596
      %v5598 = vand.u32 %v675, 4294901760
      %v5599 = vsub.f32 %v675, %v5598
      %5600 = vmatpush.msra.mxu0 %v5599
      %v5601 = vand.u32 %v674, 4294901760
      %v5602 = vsub.f32 %v674, %v5601
      %5603 = vmatpush.msra.mxu0 %v5602
      %v5604 = vand.u32 %v673, 4294901760
      %v5605 = vsub.f32 %v673, %v5604
      %5606 = vmatpush.msra.mxu0 %v5605
      %v5607 = vand.u32 %v672, 4294901760
      %v5608 = vsub.f32 %v672, %v5607
      %5609 = vmatpush.msra.mxu0 %v5608
      %v5610 = vand.u32 %v671, 4294901760
      %v5611 = vsub.f32 %v671, %v5610
      %5612 = vmatpush.msra.mxu0 %v5611
      %v5613 = vand.u32 %v670, 4294901760
      %v5614 = vsub.f32 %v670, %v5613
      %5615 = vmatpush.msra.mxu0 %v5614
      %v5616 = vand.u32 %v669, 4294901760
      %v5617 = vsub.f32 %v669, %v5616
      %5618 = vmatpush.msra.mxu0 %v5617
      %v5619 = vand.u32 %v5337, 4294901760
      %v5620 = vsub.f32 %v5337, %v5619
      %5621 = vmatmul.f32.gmra.mxu0 %v5620
      %v5622 = vpop.f32.mrf.mxu0
      %v5623 = vadd.f32 %v5541, %v5622
      %v5624 = vand.u32 %v5338, 4294901760
      %v5625 = vsub.f32 %v5338, %v5624
      %5626 = vmatmul.f32.gmra.mxu0 %v5625
      %v5627 = vpop.f32.mrf.mxu0
      %v5628 = vadd.f32 %v5545, %v5627
      %v5629 = vand.u32 %v5339, 4294901760
      %v5630 = vsub.f32 %v5339, %v5629
      %5631 = vmatmul.f32.gmra.mxu0 %v5630
      %v5632 = vpop.f32.mrf.mxu0
      %v5633 = vadd.f32 %v5549, %v5632
      %v5634 = vand.u32 %v5340, 4294901760
      %v5635 = vsub.f32 %v5340, %v5634
      %5636 = vmatmul.f32.gmra.mxu0 %v5635
      %v5637 = vpop.f32.mrf.mxu0
      %v5638 = vadd.f32 %v5553, %v5637
      %v5639 = vand.u32 %v5341, 4294901760
      %v5640 = vsub.f32 %v5341, %v5639
      %5641 = vmatmul.f32.gmra.mxu0 %v5640
      %v5642 = vpop.f32.mrf.mxu0
      %v5643 = vadd.f32 %v5557, %v5642
      %v5644 = vand.u32 %v5342, 4294901760
      %v5645 = vsub.f32 %v5342, %v5644
      %5646 = vmatmul.f32.gmra.mxu0 %v5645
      %v5647 = vpop.f32.mrf.mxu0
      %v5648 = vadd.f32 %v5561, %v5647
      %v5649 = vand.u32 %v5343, 4294901760
      %v5650 = vsub.f32 %v5343, %v5649
      %5651 = vmatmul.f32.gmra.mxu0 %v5650
      %v5652 = vpop.f32.mrf.mxu0
      %v5653 = vadd.f32 %v5565, %v5652
      %v5654 = vand.u32 %v5344, 4294901760
      %v5655 = vsub.f32 %v5344, %v5654
      %5656 = vmatmul.f32.gmra.mxu0 %v5655
      %v5657 = vpop.f32.mrf.mxu0
      %v5658 = vadd.f32 %v5569, %v5657
      %5659 = vdwg.mxu0
      %v5660 = vand.u32 %v684, 4294901760
      %5661 = vmatpush.msra.mxu0 %v5660
      %v5662 = vand.u32 %v683, 4294901760
      %5663 = vmatpush.msra.mxu0 %v5662
      %v5664 = vand.u32 %v682, 4294901760
      %5665 = vmatpush.msra.mxu0 %v5664
      %v5666 = vand.u32 %v681, 4294901760
      %5667 = vmatpush.msra.mxu0 %v5666
      %v5668 = vand.u32 %v680, 4294901760
      %5669 = vmatpush.msra.mxu0 %v5668
      %v5670 = vand.u32 %v679, 4294901760
      %5671 = vmatpush.msra.mxu0 %v5670
      %v5672 = vand.u32 %v678, 4294901760
      %5673 = vmatpush.msra.mxu0 %v5672
      %v5674 = vand.u32 %v677, 4294901760
      %5675 = vmatpush.msra.mxu0 %v5674
      %v5676 = vand.u32 %v676, 4294901760
      %5677 = vmatpush.msra.mxu0 %v5676
      %v5678 = vand.u32 %v675, 4294901760
      %5679 = vmatpush.msra.mxu0 %v5678
      %v5680 = vand.u32 %v674, 4294901760
      %5681 = vmatpush.msra.mxu0 %v5680
      %v5682 = vand.u32 %v673, 4294901760
      %5683 = vmatpush.msra.mxu0 %v5682
      %v5684 = vand.u32 %v672, 4294901760
      %5685 = vmatpush.msra.mxu0 %v5684
      %v5686 = vand.u32 %v671, 4294901760
      %5687 = vmatpush.msra.mxu0 %v5686
      %v5688 = vand.u32 %v670, 4294901760
      %5689 = vmatpush.msra.mxu0 %v5688
      %v5690 = vand.u32 %v669, 4294901760
      %5691 = vmatpush.msra.mxu0 %v5690
      %v5692 = vand.u32 %v5337, 4294901760
      %v5693 = vsub.f32 %v5337, %v5692
      %v5694 = vand.u32 %v5693, 4294901760
      %5695 = vmatmul.f32.gmra.mxu0 %v5694
      %v5696 = vpop.f32.mrf.mxu0
      %v5697 = vadd.f32 %v5623, %v5696
      %v5698 = vand.u32 %v5338, 4294901760
      %v5699 = vsub.f32 %v5338, %v5698
      %v5700 = vand.u32 %v5699, 4294901760
      %5701 = vmatmul.f32.gmra.mxu0 %v5700
      %v5702 = vpop.f32.mrf.mxu0
      %v5703 = vadd.f32 %v5628, %v5702
      %v5704 = vand.u32 %v5339, 4294901760
      %v5705 = vsub.f32 %v5339, %v5704
      %v5706 = vand.u32 %v5705, 4294901760
      %5707 = vmatmul.f32.gmra.mxu0 %v5706
      %v5708 = vpop.f32.mrf.mxu0
      %v5709 = vadd.f32 %v5633, %v5708
      %v5710 = vand.u32 %v5340, 4294901760
      %v5711 = vsub.f32 %v5340, %v5710
      %v5712 = vand.u32 %v5711, 4294901760
      %5713 = vmatmul.f32.gmra.mxu0 %v5712
      %v5714 = vpop.f32.mrf.mxu0
      %v5715 = vadd.f32 %v5638, %v5714
      %v5716 = vand.u32 %v5341, 4294901760
      %v5717 = vsub.f32 %v5341, %v5716
      %v5718 = vand.u32 %v5717, 4294901760
      %5719 = vmatmul.f32.gmra.mxu0 %v5718
      %v5720 = vpop.f32.mrf.mxu0
      %v5721 = vadd.f32 %v5643, %v5720
      %v5722 = vand.u32 %v5342, 4294901760
      %v5723 = vsub.f32 %v5342, %v5722
      %v5724 = vand.u32 %v5723, 4294901760
      %5725 = vmatmul.f32.gmra.mxu0 %v5724
      %v5726 = vpop.f32.mrf.mxu0
      %v5727 = vadd.f32 %v5648, %v5726
      %v5728 = vand.u32 %v5343, 4294901760
      %v5729 = vsub.f32 %v5343, %v5728
      %v5730 = vand.u32 %v5729, 4294901760
      %5731 = vmatmul.f32.gmra.mxu0 %v5730
      %v5732 = vpop.f32.mrf.mxu0
      %v5733 = vadd.f32 %v5653, %v5732
      %v5734 = vand.u32 %v5344, 4294901760
      %v5735 = vsub.f32 %v5344, %v5734
      %v5736 = vand.u32 %v5735, 4294901760
      %5737 = vmatmul.f32.gmra.mxu0 %v5736
      %v5738 = vpop.f32.mrf.mxu0
      %v5739 = vadd.f32 %v5658, %v5738
      %5740 = vdwg.mxu0
      %v5741 = vand.u32 %v684, 4294901760
      %v5742 = vsub.f32 %v684, %v5741
      %v5743 = vand.u32 %v5742, 4294901760
      %5744 = vmatpush.msra.mxu0 %v5743
      %v5745 = vand.u32 %v683, 4294901760
      %v5746 = vsub.f32 %v683, %v5745
      %v5747 = vand.u32 %v5746, 4294901760
      %5748 = vmatpush.msra.mxu0 %v5747
      %v5749 = vand.u32 %v682, 4294901760
      %v5750 = vsub.f32 %v682, %v5749
      %v5751 = vand.u32 %v5750, 4294901760
      %5752 = vmatpush.msra.mxu0 %v5751
      %v5753 = vand.u32 %v681, 4294901760
      %v5754 = vsub.f32 %v681, %v5753
      %v5755 = vand.u32 %v5754, 4294901760
      %5756 = vmatpush.msra.mxu0 %v5755
      %v5757 = vand.u32 %v680, 4294901760
      %v5758 = vsub.f32 %v680, %v5757
      %v5759 = vand.u32 %v5758, 4294901760
      %5760 = vmatpush.msra.mxu0 %v5759
      %v5761 = vand.u32 %v679, 4294901760
      %v5762 = vsub.f32 %v679, %v5761
      %v5763 = vand.u32 %v5762, 4294901760
      %5764 = vmatpush.msra.mxu0 %v5763
      %v5765 = vand.u32 %v678, 4294901760
      %v5766 = vsub.f32 %v678, %v5765
      %v5767 = vand.u32 %v5766, 4294901760
      %5768 = vmatpush.msra.mxu0 %v5767
      %v5769 = vand.u32 %v677, 4294901760
      %v5770 = vsub.f32 %v677, %v5769
      %v5771 = vand.u32 %v5770, 4294901760
      %5772 = vmatpush.msra.mxu0 %v5771
      %v5773 = vand.u32 %v676, 4294901760
      %v5774 = vsub.f32 %v676, %v5773
      %v5775 = vand.u32 %v5774, 4294901760
      %5776 = vmatpush.msra.mxu0 %v5775
      %v5777 = vand.u32 %v675, 4294901760
      %v5778 = vsub.f32 %v675, %v5777
      %v5779 = vand.u32 %v5778, 4294901760
      %5780 = vmatpush.msra.mxu0 %v5779
      %v5781 = vand.u32 %v674, 4294901760
      %v5782 = vsub.f32 %v674, %v5781
      %v5783 = vand.u32 %v5782, 4294901760
      %5784 = vmatpush.msra.mxu0 %v5783
      %v5785 = vand.u32 %v673, 4294901760
      %v5786 = vsub.f32 %v673, %v5785
      %v5787 = vand.u32 %v5786, 4294901760
      %5788 = vmatpush.msra.mxu0 %v5787
      %v5789 = vand.u32 %v672, 4294901760
      %v5790 = vsub.f32 %v672, %v5789
      %v5791 = vand.u32 %v5790, 4294901760
      %5792 = vmatpush.msra.mxu0 %v5791
      %v5793 = vand.u32 %v671, 4294901760
      %v5794 = vsub.f32 %v671, %v5793
      %v5795 = vand.u32 %v5794, 4294901760
      %5796 = vmatpush.msra.mxu0 %v5795
      %v5797 = vand.u32 %v670, 4294901760
      %v5798 = vsub.f32 %v670, %v5797
      %v5799 = vand.u32 %v5798, 4294901760
      %5800 = vmatpush.msra.mxu0 %v5799
      %v5801 = vand.u32 %v669, 4294901760
      %v5802 = vsub.f32 %v669, %v5801
      %v5803 = vand.u32 %v5802, 4294901760
      %5804 = vmatpush.msra.mxu0 %v5803
      %v5805 = vand.u32 %v5337, 4294901760
      %5806 = vmatmul.f32.gmra.mxu0 %v5805
      %v5807 = vpop.f32.mrf.mxu0
      %v5808 = vadd.f32 %v5697, %v5807
      %v5809 = vand.u32 %v5338, 4294901760
      %5810 = vmatmul.f32.gmra.mxu0 %v5809
      %v5811 = vpop.f32.mrf.mxu0
      %v5812 = vadd.f32 %v5703, %v5811
      %v5813 = vand.u32 %v5339, 4294901760
      %5814 = vmatmul.f32.gmra.mxu0 %v5813
      %v5815 = vpop.f32.mrf.mxu0
      %v5816 = vadd.f32 %v5709, %v5815
      %v5817 = vand.u32 %v5340, 4294901760
      %5818 = vmatmul.f32.gmra.mxu0 %v5817
      %v5819 = vpop.f32.mrf.mxu0
      %v5820 = vadd.f32 %v5715, %v5819
      %v5821 = vand.u32 %v5341, 4294901760
      %5822 = vmatmul.f32.gmra.mxu0 %v5821
      %v5823 = vpop.f32.mrf.mxu0
      %v5824 = vadd.f32 %v5721, %v5823
      %v5825 = vand.u32 %v5342, 4294901760
      %5826 = vmatmul.f32.gmra.mxu0 %v5825
      %v5827 = vpop.f32.mrf.mxu0
      %v5828 = vadd.f32 %v5727, %v5827
      %v5829 = vand.u32 %v5343, 4294901760
      %5830 = vmatmul.f32.gmra.mxu0 %v5829
      %v5831 = vpop.f32.mrf.mxu0
      %v5832 = vadd.f32 %v5733, %v5831
      %v5833 = vand.u32 %v5344, 4294901760
      %5834 = vmatmul.f32.gmra.mxu0 %v5833
      %v5835 = vpop.f32.mrf.mxu0
      %v5836 = vadd.f32 %v5739, %v5835
      %5837 = vdwg.mxu0
      %v5838 = vand.u32 %v684, 4294901760
      %5839 = vmatpush.msra.mxu0 %v5838
      %v5840 = vand.u32 %v683, 4294901760
      %5841 = vmatpush.msra.mxu0 %v5840
      %v5842 = vand.u32 %v682, 4294901760
      %5843 = vmatpush.msra.mxu0 %v5842
      %v5844 = vand.u32 %v681, 4294901760
      %5845 = vmatpush.msra.mxu0 %v5844
      %v5846 = vand.u32 %v680, 4294901760
      %5847 = vmatpush.msra.mxu0 %v5846
      %v5848 = vand.u32 %v679, 4294901760
      %5849 = vmatpush.msra.mxu0 %v5848
      %v5850 = vand.u32 %v678, 4294901760
      %5851 = vmatpush.msra.mxu0 %v5850
      %v5852 = vand.u32 %v677, 4294901760
      %5853 = vmatpush.msra.mxu0 %v5852
      %v5854 = vand.u32 %v676, 4294901760
      %5855 = vmatpush.msra.mxu0 %v5854
      %v5856 = vand.u32 %v675, 4294901760
      %5857 = vmatpush.msra.mxu0 %v5856
      %v5858 = vand.u32 %v674, 4294901760
      %5859 = vmatpush.msra.mxu0 %v5858
      %v5860 = vand.u32 %v673, 4294901760
      %5861 = vmatpush.msra.mxu0 %v5860
      %v5862 = vand.u32 %v672, 4294901760
      %5863 = vmatpush.msra.mxu0 %v5862
      %v5864 = vand.u32 %v671, 4294901760
      %5865 = vmatpush.msra.mxu0 %v5864
      %v5866 = vand.u32 %v670, 4294901760
      %5867 = vmatpush.msra.mxu0 %v5866
      %v5868 = vand.u32 %v669, 4294901760
      %5869 = vmatpush.msra.mxu0 %v5868
      %v5870 = vand.u32 %v5337, 4294901760
      %5871 = vmatmul.f32.gmra.mxu0 %v5870
      %v5872 = vpop.f32.mrf.mxu0
      %v5873 = vadd.f32 %v5808, %v5872
      %v5874 = vand.u32 %v5338, 4294901760
      %5875 = vmatmul.f32.gmra.mxu0 %v5874
      %v5876 = vpop.f32.mrf.mxu0
      %v5877 = vadd.f32 %v5812, %v5876
      %v5878 = vand.u32 %v5339, 4294901760
      %5879 = vmatmul.f32.gmra.mxu0 %v5878
      %v5880 = vpop.f32.mrf.mxu0
      %v5881 = vadd.f32 %v5816, %v5880
      %v5882 = vand.u32 %v5340, 4294901760
      %5883 = vmatmul.f32.gmra.mxu0 %v5882
      %v5884 = vpop.f32.mrf.mxu0
      %v5885 = vadd.f32 %v5820, %v5884
      %v5886 = vand.u32 %v5341, 4294901760
      %5887 = vmatmul.f32.gmra.mxu0 %v5886
      %v5888 = vpop.f32.mrf.mxu0
      %v5889 = vadd.f32 %v5824, %v5888
      %v5890 = vand.u32 %v5342, 4294901760
      %5891 = vmatmul.f32.gmra.mxu0 %v5890
      %v5892 = vpop.f32.mrf.mxu0
      %v5893 = vadd.f32 %v5828, %v5892
      %v5894 = vand.u32 %v5343, 4294901760
      %5895 = vmatmul.f32.gmra.mxu0 %v5894
      %v5896 = vpop.f32.mrf.mxu0
      %v5897 = vadd.f32 %v5832, %v5896
      %v5898 = vand.u32 %v5344, 4294901760
      %5899 = vmatmul.f32.gmra.mxu0 %v5898
      %v5900 = vpop.f32.mrf.mxu0
      %v5901 = vadd.f32 %v5836, %v5900
      %5902 = vdwg.mxu0
      %5903 = vset.pattern.permute.xlu0 7
      %5904 = vperm.xlu0 %5903, %v759
      %v5905 = vpop.permute.xlu0 %5904
      %5907 = vset.pattern.permute.xlu0 7
      %5908 = vperm.xlu0 %5907, %v760
      %v5909 = vpop.permute.xlu0 %5908
      %5911 = vset.pattern.permute.xlu0 7
      %5912 = vperm.xlu0 %5911, %v761
      %v5913 = vpop.permute.xlu0 %5912
      %5915 = vset.pattern.permute.xlu0 7
      %5916 = vperm.xlu0 %5915, %v762
      %v5917 = vpop.permute.xlu0 %5916
      %5919 = vset.pattern.permute.xlu0 7
      %5920 = vperm.xlu0 %5919, %v763
      %v5921 = vpop.permute.xlu0 %5920
      %5923 = vset.pattern.permute.xlu0 7
      %5924 = vperm.xlu0 %5923, %v764
      %v5925 = vpop.permute.xlu0 %5924
      %5927 = vset.pattern.permute.xlu0 7
      %5928 = vperm.xlu0 %5927, %v765
      %v5929 = vpop.permute.xlu0 %5928
      %5931 = vset.pattern.permute.xlu0 7
      %5932 = vperm.xlu0 %5931, %v766
      %v5933 = vpop.permute.xlu0 %5932
      %v5935 = vmul.f32 %v5873, %v5905
      %v5936 = vmul.f32 %v5877, %v5909
      %v5937 = vmul.f32 %v5881, %v5913
      %v5938 = vmul.f32 %v5885, %v5917
      %v5939 = vmul.f32 %v5889, %v5921
      %v5940 = vmul.f32 %v5893, %v5925
      %v5941 = vmul.f32 %v5897, %v5929
      %v5942 = vmul.f32 %v5901, %v5933
      %v5943 = vmax.f32 %v5289, %v5935
      %v5944 = vmax.f32 %v5290, %v5936
      %v5945 = vmax.f32 %v5291, %v5937
      %v5946 = vmax.f32 %v5292, %v5938
      %v5947 = vmax.f32 %v5293, %v5939
      %v5948 = vmax.f32 %v5294, %v5940
      %v5949 = vmax.f32 %v5295, %v5941
      %v5950 = vmax.f32 %v5296, %v5942
      %vm5951 = vcmask 261120
      %5952 = vst.msk [vmem:[%s248] sm:$0xff] %vm5951, %v5943
      %5953 = vst.msk [vmem:[%s248 + $0x8] sm:$0xff] %vm5951, %v5944
      %5954 = vst.msk [vmem:[%s248 + $0x10] sm:$0xff] %vm5951, %v5945
      %5955 = vst.msk [vmem:[%s248 + $0x18] sm:$0xff] %vm5951, %v5946
      %5956 = vst.msk [vmem:[%s248 + $0x20] sm:$0xff] %vm5951, %v5947
      %5957 = vst.msk [vmem:[%s248 + $0x28] sm:$0xff] %vm5951, %v5948
      %5958 = vst.msk [vmem:[%s248 + $0x30] sm:$0xff] %vm5951, %v5949
      %5959 = vst.msk [vmem:[%s248 + $0x38] sm:$0xff] %vm5951, %v5950
      %s5960 = smul.u32 8, %s16
      %p5961 = scmp.lt.s32.totalorder %s5960, 15
      %s5962 = scalar_select %p5961, %s5960, 15
      %s5963 = smul.addr %s5962, 8
      %s5964 = scalar_lea.vmem %s5, %s5963
      // Predicated region
      $region41: #{tpu_custom_call.1} parent=39 // pred_check
        %p5965 = pneg %p149
      $region42: #{tpu_custom_call.1} parent=39 // pred_check_branch
        %5967 = sbr.rel (%p5965) target = $region44
      $region43: #{tpu_custom_call.1} parent=39 // pred_region
        %s5968 = smul.u32 8, %s16
      $region44: #{tpu_custom_call.1} parent=39 // pred_fallthru
        _
    $region40: #{tpu_custom_call.1} parent=5 // pred_fallthru
      _
    %p5969 = scmp.le.s32.totalorder 2, %s11
    // Predicated region
    $region45: #{tpu_custom_call.1} parent=5 // pred_check
      %p5970 = pneg %p5969
    $region46: #{tpu_custom_call.1} parent=5 // pred_check_branch
      %5972 = sbr.rel (%p5970) target = $region48
    $region47: #{tpu_custom_call.1} parent=5 // pred_region
      %s5973 = ssub.s32 %s11, 2
      // Predicated region
      $region49: #{tpu_custom_call.1} parent=47 // pred_check
        %p5974 = pneg %p155
      $region50: #{tpu_custom_call.1} parent=47 // pred_check_branch
        %5976 = sbr.rel (%p5974) target = $region52
      $region51: #{tpu_custom_call.1} parent=47 // pred_region
        %s5977 = smul.u32 8, %s17
        %p5978 = scmp.lt.s32.totalorder %s5977, 15
        %s5979 = scalar_select %p5978, %s5977, 15
        %s5980 = smul.addr %s5979, 8
        %s5981 = scalar_lea.vmem %s5, %s5980
      $region52: #{tpu_custom_call.1} parent=47 // pred_fallthru
        _
    $region48: #{tpu_custom_call.1} parent=5 // pred_fallthru
      _
  $region6: #{tpu_custom_call.1} parent=0 // loop_footer
    %s15 = sadd.s32 1, %s11
  $region7: #{tpu_custom_call.1} parent=0 // loop_footer_branch
    %10 = sbr.rel target = $region3
  $region8: #{tpu_custom_call.1} parent=0 // loop_exit
    _

</llo_original>
